<compile_context>
chip_gen: v7x
topology: tpu7x:2x2x1
jax: 0.10.0
libtpu: 0.0.40
codegen_flags: <defaults>
</compile_context>

<pallas_src>
import functools

import jax
import jax.numpy as jnp
from jax import lax
from jax.experimental import pallas as pl
from jax.experimental.pallas import tpu as pltpu


def _round_up(x, m):
    return ((x + m - 1) // m) * m


def _coverage(word_len, kh):
    """Conv-output rows actually covered by MaxPool2d (ceil_mode=False)."""
    h_out = word_len - kh + 3            # conv output height with padding=1
    k = word_len - kh + 1                # MaxPool kernel == stride (height)
    n_win = (h_out - k) // k + 1
    return min(h_out, n_win * k)


def _textcnn_kernel(idx_ref, emb_ref, w_ref, b_ref, hcov_ref, fcw_ref, fcb_ref,
                    o_ref, xpad_ref, *, bb, word_len, vocab_len, kh_max,
                    n_rows, c_pad):
    """Fused TextCNN forward for one batch block.

    idx_ref : (bb, word_len) int32 token ids (VMEM)
    emb_ref : (vocab_len, D)  embedding table (VMEM resident)
    w_ref   : (kh_max, D, 9*Cp) stacked conv weights (3 width shifts x 3 branches)
    b_ref   : (1, 9*Cp)         stacked conv bias
    hcov_ref: (1, 9*Cp) int32   per-column MaxPool row coverage
    fcw_ref : (3*Cp, NCp), fcb_ref: (1, NCp)
    o_ref   : (bb, NCp) logits (lane-dense, sliced to num_classes outside)
    xpad_ref: (bb, R, D) zero-padded embedding scratch
    """
    d = emb_ref.shape[-1]
    n_tot = w_ref.shape[-1]                                  # 9 * c_pad

    # ---- one-hot MXU embedding gather (torch.clamp + nn.Embedding) --------
    tok = jnp.clip(idx_ref[...], 0, vocab_len - 1)           # (bb, W)
    vocab_ids = lax.broadcasted_iota(jnp.int32, (bb, word_len, vocab_len), 2)
    onehot = (tok[:, :, None] == vocab_ids).astype(jnp.float32)
    emb_rows = jnp.dot(onehot.reshape(bb * word_len, vocab_len), emb_ref[...],
                       preferred_element_type=jnp.float32)   # (bb*W, D)

    # ---- zero-padded embedding block (implements Conv2d padding=1 rows) ---
    xpad_ref[...] = jnp.zeros_like(xpad_ref)
    xpad_ref[:, 1:1 + word_len, :] = emb_rows.reshape(bb, word_len, d)
    x = xpad_ref[...]                                        # (bb, R, D)

    # ---- conv branches: kh_max accumulated rank-D MXU matmuls -------------
    acc = None
    for i in range(kh_max):                                  # static unroll (5)
        tap = x[:, i:i + n_rows, :].reshape(bb * n_rows, d)
        part = jnp.dot(tap, w_ref[i], preferred_element_type=jnp.float32)
        acc = part if acc is None else acc + part
    acc = jnp.maximum(acc + b_ref[...], 0.0)                 # bias + ReLU

    # ---- mask rows outside each branch's MaxPool coverage, pool ------------
    # Masking with 0 is exact: it happens post-ReLU and coverage >= 1.
    acc3 = acc.reshape(bb, n_rows, n_tot)                    # 16 rows: aligned
    row_ids = lax.broadcasted_iota(jnp.int32, (n_rows, n_tot), 0)
    valid = row_ids < hcov_ref[...]                          # (n_rows, n_tot)
    m = jnp.max(jnp.where(valid[None, :, :], acc3, 0.0), axis=1)   # (bb, 9Cp)
    g = 3 * c_pad                                            # 384: lane-aligned
    feat = jnp.maximum(jnp.maximum(m[:, 0:g], m[:, g:2 * g]), m[:, 2 * g:3 * g])

    # TODO(synk): nn.Dropout(p=0.5) omitted — identity in eval mode.
    o_ref[...] = jnp.dot(feat, fcw_ref[...],
                         preferred_element_type=jnp.float32) + fcb_ref[...]


def _stack_weights(params, *, word_len, vec_length):
    """Fold width shifts + tap padding + branch/channel padding into one weight."""
    d = vec_length
    khs = (3, 4, 5)
    kh_max = max(khs)
    c = params["w3"].shape[-1]                     # 96
    c_pad = _round_up(c, 128)                      # 128: lane-aligned groups
    hcovs = {kh: _coverage(word_len, kh) for kh in khs}
    n_rows = _round_up(max(hcovs.values()), 8)     # sublane-aligned row block

    w_cols, b_cols, h_cols = [], [], []
    for wshift in range(3):                        # 3 conv width positions
        for kh in khs:                             # branch order matches fc cat
            w = params[f"w{kh}"]                   # (kh, D, C)
            if wshift == 0:      # uses left zero pad column -> shift W left
                w_eff = jnp.pad(w[:, 1:, :], ((0, 0), (0, 1), (0, 0)))
            elif wshift == 1:    # centered, exact alignment
                w_eff = w
            else:                # uses right zero pad column -> shift W right
                w_eff = jnp.pad(w[:, :-1, :], ((0, 0), (1, 0), (0, 0)))
            w_eff = jnp.pad(w_eff, ((0, kh_max - kh), (0, 0), (0, c_pad - c)))
            w_cols.append(w_eff)                                  # (kh_max,D,Cp)
            b_cols.append(jnp.pad(params[f"b{kh}"].reshape(1, c),
                                  ((0, 0), (0, c_pad - c))))
            h_cols.append(jnp.full((1, c_pad), hcovs[kh], jnp.int32))
    w_s = jnp.concatenate(w_cols, axis=2)          # (kh_max, D, 9*Cp)
    b_s = jnp.concatenate(b_cols, axis=1)          # (1, 9*Cp)
    hcov = jnp.concatenate(h_cols, axis=1)         # (1, 9*Cp)
    return w_s, b_s, hcov, n_rows, kh_max, c, c_pad


def _pad_fc(params, c, c_pad):
    """Pad FC weight to the padded-channel layout and a 128-lane output."""
    fc_w = params["fc_w"]                          # (3*C, NC)
    fc_b = params["fc_b"].reshape(1, -1)
    nc = fc_w.shape[-1]
    nc_pad = _round_up(max(nc, 128), 128)
    w_pad = jnp.zeros((3 * c_pad, nc_pad), fc_w.dtype)
    for grp in range(3):
        w_pad = w_pad.at[grp * c_pad:grp * c_pad + c, :nc].set(
            fc_w[grp * c:(grp + 1) * c, :])
    b_pad = jnp.pad(fc_b, ((0, 0), (0, nc_pad - nc)))
    return w_pad, b_pad, nc, nc_pad


def _pick_bb(batch):
    """Batch block: 8..32, multiple of 8, >= 2 grid steps when batch allows."""
    if batch <= 8:
        return batch
    return max(8, min(32, ((batch // 2) // 8) * 8))


def textcnn_forward(params, x, *, vocab_len, word_len, vec_length):
    assert word_len >= 5, "word_len must cover the largest kernel height"
    d = vec_length
    batch = x.shape[0]
    w_s, b_s, hcov, n_rows, kh_max, c, c_pad = _stack_weights(
        params, word_len=word_len, vec_length=vec_length)
    fc_w, fc_b, nc, nc_pad = _pad_fc(params, c, c_pad)

    bb = _pick_bb(batch)
    padded_batch = _round_up(batch, bb)
    idx = x.astype(jnp.int32)
    if padded_batch != batch:
        idx = jnp.pad(idx, ((0, padded_batch - batch), (0, 0)))
    grid = (padded_batch // bb,)

    # xpad rows: enough for all kh_max taps over n_rows conv rows and for the
    # word_len real rows + top/bottom zero padding.
    r_pad = max(n_rows + kh_max - 1, word_len + 2)

    kern = functools.partial(_textcnn_kernel, bb=bb, word_len=word_len,
                             vocab_len=vocab_len, kh_max=kh_max,
                             n_rows=n_rows, c_pad=c_pad)
    out = pl.pallas_call(
        kern,
        out_shape=jax.ShapeDtypeStruct((padded_batch, nc_pad), jnp.float32),
        grid_spec=pltpu.PrefetchScalarGridSpec(
            num_scalar_prefetch=0,
            grid=grid,
            in_specs=[
                pl.BlockSpec((bb, word_len), lambda gi: (gi, 0)),   # token ids
                pl.BlockSpec((vocab_len, d), lambda gi: (0, 0)),    # embedding
                pl.BlockSpec(w_s.shape, lambda gi: (0, 0, 0)),      # conv weights
                pl.BlockSpec(b_s.shape, lambda gi: (0, 0)),         # conv bias
                pl.BlockSpec(hcov.shape, lambda gi: (0, 0)),        # row coverage
                pl.BlockSpec(fc_w.shape, lambda gi: (0, 0)),        # fc weight
                pl.BlockSpec(fc_b.shape, lambda gi: (0, 0)),        # fc bias
            ],
            out_specs=pl.BlockSpec((bb, nc_pad), lambda gi: (gi, 0)),
            scratch_shapes=[pltpu.VMEM((bb, r_pad, d), jnp.float32)],
        ),
        compiler_params=pltpu.CompilerParams(
            dimension_semantics=("parallel",)),
    )(idx, params["embedding"].astype(jnp.float32), w_s, b_s, hcov, fc_w, fc_b)
    return out[:batch, :nc]


def textcnn_reference(params, x, *, vocab_len, word_len, vec_length):
    """Pure-JAX reference replicating the PyTorch forward (eval mode)."""
    idx = jnp.clip(x, 0, vocab_len - 1)
    emb = jnp.take(params["embedding"], idx, axis=0)[:, None]    # (B,1,H,W)
    feats = []
    for kh in (3, 4, 5):
        w = jnp.transpose(params[f"w{kh}"], (2, 0, 1))[:, None]  # (96,1,kh,D)
        conv = lax.conv_general_dilated(emb, w, window_strides=(1, 1),
                                        padding=((1, 1), (1, 1)),
                                        precision=lax.Precision.HIGHEST)
        conv = conv + params[f"b{kh}"].reshape(1, -1, 1, 1)
        relu = jnp.maximum(conv, 0.0)
        h_cov = _coverage(word_len, kh)
        feats.append(jnp.max(relu[:, :, :h_cov, :], axis=(2, 3)))
    f = jnp.concatenate(feats, axis=1)
    return jnp.dot(f, params["fc_w"],
                   precision=lax.Precision.HIGHEST) + params["fc_b"]


if __name__ == "__main__":
    vocab_len, word_len, num_classes, vec_length = 100, 16, 8, 32
    B, C = 2, 96

    key = jax.random.PRNGKey(0)
    ks = jax.random.split(key, 10)
    params = {
        "embedding": jax.random.normal(ks[0], (vocab_len, vec_length), jnp.float32) * 0.1,
        "w3": jax.random.normal(ks[1], (3, vec_length, C), jnp.float32) * 0.1,
        "b3": jax.random.normal(ks[2], (1, C), jnp.float32) * 0.1,
        "w4": jax.random.normal(ks[3], (4, vec_length, C), jnp.float32) * 0.1,
        "b4": jax.random.normal(ks[4], (1, C), jnp.float32) * 0.1,
        "w5": jax.random.normal(ks[5], (5, vec_length, C), jnp.float32) * 0.1,
        "b5": jax.random.normal(ks[6], (1, C), jnp.float32) * 0.1,
        "fc_w": jax.random.normal(ks[7], (3 * C, num_classes), jnp.float32) * 0.1,
        "fc_b": jax.random.normal(ks[8], (1, num_classes), jnp.float32) * 0.1,
    }
    x = jax.random.randint(ks[9], (B, word_len), 0, vocab_len, dtype=jnp.int32)

    fwd = jax.jit(functools.partial(textcnn_forward, vocab_len=vocab_len,
                                    word_len=word_len, vec_length=vec_length))
    out = jax.block_until_ready(fwd(params, x))
    ref = textcnn_reference(params, x, vocab_len=vocab_len, word_len=word_len,
                            vec_length=vec_length)

    assert out.shape == (B, num_classes), out.shape
    # Slack only for MXU f32-via-bf16 pass differences between kernel and ref.
    assert jnp.allclose(out, ref, rtol=1e-2, atol=1e-2), (out, ref)
    print("KERNEL_OK")
</pallas_src>

<mosaic_0001>
module attributes {stable_mosaic.version = 11 : i64} {
  func.func @_textcnn_kernel(%arg0: i32, %arg1: memref<2x16xi32, #tpu.memory_space<vmem>>, %arg2: memref<100x32xf32, #tpu.memory_space<vmem>>, %arg3: memref<5x32x1152xf32, #tpu.memory_space<vmem>>, %arg4: memref<1x1152xf32, #tpu.memory_space<vmem>>, %arg5: memref<1x1152xi32, #tpu.memory_space<vmem>>, %arg6: memref<384x128xf32, #tpu.memory_space<vmem>>, %arg7: memref<1x128xf32, #tpu.memory_space<vmem>>, %arg8: memref<2x128xf32, #tpu.memory_space<vmem>>, %arg9: memref<2x20x32xf32, #tpu.memory_space<vmem>>) attributes {dimension_semantics = [#tpu.dimension_semantics<parallel>], iteration_bounds = array<i64: 1>, scalar_prefetch = 0 : i64, scratch_operands = 1 : i64, tpu.core_type = #tpu.core_type<tc>, window_params = [{transform_indices = @transform_0, window_bounds = array<i64: 2, 16>}, {pipeline_mode = #tpu.pipeline_mode<synchronous>, transform_indices = @transform_1, window_bounds = array<i64: 100, 32>}, {pipeline_mode = #tpu.pipeline_mode<synchronous>, transform_indices = @transform_2, window_bounds = array<i64: 5, 32, 1152>}, {pipeline_mode = #tpu.pipeline_mode<synchronous>, transform_indices = @transform_3, window_bounds = array<i64: 1, 1152>}, {pipeline_mode = #tpu.pipeline_mode<synchronous>, transform_indices = @transform_4, window_bounds = array<i64: 1, 1152>}, {pipeline_mode = #tpu.pipeline_mode<synchronous>, transform_indices = @transform_5, window_bounds = array<i64: 384, 128>}, {pipeline_mode = #tpu.pipeline_mode<synchronous>, transform_indices = @transform_6, window_bounds = array<i64: 1, 128>}, {transform_indices = @transform_7, window_bounds = array<i64: 2, 128>}]} {
    %c0 = arith.constant 0 : index
    %c0_0 = arith.constant 0 : index
    %0 = vector.load %arg1[%c0, %c0_0] : memref<2x16xi32, #tpu.memory_space<vmem>>, vector<2x16xi32>
    %c0_i32 = arith.constant 0 : i32
    %c99_i32 = arith.constant 99 : i32
    %1 = vector.broadcast %c0_i32 : i32 to vector<2x16xi32>
    %2 = arith.maxsi %1, %0 : vector<2x16xi32>
    %3 = vector.broadcast %c99_i32 : i32 to vector<2x16xi32>
    %4 = arith.minsi %3, %2 : vector<2x16xi32>
    %5 = tpu.iota {dimensions = array<i32: 2>} : vector<2x16x100xi32>
    %6 = vector.shape_cast %4 : vector<2x16xi32> to vector<2x16x1xi32>
    %7 = vector.broadcast %6 : vector<2x16x1xi32> to vector<2x16x100xi32>
    %8 = arith.cmpi eq, %7, %5 : vector<2x16x100xi32>
    %9 = arith.extui %8 : vector<2x16x100xi1> to vector<2x16x100xi32>
    %10 = arith.sitofp %9 : vector<2x16x100xi32> to vector<2x16x100xf32>
    %11 = vector.shape_cast %10 : vector<2x16x100xf32> to vector<32x100xf32>
    %c0_1 = arith.constant 0 : index
    %c0_2 = arith.constant 0 : index
    %12 = vector.load %arg2[%c0_1, %c0_2] : memref<100x32xf32, #tpu.memory_space<vmem>>, vector<100x32xf32>
    %cst = arith.constant dense<0.000000e+00> : vector<32x32xf32>
    %13 = tpu.matmul %11, %12, %cst {dimension_numbers = #tpu.dot_dimension_numbers<[1], [0], [0], [1], [0, 0, 1, 1], [], []>} : vector<32x100xf32>, vector<100x32xf32>, vector<32x32xf32> -> vector<32x32xf32>
    %cst_3 = arith.constant 0.000000e+00 : f32
    %14 = vector.broadcast %cst_3 : f32 to vector<2x20x32xf32>
    %c0_4 = arith.constant 0 : index
    %c0_5 = arith.constant 0 : index
    %c0_6 = arith.constant 0 : index
    %15 = vector.load %arg9[%c0_4, %c0_5, %c0_6] : memref<2x20x32xf32, #tpu.memory_space<vmem>>, vector<2x20x32xf32>
    tpu.vector_store %arg9[%c0_4, %c0_5, %c0_6], %14 {strides = array<i32>} : memref<2x20x32xf32, #tpu.memory_space<vmem>>, vector<2x20x32xf32>,
    %16 = vector.shape_cast %13 : vector<32x32xf32> to vector<2x16x32xf32>
    %c0_7 = arith.constant 0 : index
    %c1 = arith.constant 1 : index
    %c0_8 = arith.constant 0 : index
    %17 = vector.load %arg9[%c0_7, %c1, %c0_8] : memref<2x20x32xf32, #tpu.memory_space<vmem>>, vector<2x16x32xf32>
    tpu.vector_store %arg9[%c0_7, %c1, %c0_8], %16 {strides = array<i32>} : memref<2x20x32xf32, #tpu.memory_space<vmem>>, vector<2x16x32xf32>,
    %c0_9 = arith.constant 0 : index
    %c0_10 = arith.constant 0 : index
    %c0_11 = arith.constant 0 : index
    %18 = vector.load %arg9[%c0_9, %c0_10, %c0_11] : memref<2x20x32xf32, #tpu.memory_space<vmem>>, vector<2x20x32xf32>
    %19 = vector.extract_strided_slice %18 {offsets = [0, 0, 0], sizes = [2, 16, 32], strides = [1, 1, 1]} : vector<2x20x32xf32> to vector<2x16x32xf32>
    %20 = vector.shape_cast %19 : vector<2x16x32xf32> to vector<32x32xf32>
    %c0_12 = arith.constant 0 : index
    %c0_13 = arith.constant 0 : index
    %c0_14 = arith.constant 0 : index
    %21 = vector.load %arg3[%c0_12, %c0_13, %c0_14] : memref<5x32x1152xf32, #tpu.memory_space<vmem>>, vector<1x32x1152xf32>
    %22 = vector.shape_cast %21 : vector<1x32x1152xf32> to vector<32x1152xf32>
    %cst_15 = arith.constant dense<0.000000e+00> : vector<32x1152xf32>
    %23 = tpu.matmul %20, %22, %cst_15 {dimension_numbers = #tpu.dot_dimension_numbers<[1], [0], [0], [1], [0, 0, 1, 1], [], []>} : vector<32x32xf32>, vector<32x1152xf32>, vector<32x1152xf32> -> vector<32x1152xf32>
    %24 = vector.extract_strided_slice %18 {offsets = [0, 1, 0], sizes = [2, 16, 32], strides = [1, 1, 1]} : vector<2x20x32xf32> to vector<2x16x32xf32>
    %25 = vector.shape_cast %24 : vector<2x16x32xf32> to vector<32x32xf32>
    %c1_16 = arith.constant 1 : index
    %c0_17 = arith.constant 0 : index
    %c0_18 = arith.constant 0 : index
    %26 = vector.load %arg3[%c1_16, %c0_17, %c0_18] : memref<5x32x1152xf32, #tpu.memory_space<vmem>>, vector<1x32x1152xf32>
    %27 = vector.shape_cast %26 : vector<1x32x1152xf32> to vector<32x1152xf32>
    %cst_19 = arith.constant dense<0.000000e+00> : vector<32x1152xf32>
    %28 = tpu.matmul %25, %27, %cst_19 {dimension_numbers = #tpu.dot_dimension_numbers<[1], [0], [0], [1], [0, 0, 1, 1], [], []>} : vector<32x32xf32>, vector<32x1152xf32>, vector<32x1152xf32> -> vector<32x1152xf32>
    %29 = arith.addf %23, %28 : vector<32x1152xf32>
    %30 = vector.extract_strided_slice %18 {offsets = [0, 2, 0], sizes = [2, 16, 32], strides = [1, 1, 1]} : vector<2x20x32xf32> to vector<2x16x32xf32>
    %31 = vector.shape_cast %30 : vector<2x16x32xf32> to vector<32x32xf32>
    %c2 = arith.constant 2 : index
    %c0_20 = arith.constant 0 : index
    %c0_21 = arith.constant 0 : index
    %32 = vector.load %arg3[%c2, %c0_20, %c0_21] : memref<5x32x1152xf32, #tpu.memory_space<vmem>>, vector<1x32x1152xf32>
    %33 = vector.shape_cast %32 : vector<1x32x1152xf32> to vector<32x1152xf32>
    %cst_22 = arith.constant dense<0.000000e+00> : vector<32x1152xf32>
    %34 = tpu.matmul %31, %33, %cst_22 {dimension_numbers = #tpu.dot_dimension_numbers<[1], [0], [0], [1], [0, 0, 1, 1], [], []>} : vector<32x32xf32>, vector<32x1152xf32>, vector<32x1152xf32> -> vector<32x1152xf32>
    %35 = arith.addf %29, %34 : vector<32x1152xf32>
    %36 = vector.extract_strided_slice %18 {offsets = [0, 3, 0], sizes = [2, 16, 32], strides = [1, 1, 1]} : vector<2x20x32xf32> to vector<2x16x32xf32>
    %37 = vector.shape_cast %36 : vector<2x16x32xf32> to vector<32x32xf32>
    %c3 = arith.constant 3 : index
    %c0_23 = arith.constant 0 : index
    %c0_24 = arith.constant 0 : index
    %38 = vector.load %arg3[%c3, %c0_23, %c0_24] : memref<5x32x1152xf32, #tpu.memory_space<vmem>>, vector<1x32x1152xf32>
    %39 = vector.shape_cast %38 : vector<1x32x1152xf32> to vector<32x1152xf32>
    %cst_25 = arith.constant dense<0.000000e+00> : vector<32x1152xf32>
    %40 = tpu.matmul %37, %39, %cst_25 {dimension_numbers = #tpu.dot_dimension_numbers<[1], [0], [0], [1], [0, 0, 1, 1], [], []>} : vector<32x32xf32>, vector<32x1152xf32>, vector<32x1152xf32> -> vector<32x1152xf32>
    %41 = arith.addf %35, %40 : vector<32x1152xf32>
    %42 = vector.extract_strided_slice %18 {offsets = [0, 4, 0], sizes = [2, 16, 32], strides = [1, 1, 1]} : vector<2x20x32xf32> to vector<2x16x32xf32>
    %43 = vector.shape_cast %42 : vector<2x16x32xf32> to vector<32x32xf32>
    %c4 = arith.constant 4 : index
    %c0_26 = arith.constant 0 : index
    %c0_27 = arith.constant 0 : index
    %44 = vector.load %arg3[%c4, %c0_26, %c0_27] : memref<5x32x1152xf32, #tpu.memory_space<vmem>>, vector<1x32x1152xf32>
    %45 = vector.shape_cast %44 : vector<1x32x1152xf32> to vector<32x1152xf32>
    %cst_28 = arith.constant dense<0.000000e+00> : vector<32x1152xf32>
    %46 = tpu.matmul %43, %45, %cst_28 {dimension_numbers = #tpu.dot_dimension_numbers<[1], [0], [0], [1], [0, 0, 1, 1], [], []>} : vector<32x32xf32>, vector<32x1152xf32>, vector<32x1152xf32> -> vector<32x1152xf32>
    %47 = arith.addf %41, %46 : vector<32x1152xf32>
    %c0_29 = arith.constant 0 : index
    %c0_30 = arith.constant 0 : index
    %48 = vector.load %arg4[%c0_29, %c0_30] : memref<1x1152xf32, #tpu.memory_space<vmem>>, vector<1x1152xf32>
    %49 = vector.broadcast %48 : vector<1x1152xf32> to vector<32x1152xf32>
    %50 = arith.addf %47, %49 : vector<32x1152xf32>
    %cst_31 = arith.constant 0.000000e+00 : f32
    %51 = vector.broadcast %cst_31 : f32 to vector<32x1152xf32>
    %52 = arith.maximumf %50, %51 : vector<32x1152xf32>
    %53 = vector.shape_cast %52 : vector<32x1152xf32> to vector<2x16x1152xf32>
    %54 = tpu.iota {dimensions = array<i32: 0>} : vector<16x1152xi32>
    %c0_32 = arith.constant 0 : index
    %c0_33 = arith.constant 0 : index
    %55 = vector.load %arg5[%c0_32, %c0_33] : memref<1x1152xi32, #tpu.memory_space<vmem>>, vector<1x1152xi32>
    %56 = vector.broadcast %55 : vector<1x1152xi32> to vector<16x1152xi32>
    %57 = arith.cmpi slt, %54, %56 : vector<16x1152xi32>
    %58 = vector.shape_cast %57 : vector<16x1152xi1> to vector<1x16x1152xi1>
    %cst_34 = arith.constant 0.000000e+00 : f32
    %59 = vector.shape_cast %58 : vector<1x16x1152xi1> to vector<1x16x1152xi1>
    %60 = vector.broadcast %59 : vector<1x16x1152xi1> to vector<2x16x1152xi1>
    %61 = vector.broadcast %cst_34 : f32 to vector<2x16x1152xf32>
    %62 = arith.select %60, %53, %61 : vector<2x16x1152xi1>, vector<2x16x1152xf32>
    %cst_35 = arith.constant dense<0xFF800000> : vector<2x1152xf32>
    %63 = vector.multi_reduction <maximumf>, %62, %cst_35 [1] : vector<2x16x1152xf32> to vector<2x1152xf32>
    %64 = vector.extract_strided_slice %63 {offsets = [0, 0], sizes = [2, 384], strides = [1, 1]} : vector<2x1152xf32> to vector<2x384xf32>
    %65 = vector.extract_strided_slice %63 {offsets = [0, 384], sizes = [2, 384], strides = [1, 1]} : vector<2x1152xf32> to vector<2x384xf32>
    %66 = arith.maximumf %64, %65 : vector<2x384xf32>
    %67 = vector.extract_strided_slice %63 {offsets = [0, 768], sizes = [2, 384], strides = [1, 1]} : vector<2x1152xf32> to vector<2x384xf32>
    %68 = arith.maximumf %66, %67 : vector<2x384xf32>
    %c0_36 = arith.constant 0 : index
    %c0_37 = arith.constant 0 : index
    %69 = vector.load %arg6[%c0_36, %c0_37] : memref<384x128xf32, #tpu.memory_space<vmem>>, vector<384x128xf32>
    %cst_38 = arith.constant dense<0.000000e+00> : vector<2x128xf32>
    %70 = tpu.matmul %68, %69, %cst_38 {dimension_numbers = #tpu.dot_dimension_numbers<[1], [0], [0], [1], [0, 0, 1, 1], [], []>} : vector<2x384xf32>, vector<384x128xf32>, vector<2x128xf32> -> vector<2x128xf32>
    %c0_39 = arith.constant 0 : index
    %c0_40 = arith.constant 0 : index
    %71 = vector.load %arg7[%c0_39, %c0_40] : memref<1x128xf32, #tpu.memory_space<vmem>>, vector<1x128xf32>
    %72 = vector.broadcast %71 : vector<1x128xf32> to vector<2x128xf32>
    %73 = arith.addf %70, %72 : vector<2x128xf32>
    %c0_41 = arith.constant 0 : index
    %c0_42 = arith.constant 0 : index
    %74 = vector.load %arg8[%c0_41, %c0_42] : memref<2x128xf32, #tpu.memory_space<vmem>>, vector<2x128xf32>
    tpu.vector_store %arg8[%c0_41, %c0_42], %73 {strides = array<i32>} : memref<2x128xf32, #tpu.memory_space<vmem>>, vector<2x128xf32>,
    return
  }
  func.func @transform_0(%arg0: i32) -> (i32, i32) {
    %c0_i32 = arith.constant 0 : i32
    %c0_i32_0 = arith.constant 0 : i32
    return %arg0, %c0_i32 : i32, i32
  }
  func.func @transform_1(%arg0: i32) -> (i32, i32) {
    %c0_i32 = arith.constant 0 : i32
    %c0_i32_0 = arith.constant 0 : i32
    %c0_i32_1 = arith.constant 0 : i32
    return %c0_i32, %c0_i32_0 : i32, i32
  }
  func.func @transform_2(%arg0: i32) -> (i32, i32, i32) {
    %c0_i32 = arith.constant 0 : i32
    %c0_i32_0 = arith.constant 0 : i32
    %c0_i32_1 = arith.constant 0 : i32
    %c0_i32_2 = arith.constant 0 : i32
    return %c0_i32, %c0_i32_0, %c0_i32_1 : i32, i32, i32
  }
  func.func @transform_3(%arg0: i32) -> (i32, i32) {
    %c0_i32 = arith.constant 0 : i32
    %c0_i32_0 = arith.constant 0 : i32
    %c0_i32_1 = arith.constant 0 : i32
    return %c0_i32, %c0_i32_0 : i32, i32
  }
  func.func @transform_4(%arg0: i32) -> (i32, i32) {
    %c0_i32 = arith.constant 0 : i32
    %c0_i32_0 = arith.constant 0 : i32
    %c0_i32_1 = arith.constant 0 : i32
    return %c0_i32, %c0_i32_0 : i32, i32
  }
  func.func @transform_5(%arg0: i32) -> (i32, i32) {
    %c0_i32 = arith.constant 0 : i32
    %c0_i32_0 = arith.constant 0 : i32
    %c0_i32_1 = arith.constant 0 : i32
    return %c0_i32, %c0_i32_0 : i32, i32
  }
  func.func @transform_6(%arg0: i32) -> (i32, i32) {
    %c0_i32 = arith.constant 0 : i32
    %c0_i32_0 = arith.constant 0 : i32
    %c0_i32_1 = arith.constant 0 : i32
    return %c0_i32, %c0_i32_0 : i32, i32
  }
  func.func @transform_7(%arg0: i32) -> (i32, i32) {
    %c0_i32 = arith.constant 0 : i32
    %c0_i32_0 = arith.constant 0 : i32
    return %arg0, %c0_i32 : i32, i32
  }
}

</mosaic_0001>

<llo_original>
// kernel: textcnn_forward.1
$region0: #{textcnn_forward.1}
  #allocation0 [shape = 'u32[]', space=smem, size = 0x4, offset = 0x4, fixed_abs, tag = 'smem constant byte address 0x4 - core index']
  #allocation1 [shape = 'u32[144,128]{1,0:T(1,128)}', space=vmem, size = 0x12000, scoped, tag = 'internal scratch']
  #allocation2 [shape = 'f32[2,20,32]{2,1,0:T(8,128)}', space=vmem, size = 0x6000, scoped, tag = 'scratch operand']
  %s0 = inlined_call_operand.vmem [shape: s32[2,16], index: 0, kind: input, shape index: {}]
  %s1 = inlined_call_operand.vmem [shape: f32[100,32], index: 1, kind: input, shape index: {}]
  %s2 = inlined_call_operand.vmem [shape: f32[5,32,1152], index: 2, kind: input, shape index: {}]
  %s3 = inlined_call_operand.vmem [shape: f32[1,1152], index: 3, kind: input, shape index: {}]
  %s4 = inlined_call_operand.vmem [shape: s32[1,1152], index: 4, kind: input, shape index: {}]
  %s5 = inlined_call_operand.vmem [shape: f32[384,128], index: 5, kind: input, shape index: {}]
  %s6 = inlined_call_operand.vmem [shape: f32[1,128], index: 6, kind: input, shape index: {}]
  %s7 = inlined_call_operand.hbm [shape: f32[2,128], index: 7, kind: output, shape index: {}]
  %s8 = sld [smem:[#allocation0]]
  $region38: #{textcnn_forward.1} parent=0
    _
  %s10 = ssub.s32 1, %s8
  %s11 = scalar_select 0, %s10, %s8
  $region1: #{textcnn_forward.1} parent=0
    #allocation3 [shape = 'u8[1024]{0}', space=vmem, size = 0x400, scoped, tag = 'output window, operand 0, single buffered']
    #allocation4 [shape = 's32[1]{0}', space=sflag, size = 0x4, scoped, tag = 'scoped memory for textcnn_forward.1']
    %12 = vsyncpa [#allocation4], 0
    // Predicated region
    $region2: #{textcnn_forward.1} parent=1 // pred_check
      _
    $region3: #{textcnn_forward.1} parent=1 // pred_check_branch
      %14 = sbr.rel (0) target = $region5
    $region4: #{textcnn_forward.1} parent=1 // pred_region
      _
    $region5: #{textcnn_forward.1} parent=1 // pred_fallthru
      _
    // Predicated region
    $region6: #{textcnn_forward.1} parent=1 // pred_check
      _
    $region7: #{textcnn_forward.1} parent=1 // pred_check_branch
      %16 = sbr.rel (0) target = $region9
    $region8: #{textcnn_forward.1} parent=1 // pred_region
      _
    $region9: #{textcnn_forward.1} parent=1 // pred_fallthru
      _
    // Predicated region
    $region10: #{textcnn_forward.1} parent=1 // pred_check
      _
    $region11: #{textcnn_forward.1} parent=1 // pred_check_branch
      %18 = sbr.rel (0) target = $region13
    $region12: #{textcnn_forward.1} parent=1 // pred_region
      _
    $region13: #{textcnn_forward.1} parent=1 // pred_fallthru
      _
    // Predicated region
    $region14: #{textcnn_forward.1} parent=1 // pred_check
      _
    $region15: #{textcnn_forward.1} parent=1 // pred_check_branch
      %20 = sbr.rel (0) target = $region17
    $region16: #{textcnn_forward.1} parent=1 // pred_region
      _
    $region17: #{textcnn_forward.1} parent=1 // pred_fallthru
      _
    // Predicated region
    $region18: #{textcnn_forward.1} parent=1 // pred_check
      _
    $region19: #{textcnn_forward.1} parent=1 // pred_check_branch
      %22 = sbr.rel (0) target = $region21
    $region20: #{textcnn_forward.1} parent=1 // pred_region
      _
    $region21: #{textcnn_forward.1} parent=1 // pred_fallthru
      _
    // Predicated region
    $region22: #{textcnn_forward.1} parent=1 // pred_check
      _
    $region23: #{textcnn_forward.1} parent=1 // pred_check_branch
      %24 = sbr.rel (0) target = $region25
    $region24: #{textcnn_forward.1} parent=1 // pred_region
      _
    $region25: #{textcnn_forward.1} parent=1 // pred_fallthru
      _
    // Predicated region
    $region26: #{textcnn_forward.1} parent=1 // pred_check
      _
    $region27: #{textcnn_forward.1} parent=1 // pred_check_branch
      %26 = sbr.rel (0) target = $region29
    $region28: #{textcnn_forward.1} parent=1 // pred_region
      _
    $region29: #{textcnn_forward.1} parent=1 // pred_fallthru
      _
    %v27 = vld [vmem:[%s0] sm:$0x3]
    %vm28 = vcmp.gt.s32.totalorder %v27, 0
    %v29 = vsel %vm28, %v27, 0
    %vm30 = vcmp.lt.s32.totalorder %v29, 99
    %v31 = vsel %vm30, %v29, 99
    %v32 = vlaneseq
    %v33 = vand.u32 %v32, 127
    %v34 = vlaneseq
    %v35 = vshrl.u32 %v34, 7
    %v36 = vsub.s32 0, %v35
    %v37 = vrot.slane %v31, %v36
    %39 = vbcast.lane.b32.xlu0 %v37, 256
    %v40 = vpop.permute.xlu0 %39
    %s42 = sor.u32 256, 8
    %43 = vbcast.lane.b32.xlu0 %v37, %s42
    %v44 = vpop.permute.xlu0 %43
    %v45 = vlaneseq
    %v46 = vshrl.u32 %v45, 7
    %v47 = vsub.s32 1, %v46
    %v48 = vrot.slane %v31, %v47
    %50 = vbcast.lane.b32.xlu0 %v48, 256
    %v51 = vpop.permute.xlu0 %50
    %s53 = sor.u32 256, 8
    %54 = vbcast.lane.b32.xlu0 %v48, %s53
    %v55 = vpop.permute.xlu0 %54
    %vm56 = vcmp.eq.s32.totalorder %v40, %v33
    %vm57 = vcmp.eq.s32.totalorder %v44, %v33
    %vm58 = vcmp.eq.s32.totalorder %v51, %v33
    %vm59 = vcmp.eq.s32.totalorder %v55, %v33
    %v60 = vsel %vm56, 1, 0
    %v61 = vsel %vm57, 1, 0
    %v62 = vsel %vm58, 1, 0
    %v63 = vsel %vm59, 1, 0
    %v64 = vcvt.s32.f32 %v60
    %v65 = vcvt.s32.f32 %v61
    %v66 = vcvt.s32.f32 %v62
    %v67 = vcvt.s32.f32 %v63
    %v68 = vld [vmem:[%s1] sm:$0xff]
    %v69 = vld [vmem:[%s1 + $0x8] sm:$0xff]
    %v70 = vld [vmem:[%s1 + $0x10] sm:$0xff]
    %v71 = vld [vmem:[%s1 + $0x18] sm:$0xff]
    %v72 = vld [vmem:[%s1 + $0x20] sm:$0xff]
    %v73 = vld [vmem:[%s1 + $0x28] sm:$0xff]
    %v74 = vld [vmem:[%s1 + $0x30] sm:$0xff]
    %v75 = vld [vmem:[%s1 + $0x38] sm:$0xff]
    %v76 = vld [vmem:[%s1 + $0x40] sm:$0xff]
    %v77 = vld [vmem:[%s1 + $0x48] sm:$0xff]
    %v78 = vld [vmem:[%s1 + $0x50] sm:$0xff]
    %v79 = vld [vmem:[%s1 + $0x58] sm:$0xff]
    %v80 = vld [vmem:[%s1 + $0x60] sm:$0xf]
    %vm81 = vcmask 818176
    %v83 = vsel %vm81, %v64, 0
    %v86 = vsel %vm81, %v65, 0
    %v89 = vsel %vm81, %v66, 0
    %v92 = vsel %vm81, %v67, 0
    %vm94 = vcmask 1043456
    %v96 = vsel %vm94, %v80, 0
    %98 = vmatprep.subr.mxu0 0.0
    %99 = vmatpush1.msra.mxu0 %v68
    %100 = vmatprep.subr.mxu0 0.0
    %101 = vmatpush1.msra.mxu0 %v69
    %102 = vmatprep.subr.mxu0 0.0
    %103 = vmatpush1.msra.mxu0 %v70
    %104 = vmatprep.subr.mxu0 0.0
    %105 = vmatpush1.msra.mxu0 %v71
    %106 = vmatprep.subr.mxu0 0.0
    %107 = vmatpush1.msra.mxu0 %v72
    %108 = vmatprep.subr.mxu0 0.0
    %109 = vmatpush1.msra.mxu0 %v73
    %110 = vmatprep.subr.mxu0 0.0
    %111 = vmatpush1.msra.mxu0 %v74
    %112 = vmatprep.subr.mxu0 0.0
    %113 = vmatpush1.msra.mxu0 %v75
    %114 = vmatprep.subr.mxu0 0.0
    %115 = vmatpush1.msra.mxu0 %v76
    %116 = vmatprep.subr.mxu0 0.0
    %117 = vmatpush1.msra.mxu0 %v77
    %118 = vmatprep.subr.mxu0 0.0
    %119 = vmatpush1.msra.mxu0 %v78
    %120 = vmatprep.subr.mxu0 0.0
    %121 = vmatpush1.msra.mxu0 %v79
    %122 = vmatprep.subr.mxu0 0.0
    %123 = vmatpush1.msra.mxu0 %v96
    %124 = vmatprep.subr.mxu0 0.0
    %125 = vmatpush1.msra.mxu0 0.0
    %126 = vmatprep.subr.mxu0 0.0
    %127 = vmatpush1.msra.mxu0 0.0
    %128 = vmatprep.subr.mxu0 0.0
    %129 = vmatpush1.msra.mxu0 0.0
    %130 = vmatprep.subr.mxu0 0.0
    %131 = vmatpush1.msra.mxu0 0.0
    %132 = vmatprep.subr.mxu0 0.0
    %133 = vmatpush1.msra.mxu0 0.0
    %134 = vmatprep.subr.mxu0 0.0
    %135 = vmatpush1.msra.mxu0 0.0
    %136 = vmatprep.subr.mxu0 0.0
    %137 = vmatpush1.msra.mxu0 0.0
    %138 = vmatprep.subr.mxu0 0.0
    %139 = vmatpush1.msra.mxu0 0.0
    %140 = vmatprep.subr.mxu0 0.0
    %141 = vmatpush1.msra.mxu0 0.0
    %142 = vmatprep.subr.mxu0 0.0
    %143 = vmatpush1.msra.mxu0 0.0
    %144 = vmatprep.subr.mxu0 0.0
    %145 = vmatpush1.msra.mxu0 0.0
    %146 = vmatprep.subr.mxu0 0.0
    %147 = vmatpush1.msra.mxu0 0.0
    %148 = vmatprep.subr.mxu0 0.0
    %149 = vmatpush1.msra.mxu0 0.0
    %150 = vmatprep.subr.mxu0 0.0
    %151 = vmatpush1.msra.mxu0 0.0
    %152 = vmatprep.subr.mxu0 0.0
    %153 = vmatpush1.msra.mxu0 0.0
    %154 = vmatprep.subr.mxu0 0.0
    %155 = vmatpush1.msra.mxu0 0.0
    %156 = vmatprep.subr.mxu0 0.0
    %157 = vmatpush1.msra.mxu0 0.0
    %158 = vmatprep.subr.mxu0 0.0
    %159 = vmatpush1.msra.mxu0 0.0
    %160 = vmatprep.subr.mxu0 0.0
    %161 = vmatpush1.msra.mxu0 0.0
    %162 = vmatprep.mubr.f32.mxu0 0.0
    %163 = vmatmul.mubr.f32.gmra.mrb[0].mxu0 %v83
    %v164 = vpop.f32.mrb[0].mxu0
    %v165 = vadd.f32 0.0, %v164
    %v166 = vpop.f32.mrb[0].mxu0
    %167 = vmatprep.mubr.f32.mxu0 0.0
    %168 = vmatmul.mubr.f32.gmra.mrb[0].mxu0 %v86
    %v169 = vpop.f32.mrb[0].mxu0
    %v170 = vadd.f32 0.0, %v169
    %v171 = vpop.f32.mrb[0].mxu0
    %172 = vmatprep.mubr.f32.mxu0 0.0
    %173 = vmatmul.mubr.f32.gmra.mrb[0].mxu0 %v89
    %v174 = vpop.f32.mrb[0].mxu0
    %v175 = vadd.f32 0.0, %v174
    %v176 = vpop.f32.mrb[0].mxu0
    %177 = vmatprep.mubr.f32.mxu0 0.0
    %178 = vmatmul.mubr.f32.gmra.mrb[0].mxu0 %v92
    %v179 = vpop.f32.mrb[0].mxu0
    %v180 = vadd.f32 0.0, %v179
    %v181 = vpop.f32.mrb[0].mxu0
    %182 = vdwg.mxu0
    %vm183 = vcmask 261120
    %184 = vst.msk [vmem:[#allocation2] sm:$0xff] %vm183, 0.0
    %185 = vst.msk [vmem:[#allocation2 + $0x8] sm:$0xff] %vm183, 0.0
    %vm186 = vcmask 257024
    %187 = vst.msk [vmem:[#allocation2 + $0x10] sm:$0xf] %vm186, 0.0
    %188 = vst.msk [vmem:[#allocation2 + $0x18] sm:$0xff] %vm183, 0.0
    %189 = vst.msk [vmem:[#allocation2 + $0x20] sm:$0xff] %vm183, 0.0
    %190 = vst.msk [vmem:[#allocation2 + $0x28] sm:$0xf] %vm186, 0.0
    %191 = vst.msk [vmem:[#allocation2 + $0x1] sm:$0xff] %vm183, %v165
    %192 = vst.msk [vmem:[#allocation2 + $0x9] sm:$0xff] %vm183, %v170
    %193 = vst.msk [vmem:[#allocation2 + $0x19] sm:$0xff] %vm183, %v175
    %194 = vst.msk [vmem:[#allocation2 + $0x21] sm:$0xff] %vm183, %v180
    %v195 = vld [vmem:[#allocation2] sm:$0xff]
    %v196 = vld [vmem:[#allocation2 + $0x8] sm:$0xff]
    %v197 = vld [vmem:[#allocation2 + $0x10] sm:$0xf]
    %v198 = vld [vmem:[#allocation2 + $0x18] sm:$0xff]
    %v199 = vld [vmem:[#allocation2 + $0x20] sm:$0xff]
    %v200 = vld [vmem:[#allocation2 + $0x28] sm:$0xf]
    %v201 = vld [vmem:[%s2] sm:$0xff]
    %v202 = vld [vmem:[%s2 + $0x8] sm:$0xff]
    %v203 = vld [vmem:[%s2 + $0x10] sm:$0xff]
    %v204 = vld [vmem:[%s2 + $0x18] sm:$0xff]
    %v205 = vld [vmem:[%s2 + $0x20] sm:$0xff]
    %v206 = vld [vmem:[%s2 + $0x28] sm:$0xff]
    %v207 = vld [vmem:[%s2 + $0x30] sm:$0xff]
    %v208 = vld [vmem:[%s2 + $0x38] sm:$0xff]
    %v209 = vld [vmem:[%s2 + $0x40] sm:$0xff]
    %v210 = vld [vmem:[%s2 + $0x48] sm:$0xff]
    %v211 = vld [vmem:[%s2 + $0x50] sm:$0xff]
    %v212 = vld [vmem:[%s2 + $0x58] sm:$0xff]
    %v213 = vld [vmem:[%s2 + $0x60] sm:$0xff]
    %v214 = vld [vmem:[%s2 + $0x68] sm:$0xff]
    %v215 = vld [vmem:[%s2 + $0x70] sm:$0xff]
    %v216 = vld [vmem:[%s2 + $0x78] sm:$0xff]
    %v217 = vld [vmem:[%s2 + $0x80] sm:$0xff]
    %v218 = vld [vmem:[%s2 + $0x88] sm:$0xff]
    %v219 = vld [vmem:[%s2 + $0x90] sm:$0xff]
    %v220 = vld [vmem:[%s2 + $0x98] sm:$0xff]
    %v221 = vld [vmem:[%s2 + $0xa0] sm:$0xff]
    %v222 = vld [vmem:[%s2 + $0xa8] sm:$0xff]
    %v223 = vld [vmem:[%s2 + $0xb0] sm:$0xff]
    %v224 = vld [vmem:[%s2 + $0xb8] sm:$0xff]
    %v225 = vld [vmem:[%s2 + $0xc0] sm:$0xff]
    %v226 = vld [vmem:[%s2 + $0xc8] sm:$0xff]
    %v227 = vld [vmem:[%s2 + $0xd0] sm:$0xff]
    %v228 = vld [vmem:[%s2 + $0xd8] sm:$0xff]
    %v229 = vld [vmem:[%s2 + $0xe0] sm:$0xff]
    %v230 = vld [vmem:[%s2 + $0xe8] sm:$0xff]
    %v231 = vld [vmem:[%s2 + $0xf0] sm:$0xff]
    %v232 = vld [vmem:[%s2 + $0xf8] sm:$0xff]
    %v233 = vld [vmem:[%s2 + $0x100] sm:$0xff]
    %v234 = vld [vmem:[%s2 + $0x108] sm:$0xff]
    %v235 = vld [vmem:[%s2 + $0x110] sm:$0xff]
    %v236 = vld [vmem:[%s2 + $0x118] sm:$0xff]
    %vm243 = vcmask 1046528
    %v244 = vrot.slane %v195, 1
    %v245 = vrot.slane %v196, 1
    %v246 = vsel %vm243, %v244, %v245
    %v247 = vrot.slane %v197, 1
    %v248 = vsel %vm243, %v245, %v247
    %v249 = vrot.slane %v198, 1
    %v250 = vrot.slane %v199, 1
    %v251 = vsel %vm243, %v249, %v250
    %v252 = vrot.slane %v200, 1
    %v253 = vsel %vm243, %v250, %v252
    %s254 = scalar_lea.vmem %s2, 288
    %v255 = vld [vmem:[%s254] sm:$0xff]
    %v256 = vld [vmem:[%s254 + $0x8] sm:$0xff]
    %v257 = vld [vmem:[%s254 + $0x10] sm:$0xff]
    %v258 = vld [vmem:[%s254 + $0x18] sm:$0xff]
    %v259 = vld [vmem:[%s254 + $0x20] sm:$0xff]
    %v260 = vld [vmem:[%s254 + $0x28] sm:$0xff]
    %v261 = vld [vmem:[%s254 + $0x30] sm:$0xff]
    %v262 = vld [vmem:[%s254 + $0x38] sm:$0xff]
    %v263 = vld [vmem:[%s254 + $0x40] sm:$0xff]
    %v264 = vld [vmem:[%s254 + $0x48] sm:$0xff]
    %v265 = vld [vmem:[%s254 + $0x50] sm:$0xff]
    %v266 = vld [vmem:[%s254 + $0x58] sm:$0xff]
    %v267 = vld [vmem:[%s254 + $0x60] sm:$0xff]
    %v268 = vld [vmem:[%s254 + $0x68] sm:$0xff]
    %v269 = vld [vmem:[%s254 + $0x70] sm:$0xff]
    %v270 = vld [vmem:[%s254 + $0x78] sm:$0xff]
    %v271 = vld [vmem:[%s254 + $0x80] sm:$0xff]
    %v272 = vld [vmem:[%s254 + $0x88] sm:$0xff]
    %v273 = vld [vmem:[%s254 + $0x90] sm:$0xff]
    %v274 = vld [vmem:[%s254 + $0x98] sm:$0xff]
    %v275 = vld [vmem:[%s254 + $0xa0] sm:$0xff]
    %v276 = vld [vmem:[%s254 + $0xa8] sm:$0xff]
    %v277 = vld [vmem:[%s254 + $0xb0] sm:$0xff]
    %v278 = vld [vmem:[%s254 + $0xb8] sm:$0xff]
    %v279 = vld [vmem:[%s254 + $0xc0] sm:$0xff]
    %v280 = vld [vmem:[%s254 + $0xc8] sm:$0xff]
    %v281 = vld [vmem:[%s254 + $0xd0] sm:$0xff]
    %v282 = vld [vmem:[%s254 + $0xd8] sm:$0xff]
    %v283 = vld [vmem:[%s254 + $0xe0] sm:$0xff]
    %v284 = vld [vmem:[%s254 + $0xe8] sm:$0xff]
    %v285 = vld [vmem:[%s254 + $0xf0] sm:$0xff]
    %v286 = vld [vmem:[%s254 + $0xf8] sm:$0xff]
    %v287 = vld [vmem:[%s254 + $0x100] sm:$0xff]
    %v288 = vld [vmem:[%s254 + $0x108] sm:$0xff]
    %v289 = vld [vmem:[%s254 + $0x110] sm:$0xff]
    %v290 = vld [vmem:[%s254 + $0x118] sm:$0xff]
    %v291 = vsel %vm183, %v246, 0
    %v293 = vsel %vm183, %v248, 0
    %v295 = vsel %vm183, %v251, 0
    %v297 = vsel %vm183, %v253, 0
    %299 = vmatprep.subr.mxu0 %v256
    %300 = vmatpush1.msra.mxu0 %v255
    %301 = vmatprep.subr.mxu0 %v265
    %302 = vmatpush1.msra.mxu0 %v264
    %303 = vmatprep.subr.mxu0 %v274
    %304 = vmatpush1.msra.mxu0 %v273
    %305 = vmatprep.subr.mxu0 %v283
    %306 = vmatpush1.msra.mxu0 %v282
    %307 = vmatprep.subr.mxu0 0.0
    %308 = vmatpush1.msra.mxu0 0.0
    %309 = vmatprep.subr.mxu0 0.0
    %310 = vmatpush1.msra.mxu0 0.0
    %311 = vmatprep.subr.mxu0 0.0
    %312 = vmatpush1.msra.mxu0 0.0
    %313 = vmatprep.subr.mxu0 0.0
    %314 = vmatpush1.msra.mxu0 0.0
    %315 = vmatprep.subr.mxu0 0.0
    %316 = vmatpush1.msra.mxu0 0.0
    %317 = vmatprep.subr.mxu0 0.0
    %318 = vmatpush1.msra.mxu0 0.0
    %319 = vmatprep.subr.mxu0 0.0
    %320 = vmatpush1.msra.mxu0 0.0
    %321 = vmatprep.subr.mxu0 0.0
    %322 = vmatpush1.msra.mxu0 0.0
    %323 = vmatprep.subr.mxu0 0.0
    %324 = vmatpush1.msra.mxu0 0.0
    %325 = vmatprep.subr.mxu0 0.0
    %326 = vmatpush1.msra.mxu0 0.0
    %327 = vmatprep.subr.mxu0 0.0
    %328 = vmatpush1.msra.mxu0 0.0
    %329 = vmatprep.subr.mxu0 0.0
    %330 = vmatpush1.msra.mxu0 0.0
    %331 = vmatprep.subr.mxu0 0.0
    %332 = vmatpush1.msra.mxu0 0.0
    %333 = vmatprep.subr.mxu0 0.0
    %334 = vmatpush1.msra.mxu0 0.0
    %335 = vmatprep.subr.mxu0 0.0
    %336 = vmatpush1.msra.mxu0 0.0
    %337 = vmatprep.subr.mxu0 0.0
    %338 = vmatpush1.msra.mxu0 0.0
    %339 = vmatprep.subr.mxu0 0.0
    %340 = vmatpush1.msra.mxu0 0.0
    %341 = vmatprep.subr.mxu0 0.0
    %342 = vmatpush1.msra.mxu0 0.0
    %343 = vmatprep.subr.mxu0 0.0
    %344 = vmatpush1.msra.mxu0 0.0
    %345 = vmatprep.subr.mxu0 0.0
    %346 = vmatpush1.msra.mxu0 0.0
    %347 = vmatprep.subr.mxu0 0.0
    %348 = vmatpush1.msra.mxu0 0.0
    %349 = vmatprep.subr.mxu0 0.0
    %350 = vmatpush1.msra.mxu0 0.0
    %351 = vmatprep.subr.mxu0 0.0
    %352 = vmatpush1.msra.mxu0 0.0
    %353 = vmatprep.subr.mxu0 0.0
    %354 = vmatpush1.msra.mxu0 0.0
    %355 = vmatprep.subr.mxu0 0.0
    %356 = vmatpush1.msra.mxu0 0.0
    %357 = vmatprep.subr.mxu0 0.0
    %358 = vmatpush1.msra.mxu0 0.0
    %359 = vmatprep.subr.mxu0 0.0
    %360 = vmatpush1.msra.mxu0 0.0
    %361 = vmatprep.subr.mxu0 0.0
    %362 = vmatpush1.msra.mxu0 0.0
    %363 = vmatprep.mubr.f32.mxu0 0.0
    %364 = vmatmul.mubr.f32.gmra.mrb[0].mxu0 %v291
    %v365 = vpop.f32.mrb[0].mxu0
    %v366 = vadd.f32 0.0, %v365
    %v367 = vpop.f32.mrb[0].mxu0
    %v368 = vadd.f32 0.0, %v367
    %369 = vmatprep.mubr.f32.mxu0 0.0
    %370 = vmatmul.mubr.f32.gmra.mrb[0].mxu0 %v293
    %v371 = vpop.f32.mrb[0].mxu0
    %v372 = vadd.f32 0.0, %v371
    %v373 = vpop.f32.mrb[0].mxu0
    %v374 = vadd.f32 0.0, %v373
    %375 = vmatprep.mubr.f32.mxu0 0.0
    %376 = vmatmul.mubr.f32.gmra.mrb[0].mxu0 %v295
    %v377 = vpop.f32.mrb[0].mxu0
    %v378 = vadd.f32 0.0, %v377
    %v379 = vpop.f32.mrb[0].mxu0
    %v380 = vadd.f32 0.0, %v379
    %381 = vmatprep.mubr.f32.mxu0 0.0
    %382 = vmatmul.mubr.f32.gmra.mrb[0].mxu0 %v297
    %v383 = vpop.f32.mrb[0].mxu0
    %v384 = vadd.f32 0.0, %v383
    %v385 = vpop.f32.mrb[0].mxu0
    %v386 = vadd.f32 0.0, %v385
    %387 = vdwg.mxu0
    %388 = vmatprep.subr.mxu0 %v258
    %389 = vmatpush1.msra.mxu0 %v257
    %390 = vmatprep.subr.mxu0 %v267
    %391 = vmatpush1.msra.mxu0 %v266
    %392 = vmatprep.subr.mxu0 %v276
    %393 = vmatpush1.msra.mxu0 %v275
    %394 = vmatprep.subr.mxu0 %v285
    %395 = vmatpush1.msra.mxu0 %v284
    %396 = vmatprep.subr.mxu0 0.0
    %397 = vmatpush1.msra.mxu0 0.0
    %398 = vmatprep.subr.mxu0 0.0
    %399 = vmatpush1.msra.mxu0 0.0
    %400 = vmatprep.subr.mxu0 0.0
    %401 = vmatpush1.msra.mxu0 0.0
    %402 = vmatprep.subr.mxu0 0.0
    %403 = vmatpush1.msra.mxu0 0.0
    %404 = vmatprep.subr.mxu0 0.0
    %405 = vmatpush1.msra.mxu0 0.0
    %406 = vmatprep.subr.mxu0 0.0
    %407 = vmatpush1.msra.mxu0 0.0
    %408 = vmatprep.subr.mxu0 0.0
    %409 = vmatpush1.msra.mxu0 0.0
    %410 = vmatprep.subr.mxu0 0.0
    %411 = vmatpush1.msra.mxu0 0.0
    %412 = vmatprep.subr.mxu0 0.0
    %413 = vmatpush1.msra.mxu0 0.0
    %414 = vmatprep.subr.mxu0 0.0
    %415 = vmatpush1.msra.mxu0 0.0
    %416 = vmatprep.subr.mxu0 0.0
    %417 = vmatpush1.msra.mxu0 0.0
    %418 = vmatprep.subr.mxu0 0.0
    %419 = vmatpush1.msra.mxu0 0.0
    %420 = vmatprep.subr.mxu0 0.0
    %421 = vmatpush1.msra.mxu0 0.0
    %422 = vmatprep.subr.mxu0 0.0
    %423 = vmatpush1.msra.mxu0 0.0
    %424 = vmatprep.subr.mxu0 0.0
    %425 = vmatpush1.msra.mxu0 0.0
    %426 = vmatprep.subr.mxu0 0.0
    %427 = vmatpush1.msra.mxu0 0.0
    %428 = vmatprep.subr.mxu0 0.0
    %429 = vmatpush1.msra.mxu0 0.0
    %430 = vmatprep.subr.mxu0 0.0
    %431 = vmatpush1.msra.mxu0 0.0
    %432 = vmatprep.subr.mxu0 0.0
    %433 = vmatpush1.msra.mxu0 0.0
    %434 = vmatprep.subr.mxu0 0.0
    %435 = vmatpush1.msra.mxu0 0.0
    %436 = vmatprep.subr.mxu0 0.0
    %437 = vmatpush1.msra.mxu0 0.0
    %438 = vmatprep.subr.mxu0 0.0
    %439 = vmatpush1.msra.mxu0 0.0
    %440 = vmatprep.subr.mxu0 0.0
    %441 = vmatpush1.msra.mxu0 0.0
    %442 = vmatprep.subr.mxu0 0.0
    %443 = vmatpush1.msra.mxu0 0.0
    %444 = vmatprep.subr.mxu0 0.0
    %445 = vmatpush1.msra.mxu0 0.0
    %446 = vmatprep.subr.mxu0 0.0
    %447 = vmatpush1.msra.mxu0 0.0
    %448 = vmatprep.subr.mxu0 0.0
    %449 = vmatpush1.msra.mxu0 0.0
    %450 = vmatprep.subr.mxu0 0.0
    %451 = vmatpush1.msra.mxu0 0.0
    %452 = vmatprep.mubr.f32.mxu0 0.0
    %453 = vmatmul.mubr.f32.gmra.mrb[0].mxu0 %v291
    %v454 = vpop.f32.mrb[0].mxu0
    %v455 = vadd.f32 0.0, %v454
    %v456 = vpop.f32.mrb[0].mxu0
    %v457 = vadd.f32 0.0, %v456
    %458 = vmatprep.mubr.f32.mxu0 0.0
    %459 = vmatmul.mubr.f32.gmra.mrb[0].mxu0 %v293
    %v460 = vpop.f32.mrb[0].mxu0
    %v461 = vadd.f32 0.0, %v460
    %v462 = vpop.f32.mrb[0].mxu0
    %v463 = vadd.f32 0.0, %v462
    %464 = vmatprep.mubr.f32.mxu0 0.0
    %465 = vmatmul.mubr.f32.gmra.mrb[0].mxu0 %v295
    %v466 = vpop.f32.mrb[0].mxu0
    %v467 = vadd.f32 0.0, %v466
    %v468 = vpop.f32.mrb[0].mxu0
    %v469 = vadd.f32 0.0, %v468
    %470 = vmatprep.mubr.f32.mxu0 0.0
    %471 = vmatmul.mubr.f32.gmra.mrb[0].mxu0 %v297
    %v472 = vpop.f32.mrb[0].mxu0
    %v473 = vadd.f32 0.0, %v472
    %v474 = vpop.f32.mrb[0].mxu0
    %v475 = vadd.f32 0.0, %v474
    %476 = vdwg.mxu0
    %477 = vmatprep.subr.mxu0 %v260
    %478 = vmatpush1.msra.mxu0 %v259
    %479 = vmatprep.subr.mxu0 %v269
    %480 = vmatpush1.msra.mxu0 %v268
    %481 = vmatprep.subr.mxu0 %v278
    %482 = vmatpush1.msra.mxu0 %v277
    %483 = vmatprep.subr.mxu0 %v287
    %484 = vmatpush1.msra.mxu0 %v286
    %485 = vmatprep.subr.mxu0 0.0
    %486 = vmatpush1.msra.mxu0 0.0
    %487 = vmatprep.subr.mxu0 0.0
    %488 = vmatpush1.msra.mxu0 0.0
    %489 = vmatprep.subr.mxu0 0.0
    %490 = vmatpush1.msra.mxu0 0.0
    %491 = vmatprep.subr.mxu0 0.0
    %492 = vmatpush1.msra.mxu0 0.0
    %493 = vmatprep.subr.mxu0 0.0
    %494 = vmatpush1.msra.mxu0 0.0
    %495 = vmatprep.subr.mxu0 0.0
    %496 = vmatpush1.msra.mxu0 0.0
    %497 = vmatprep.subr.mxu0 0.0
    %498 = vmatpush1.msra.mxu0 0.0
    %499 = vmatprep.subr.mxu0 0.0
    %500 = vmatpush1.msra.mxu0 0.0
    %501 = vmatprep.subr.mxu0 0.0
    %502 = vmatpush1.msra.mxu0 0.0
    %503 = vmatprep.subr.mxu0 0.0
    %504 = vmatpush1.msra.mxu0 0.0
    %505 = vmatprep.subr.mxu0 0.0
    %506 = vmatpush1.msra.mxu0 0.0
    %507 = vmatprep.subr.mxu0 0.0
    %508 = vmatpush1.msra.mxu0 0.0
    %509 = vmatprep.subr.mxu0 0.0
    %510 = vmatpush1.msra.mxu0 0.0
    %511 = vmatprep.subr.mxu0 0.0
    %512 = vmatpush1.msra.mxu0 0.0
    %513 = vmatprep.subr.mxu0 0.0
    %514 = vmatpush1.msra.mxu0 0.0
    %515 = vmatprep.subr.mxu0 0.0
    %516 = vmatpush1.msra.mxu0 0.0
    %517 = vmatprep.subr.mxu0 0.0
    %518 = vmatpush1.msra.mxu0 0.0
    %519 = vmatprep.subr.mxu0 0.0
    %520 = vmatpush1.msra.mxu0 0.0
    %521 = vmatprep.subr.mxu0 0.0
    %522 = vmatpush1.msra.mxu0 0.0
    %523 = vmatprep.subr.mxu0 0.0
    %524 = vmatpush1.msra.mxu0 0.0
    %525 = vmatprep.subr.mxu0 0.0
    %526 = vmatpush1.msra.mxu0 0.0
    %527 = vmatprep.subr.mxu0 0.0
    %528 = vmatpush1.msra.mxu0 0.0
    %529 = vmatprep.subr.mxu0 0.0
    %530 = vmatpush1.msra.mxu0 0.0
    %531 = vmatprep.subr.mxu0 0.0
    %532 = vmatpush1.msra.mxu0 0.0
    %533 = vmatprep.subr.mxu0 0.0
    %534 = vmatpush1.msra.mxu0 0.0
    %535 = vmatprep.subr.mxu0 0.0
    %536 = vmatpush1.msra.mxu0 0.0
    %537 = vmatprep.subr.mxu0 0.0
    %538 = vmatpush1.msra.mxu0 0.0
    %539 = vmatprep.subr.mxu0 0.0
    %540 = vmatpush1.msra.mxu0 0.0
    %541 = vmatprep.mubr.f32.mxu0 0.0
    %542 = vmatmul.mubr.f32.gmra.mrb[0].mxu0 %v291
    %v543 = vpop.f32.mrb[0].mxu0
    %v544 = vadd.f32 0.0, %v543
    %v545 = vpop.f32.mrb[0].mxu0
    %v546 = vadd.f32 0.0, %v545
    %547 = vmatprep.mubr.f32.mxu0 0.0
    %548 = vmatmul.mubr.f32.gmra.mrb[0].mxu0 %v293
    %v549 = vpop.f32.mrb[0].mxu0
    %v550 = vadd.f32 0.0, %v549
    %v551 = vpop.f32.mrb[0].mxu0
    %v552 = vadd.f32 0.0, %v551
    %553 = vmatprep.mubr.f32.mxu0 0.0
    %554 = vmatmul.mubr.f32.gmra.mrb[0].mxu0 %v295
    %v555 = vpop.f32.mrb[0].mxu0
    %v556 = vadd.f32 0.0, %v555
    %v557 = vpop.f32.mrb[0].mxu0
    %v558 = vadd.f32 0.0, %v557
    %559 = vmatprep.mubr.f32.mxu0 0.0
    %560 = vmatmul.mubr.f32.gmra.mrb[0].mxu0 %v297
    %v561 = vpop.f32.mrb[0].mxu0
    %v562 = vadd.f32 0.0, %v561
    %v563 = vpop.f32.mrb[0].mxu0
    %v564 = vadd.f32 0.0, %v563
    %565 = vdwg.mxu0
    %566 = vmatprep.subr.mxu0 %v262
    %567 = vmatpush1.msra.mxu0 %v261
    %568 = vmatprep.subr.mxu0 %v271
    %569 = vmatpush1.msra.mxu0 %v270
    %570 = vmatprep.subr.mxu0 %v280
    %571 = vmatpush1.msra.mxu0 %v279
    %572 = vmatprep.subr.mxu0 %v289
    %573 = vmatpush1.msra.mxu0 %v288
    %574 = vmatprep.subr.mxu0 0.0
    %575 = vmatpush1.msra.mxu0 0.0
    %576 = vmatprep.subr.mxu0 0.0
    %577 = vmatpush1.msra.mxu0 0.0
    %578 = vmatprep.subr.mxu0 0.0
    %579 = vmatpush1.msra.mxu0 0.0
    %580 = vmatprep.subr.mxu0 0.0
    %581 = vmatpush1.msra.mxu0 0.0
    %582 = vmatprep.subr.mxu0 0.0
    %583 = vmatpush1.msra.mxu0 0.0
    %584 = vmatprep.subr.mxu0 0.0
    %585 = vmatpush1.msra.mxu0 0.0
    %586 = vmatprep.subr.mxu0 0.0
    %587 = vmatpush1.msra.mxu0 0.0
    %588 = vmatprep.subr.mxu0 0.0
    %589 = vmatpush1.msra.mxu0 0.0
    %590 = vmatprep.subr.mxu0 0.0
    %591 = vmatpush1.msra.mxu0 0.0
    %592 = vmatprep.subr.mxu0 0.0
    %593 = vmatpush1.msra.mxu0 0.0
    %594 = vmatprep.subr.mxu0 0.0
    %595 = vmatpush1.msra.mxu0 0.0
    %596 = vmatprep.subr.mxu0 0.0
    %597 = vmatpush1.msra.mxu0 0.0
    %598 = vmatprep.subr.mxu0 0.0
    %599 = vmatpush1.msra.mxu0 0.0
    %600 = vmatprep.subr.mxu0 0.0
    %601 = vmatpush1.msra.mxu0 0.0
    %602 = vmatprep.subr.mxu0 0.0
    %603 = vmatpush1.msra.mxu0 0.0
    %604 = vmatprep.subr.mxu0 0.0
    %605 = vmatpush1.msra.mxu0 0.0
    %606 = vmatprep.subr.mxu0 0.0
    %607 = vmatpush1.msra.mxu0 0.0
    %608 = vmatprep.subr.mxu0 0.0
    %609 = vmatpush1.msra.mxu0 0.0
    %610 = vmatprep.subr.mxu0 0.0
    %611 = vmatpush1.msra.mxu0 0.0
    %612 = vmatprep.subr.mxu0 0.0
    %613 = vmatpush1.msra.mxu0 0.0
    %614 = vmatprep.subr.mxu0 0.0
    %615 = vmatpush1.msra.mxu0 0.0
    %616 = vmatprep.subr.mxu0 0.0
    %617 = vmatpush1.msra.mxu0 0.0
    %618 = vmatprep.subr.mxu0 0.0
    %619 = vmatpush1.msra.mxu0 0.0
    %620 = vmatprep.subr.mxu0 0.0
    %621 = vmatpush1.msra.mxu0 0.0
    %622 = vmatprep.subr.mxu0 0.0
    %623 = vmatpush1.msra.mxu0 0.0
    %624 = vmatprep.subr.mxu0 0.0
    %625 = vmatpush1.msra.mxu0 0.0
    %626 = vmatprep.subr.mxu0 0.0
    %627 = vmatpush1.msra.mxu0 0.0
    %628 = vmatprep.subr.mxu0 0.0
    %629 = vmatpush1.msra.mxu0 0.0
    %630 = vmatprep.mubr.f32.mxu0 0.0
    %631 = vmatmul.mubr.f32.gmra.mrb[0].mxu0 %v291
    %v632 = vpop.f32.mrb[0].mxu0
    %v633 = vadd.f32 0.0, %v632
    %v634 = vpop.f32.mrb[0].mxu0
    %v635 = vadd.f32 0.0, %v634
    %636 = vmatprep.mubr.f32.mxu0 0.0
    %637 = vmatmul.mubr.f32.gmra.mrb[0].mxu0 %v293
    %v638 = vpop.f32.mrb[0].mxu0
    %v639 = vadd.f32 0.0, %v638
    %v640 = vpop.f32.mrb[0].mxu0
    %v641 = vadd.f32 0.0, %v640
    %642 = vmatprep.mubr.f32.mxu0 0.0
    %643 = vmatmul.mubr.f32.gmra.mrb[0].mxu0 %v295
    %v644 = vpop.f32.mrb[0].mxu0
    %v645 = vadd.f32 0.0, %v644
    %v646 = vpop.f32.mrb[0].mxu0
    %v647 = vadd.f32 0.0, %v646
    %648 = vmatprep.mubr.f32.mxu0 0.0
    %649 = vmatmul.mubr.f32.gmra.mrb[0].mxu0 %v297
    %v650 = vpop.f32.mrb[0].mxu0
    %v651 = vadd.f32 0.0, %v650
    %v652 = vpop.f32.mrb[0].mxu0
    %v653 = vadd.f32 0.0, %v652
    %654 = vdwg.mxu0
    %655 = vmatprep.subr.mxu0 0.0
    %656 = vmatpush1.msra.mxu0 %v263
    %657 = vmatprep.subr.mxu0 0.0
    %658 = vmatpush1.msra.mxu0 %v272
    %659 = vmatprep.subr.mxu0 0.0
    %660 = vmatpush1.msra.mxu0 %v281
    %661 = vmatprep.subr.mxu0 0.0
    %662 = vmatpush1.msra.mxu0 %v290
    %663 = vmatprep.subr.mxu0 0.0
    %664 = vmatpush1.msra.mxu0 0.0
    %665 = vmatprep.subr.mxu0 0.0
    %666 = vmatpush1.msra.mxu0 0.0
    %667 = vmatprep.subr.mxu0 0.0
    %668 = vmatpush1.msra.mxu0 0.0
    %669 = vmatprep.subr.mxu0 0.0
    %670 = vmatpush1.msra.mxu0 0.0
    %671 = vmatprep.subr.mxu0 0.0
    %672 = vmatpush1.msra.mxu0 0.0
    %673 = vmatprep.subr.mxu0 0.0
    %674 = vmatpush1.msra.mxu0 0.0
    %675 = vmatprep.subr.mxu0 0.0
    %676 = vmatpush1.msra.mxu0 0.0
    %677 = vmatprep.subr.mxu0 0.0
    %678 = vmatpush1.msra.mxu0 0.0
    %679 = vmatprep.subr.mxu0 0.0
    %680 = vmatpush1.msra.mxu0 0.0
    %681 = vmatprep.subr.mxu0 0.0
    %682 = vmatpush1.msra.mxu0 0.0
    %683 = vmatprep.subr.mxu0 0.0
    %684 = vmatpush1.msra.mxu0 0.0
    %685 = vmatprep.subr.mxu0 0.0
    %686 = vmatpush1.msra.mxu0 0.0
    %687 = vmatprep.subr.mxu0 0.0
    %688 = vmatpush1.msra.mxu0 0.0
    %689 = vmatprep.subr.mxu0 0.0
    %690 = vmatpush1.msra.mxu0 0.0
    %691 = vmatprep.subr.mxu0 0.0
    %692 = vmatpush1.msra.mxu0 0.0
    %693 = vmatprep.subr.mxu0 0.0
    %694 = vmatpush1.msra.mxu0 0.0
    %695 = vmatprep.subr.mxu0 0.0
    %696 = vmatpush1.msra.mxu0 0.0
    %697 = vmatprep.subr.mxu0 0.0
    %698 = vmatpush1.msra.mxu0 0.0
    %699 = vmatprep.subr.mxu0 0.0
    %700 = vmatpush1.msra.mxu0 0.0
    %701 = vmatprep.subr.mxu0 0.0
    %702 = vmatpush1.msra.mxu0 0.0
    %703 = vmatprep.subr.mxu0 0.0
    %704 = vmatpush1.msra.mxu0 0.0
    %705 = vmatprep.subr.mxu0 0.0
    %706 = vmatpush1.msra.mxu0 0.0
    %707 = vmatprep.subr.mxu0 0.0
    %708 = vmatpush1.msra.mxu0 0.0
    %709 = vmatprep.subr.mxu0 0.0
    %710 = vmatpush1.msra.mxu0 0.0
    %711 = vmatprep.subr.mxu0 0.0
    %712 = vmatpush1.msra.mxu0 0.0
    %713 = vmatprep.subr.mxu0 0.0
    %714 = vmatpush1.msra.mxu0 0.0
    %715 = vmatprep.subr.mxu0 0.0
    %716 = vmatpush1.msra.mxu0 0.0
    %717 = vmatprep.subr.mxu0 0.0
    %718 = vmatpush1.msra.mxu0 0.0
    %719 = vmatprep.mubr.f32.mxu0 0.0
    %720 = vmatmul.mubr.f32.gmra.mrb[0].mxu0 %v291
    %v721 = vpop.f32.mrb[0].mxu0
    %v722 = vadd.f32 0.0, %v721
    %v723 = vpop.f32.mrb[0].mxu0
    %724 = vmatprep.mubr.f32.mxu0 0.0
    %725 = vmatmul.mubr.f32.gmra.mrb[0].mxu0 %v293
    %v726 = vpop.f32.mrb[0].mxu0
    %v727 = vadd.f32 0.0, %v726
    %v728 = vpop.f32.mrb[0].mxu0
    %729 = vmatprep.mubr.f32.mxu0 0.0
    %730 = vmatmul.mubr.f32.gmra.mrb[0].mxu0 %v295
    %v731 = vpop.f32.mrb[0].mxu0
    %v732 = vadd.f32 0.0, %v731
    %v733 = vpop.f32.mrb[0].mxu0
    %734 = vmatprep.mubr.f32.mxu0 0.0
    %735 = vmatmul.mubr.f32.gmra.mrb[0].mxu0 %v297
    %v736 = vpop.f32.mrb[0].mxu0
    %v737 = vadd.f32 0.0, %v736
    %v738 = vpop.f32.mrb[0].mxu0
    %739 = vdwg.mxu0
    %v740 = vsel %vm183, %v195, 0
    %v742 = vsel %vm183, %v196, 0
    %v744 = vsel %vm183, %v198, 0
    %v746 = vsel %vm183, %v199, 0
    %748 = vmatprep.subr.mxu0 %v202
    %749 = vmatpush1.msra.mxu0 %v201
    %750 = vmatprep.subr.mxu0 %v211
    %751 = vmatpush1.msra.mxu0 %v210
    %752 = vmatprep.subr.mxu0 %v220
    %753 = vmatpush1.msra.mxu0 %v219
    %754 = vmatprep.subr.mxu0 %v229
    %755 = vmatpush1.msra.mxu0 %v228
    %756 = vmatprep.subr.mxu0 0.0
    %757 = vmatpush1.msra.mxu0 0.0
    %758 = vmatprep.subr.mxu0 0.0
    %759 = vmatpush1.msra.mxu0 0.0
    %760 = vmatprep.subr.mxu0 0.0
    %761 = vmatpush1.msra.mxu0 0.0
    %762 = vmatprep.subr.mxu0 0.0
    %763 = vmatpush1.msra.mxu0 0.0
    %764 = vmatprep.subr.mxu0 0.0
    %765 = vmatpush1.msra.mxu0 0.0
    %766 = vmatprep.subr.mxu0 0.0
    %767 = vmatpush1.msra.mxu0 0.0
    %768 = vmatprep.subr.mxu0 0.0
    %769 = vmatpush1.msra.mxu0 0.0
    %770 = vmatprep.subr.mxu0 0.0
    %771 = vmatpush1.msra.mxu0 0.0
    %772 = vmatprep.subr.mxu0 0.0
    %773 = vmatpush1.msra.mxu0 0.0
    %774 = vmatprep.subr.mxu0 0.0
    %775 = vmatpush1.msra.mxu0 0.0
    %776 = vmatprep.subr.mxu0 0.0
    %777 = vmatpush1.msra.mxu0 0.0
    %778 = vmatprep.subr.mxu0 0.0
    %779 = vmatpush1.msra.mxu0 0.0
    %780 = vmatprep.subr.mxu0 0.0
    %781 = vmatpush1.msra.mxu0 0.0
    %782 = vmatprep.subr.mxu0 0.0
    %783 = vmatpush1.msra.mxu0 0.0
    %784 = vmatprep.subr.mxu0 0.0
    %785 = vmatpush1.msra.mxu0 0.0
    %786 = vmatprep.subr.mxu0 0.0
    %787 = vmatpush1.msra.mxu0 0.0
    %788 = vmatprep.subr.mxu0 0.0
    %789 = vmatpush1.msra.mxu0 0.0
    %790 = vmatprep.subr.mxu0 0.0
    %791 = vmatpush1.msra.mxu0 0.0
    %792 = vmatprep.subr.mxu0 0.0
    %793 = vmatpush1.msra.mxu0 0.0
    %794 = vmatprep.subr.mxu0 0.0
    %795 = vmatpush1.msra.mxu0 0.0
    %796 = vmatprep.subr.mxu0 0.0
    %797 = vmatpush1.msra.mxu0 0.0
    %798 = vmatprep.subr.mxu0 0.0
    %799 = vmatpush1.msra.mxu0 0.0
    %800 = vmatprep.subr.mxu0 0.0
    %801 = vmatpush1.msra.mxu0 0.0
    %802 = vmatprep.subr.mxu0 0.0
    %803 = vmatpush1.msra.mxu0 0.0
    %804 = vmatprep.subr.mxu0 0.0
    %805 = vmatpush1.msra.mxu0 0.0
    %806 = vmatprep.subr.mxu0 0.0
    %807 = vmatpush1.msra.mxu0 0.0
    %808 = vmatprep.subr.mxu0 0.0
    %809 = vmatpush1.msra.mxu0 0.0
    %810 = vmatprep.subr.mxu0 0.0
    %811 = vmatpush1.msra.mxu0 0.0
    %812 = vmatprep.mubr.f32.mxu0 0.0
    %813 = vmatmul.mubr.f32.gmra.mrb[0].mxu0 %v740
    %v814 = vpop.f32.mrb[0].mxu0
    %v815 = vadd.f32 %v366, %v814
    %v816 = vpop.f32.mrb[0].mxu0
    %v817 = vadd.f32 %v368, %v816
    %818 = vmatprep.mubr.f32.mxu0 0.0
    %819 = vmatmul.mubr.f32.gmra.mrb[0].mxu0 %v742
    %v820 = vpop.f32.mrb[0].mxu0
    %v821 = vadd.f32 %v372, %v820
    %v822 = vpop.f32.mrb[0].mxu0
    %v823 = vadd.f32 %v374, %v822
    %824 = vmatprep.mubr.f32.mxu0 0.0
    %825 = vmatmul.mubr.f32.gmra.mrb[0].mxu0 %v744
    %v826 = vpop.f32.mrb[0].mxu0
    %v827 = vadd.f32 %v378, %v826
    %v828 = vpop.f32.mrb[0].mxu0
    %v829 = vadd.f32 %v380, %v828
    %830 = vmatprep.mubr.f32.mxu0 0.0
    %831 = vmatmul.mubr.f32.gmra.mrb[0].mxu0 %v746
    %v832 = vpop.f32.mrb[0].mxu0
    %v833 = vadd.f32 %v384, %v832
    %v834 = vpop.f32.mrb[0].mxu0
    %v835 = vadd.f32 %v386, %v834
    %836 = vdwg.mxu0
    %837 = vmatprep.subr.mxu0 %v204
    %838 = vmatpush1.msra.mxu0 %v203
    %839 = vmatprep.subr.mxu0 %v213
    %840 = vmatpush1.msra.mxu0 %v212
    %841 = vmatprep.subr.mxu0 %v222
    %842 = vmatpush1.msra.mxu0 %v221
    %843 = vmatprep.subr.mxu0 %v231
    %844 = vmatpush1.msra.mxu0 %v230
    %845 = vmatprep.subr.mxu0 0.0
    %846 = vmatpush1.msra.mxu0 0.0
    %847 = vmatprep.subr.mxu0 0.0
    %848 = vmatpush1.msra.mxu0 0.0
    %849 = vmatprep.subr.mxu0 0.0
    %850 = vmatpush1.msra.mxu0 0.0
    %851 = vmatprep.subr.mxu0 0.0
    %852 = vmatpush1.msra.mxu0 0.0
    %853 = vmatprep.subr.mxu0 0.0
    %854 = vmatpush1.msra.mxu0 0.0
    %855 = vmatprep.subr.mxu0 0.0
    %856 = vmatpush1.msra.mxu0 0.0
    %857 = vmatprep.subr.mxu0 0.0
    %858 = vmatpush1.msra.mxu0 0.0
    %859 = vmatprep.subr.mxu0 0.0
    %860 = vmatpush1.msra.mxu0 0.0
    %861 = vmatprep.subr.mxu0 0.0
    %862 = vmatpush1.msra.mxu0 0.0
    %863 = vmatprep.subr.mxu0 0.0
    %864 = vmatpush1.msra.mxu0 0.0
    %865 = vmatprep.subr.mxu0 0.0
    %866 = vmatpush1.msra.mxu0 0.0
    %867 = vmatprep.subr.mxu0 0.0
    %868 = vmatpush1.msra.mxu0 0.0
    %869 = vmatprep.subr.mxu0 0.0
    %870 = vmatpush1.msra.mxu0 0.0
    %871 = vmatprep.subr.mxu0 0.0
    %872 = vmatpush1.msra.mxu0 0.0
    %873 = vmatprep.subr.mxu0 0.0
    %874 = vmatpush1.msra.mxu0 0.0
    %875 = vmatprep.subr.mxu0 0.0
    %876 = vmatpush1.msra.mxu0 0.0
    %877 = vmatprep.subr.mxu0 0.0
    %878 = vmatpush1.msra.mxu0 0.0
    %879 = vmatprep.subr.mxu0 0.0
    %880 = vmatpush1.msra.mxu0 0.0
    %881 = vmatprep.subr.mxu0 0.0
    %882 = vmatpush1.msra.mxu0 0.0
    %883 = vmatprep.subr.mxu0 0.0
    %884 = vmatpush1.msra.mxu0 0.0
    %885 = vmatprep.subr.mxu0 0.0
    %886 = vmatpush1.msra.mxu0 0.0
    %887 = vmatprep.subr.mxu0 0.0
    %888 = vmatpush1.msra.mxu0 0.0
    %889 = vmatprep.subr.mxu0 0.0
    %890 = vmatpush1.msra.mxu0 0.0
    %891 = vmatprep.subr.mxu0 0.0
    %892 = vmatpush1.msra.mxu0 0.0
    %893 = vmatprep.subr.mxu0 0.0
    %894 = vmatpush1.msra.mxu0 0.0
    %895 = vmatprep.subr.mxu0 0.0
    %896 = vmatpush1.msra.mxu0 0.0
    %897 = vmatprep.subr.mxu0 0.0
    %898 = vmatpush1.msra.mxu0 0.0
    %899 = vmatprep.subr.mxu0 0.0
    %900 = vmatpush1.msra.mxu0 0.0
    %901 = vmatprep.mubr.f32.mxu0 0.0
    %902 = vmatmul.mubr.f32.gmra.mrb[0].mxu0 %v740
    %v903 = vpop.f32.mrb[0].mxu0
    %v904 = vadd.f32 %v455, %v903
    %v905 = vpop.f32.mrb[0].mxu0
    %v906 = vadd.f32 %v457, %v905
    %907 = vmatprep.mubr.f32.mxu0 0.0
    %908 = vmatmul.mubr.f32.gmra.mrb[0].mxu0 %v742
    %v909 = vpop.f32.mrb[0].mxu0
    %v910 = vadd.f32 %v461, %v909
    %v911 = vpop.f32.mrb[0].mxu0
    %v912 = vadd.f32 %v463, %v911
    %913 = vmatprep.mubr.f32.mxu0 0.0
    %914 = vmatmul.mubr.f32.gmra.mrb[0].mxu0 %v744
    %v915 = vpop.f32.mrb[0].mxu0
    %v916 = vadd.f32 %v467, %v915
    %v917 = vpop.f32.mrb[0].mxu0
    %v918 = vadd.f32 %v469, %v917
    %919 = vmatprep.mubr.f32.mxu0 0.0
    %920 = vmatmul.mubr.f32.gmra.mrb[0].mxu0 %v746
    %v921 = vpop.f32.mrb[0].mxu0
    %v922 = vadd.f32 %v473, %v921
    %v923 = vpop.f32.mrb[0].mxu0
    %v924 = vadd.f32 %v475, %v923
    %925 = vdwg.mxu0
    %926 = vmatprep.subr.mxu0 %v206
    %927 = vmatpush1.msra.mxu0 %v205
    %928 = vmatprep.subr.mxu0 %v215
    %929 = vmatpush1.msra.mxu0 %v214
    %930 = vmatprep.subr.mxu0 %v224
    %931 = vmatpush1.msra.mxu0 %v223
    %932 = vmatprep.subr.mxu0 %v233
    %933 = vmatpush1.msra.mxu0 %v232
    %934 = vmatprep.subr.mxu0 0.0
    %935 = vmatpush1.msra.mxu0 0.0
    %936 = vmatprep.subr.mxu0 0.0
    %937 = vmatpush1.msra.mxu0 0.0
    %938 = vmatprep.subr.mxu0 0.0
    %939 = vmatpush1.msra.mxu0 0.0
    %940 = vmatprep.subr.mxu0 0.0
    %941 = vmatpush1.msra.mxu0 0.0
    %942 = vmatprep.subr.mxu0 0.0
    %943 = vmatpush1.msra.mxu0 0.0
    %944 = vmatprep.subr.mxu0 0.0
    %945 = vmatpush1.msra.mxu0 0.0
    %946 = vmatprep.subr.mxu0 0.0
    %947 = vmatpush1.msra.mxu0 0.0
    %948 = vmatprep.subr.mxu0 0.0
    %949 = vmatpush1.msra.mxu0 0.0
    %950 = vmatprep.subr.mxu0 0.0
    %951 = vmatpush1.msra.mxu0 0.0
    %952 = vmatprep.subr.mxu0 0.0
    %953 = vmatpush1.msra.mxu0 0.0
    %954 = vmatprep.subr.mxu0 0.0
    %955 = vmatpush1.msra.mxu0 0.0
    %956 = vmatprep.subr.mxu0 0.0
    %957 = vmatpush1.msra.mxu0 0.0
    %958 = vmatprep.subr.mxu0 0.0
    %959 = vmatpush1.msra.mxu0 0.0
    %960 = vmatprep.subr.mxu0 0.0
    %961 = vmatpush1.msra.mxu0 0.0
    %962 = vmatprep.subr.mxu0 0.0
    %963 = vmatpush1.msra.mxu0 0.0
    %964 = vmatprep.subr.mxu0 0.0
    %965 = vmatpush1.msra.mxu0 0.0
    %966 = vmatprep.subr.mxu0 0.0
    %967 = vmatpush1.msra.mxu0 0.0
    %968 = vmatprep.subr.mxu0 0.0
    %969 = vmatpush1.msra.mxu0 0.0
    %970 = vmatprep.subr.mxu0 0.0
    %971 = vmatpush1.msra.mxu0 0.0
    %972 = vmatprep.subr.mxu0 0.0
    %973 = vmatpush1.msra.mxu0 0.0
    %974 = vmatprep.subr.mxu0 0.0
    %975 = vmatpush1.msra.mxu0 0.0
    %976 = vmatprep.subr.mxu0 0.0
    %977 = vmatpush1.msra.mxu0 0.0
    %978 = vmatprep.subr.mxu0 0.0
    %979 = vmatpush1.msra.mxu0 0.0
    %980 = vmatprep.subr.mxu0 0.0
    %981 = vmatpush1.msra.mxu0 0.0
    %982 = vmatprep.subr.mxu0 0.0
    %983 = vmatpush1.msra.mxu0 0.0
    %984 = vmatprep.subr.mxu0 0.0
    %985 = vmatpush1.msra.mxu0 0.0
    %986 = vmatprep.subr.mxu0 0.0
    %987 = vmatpush1.msra.mxu0 0.0
    %988 = vmatprep.subr.mxu0 0.0
    %989 = vmatpush1.msra.mxu0 0.0
    %990 = vmatprep.mubr.f32.mxu0 0.0
    %991 = vmatmul.mubr.f32.gmra.mrb[0].mxu0 %v740
    %v992 = vpop.f32.mrb[0].mxu0
    %v993 = vadd.f32 %v544, %v992
    %v994 = vpop.f32.mrb[0].mxu0
    %v995 = vadd.f32 %v546, %v994
    %996 = vmatprep.mubr.f32.mxu0 0.0
    %997 = vmatmul.mubr.f32.gmra.mrb[0].mxu0 %v742
    %v998 = vpop.f32.mrb[0].mxu0
    %v999 = vadd.f32 %v550, %v998
    %v1000 = vpop.f32.mrb[0].mxu0
    %v1001 = vadd.f32 %v552, %v1000
    %1002 = vmatprep.mubr.f32.mxu0 0.0
    %1003 = vmatmul.mubr.f32.gmra.mrb[0].mxu0 %v744
    %v1004 = vpop.f32.mrb[0].mxu0
    %v1005 = vadd.f32 %v556, %v1004
    %v1006 = vpop.f32.mrb[0].mxu0
    %v1007 = vadd.f32 %v558, %v1006
    %1008 = vmatprep.mubr.f32.mxu0 0.0
    %1009 = vmatmul.mubr.f32.gmra.mrb[0].mxu0 %v746
    %v1010 = vpop.f32.mrb[0].mxu0
    %v1011 = vadd.f32 %v562, %v1010
    %v1012 = vpop.f32.mrb[0].mxu0
    %v1013 = vadd.f32 %v564, %v1012
    %1014 = vdwg.mxu0
    %1015 = vmatprep.subr.mxu0 %v208
    %1016 = vmatpush1.msra.mxu0 %v207
    %1017 = vmatprep.subr.mxu0 %v217
    %1018 = vmatpush1.msra.mxu0 %v216
    %1019 = vmatprep.subr.mxu0 %v226
    %1020 = vmatpush1.msra.mxu0 %v225
    %1021 = vmatprep.subr.mxu0 %v235
    %1022 = vmatpush1.msra.mxu0 %v234
    %1023 = vmatprep.subr.mxu0 0.0
    %1024 = vmatpush1.msra.mxu0 0.0
    %1025 = vmatprep.subr.mxu0 0.0
    %1026 = vmatpush1.msra.mxu0 0.0
    %1027 = vmatprep.subr.mxu0 0.0
    %1028 = vmatpush1.msra.mxu0 0.0
    %1029 = vmatprep.subr.mxu0 0.0
    %1030 = vmatpush1.msra.mxu0 0.0
    %1031 = vmatprep.subr.mxu0 0.0
    %1032 = vmatpush1.msra.mxu0 0.0
    %1033 = vmatprep.subr.mxu0 0.0
    %1034 = vmatpush1.msra.mxu0 0.0
    %1035 = vmatprep.subr.mxu0 0.0
    %1036 = vmatpush1.msra.mxu0 0.0
    %1037 = vmatprep.subr.mxu0 0.0
    %1038 = vmatpush1.msra.mxu0 0.0
    %1039 = vmatprep.subr.mxu0 0.0
    %1040 = vmatpush1.msra.mxu0 0.0
    %1041 = vmatprep.subr.mxu0 0.0
    %1042 = vmatpush1.msra.mxu0 0.0
    %1043 = vmatprep.subr.mxu0 0.0
    %1044 = vmatpush1.msra.mxu0 0.0
    %1045 = vmatprep.subr.mxu0 0.0
    %1046 = vmatpush1.msra.mxu0 0.0
    %1047 = vmatprep.subr.mxu0 0.0
    %1048 = vmatpush1.msra.mxu0 0.0
    %1049 = vmatprep.subr.mxu0 0.0
    %1050 = vmatpush1.msra.mxu0 0.0
    %1051 = vmatprep.subr.mxu0 0.0
    %1052 = vmatpush1.msra.mxu0 0.0
    %1053 = vmatprep.subr.mxu0 0.0
    %1054 = vmatpush1.msra.mxu0 0.0
    %1055 = vmatprep.subr.mxu0 0.0
    %1056 = vmatpush1.msra.mxu0 0.0
    %1057 = vmatprep.subr.mxu0 0.0
    %1058 = vmatpush1.msra.mxu0 0.0
    %1059 = vmatprep.subr.mxu0 0.0
    %1060 = vmatpush1.msra.mxu0 0.0
    %1061 = vmatprep.subr.mxu0 0.0
    %1062 = vmatpush1.msra.mxu0 0.0
    %1063 = vmatprep.subr.mxu0 0.0
    %1064 = vmatpush1.msra.mxu0 0.0
    %1065 = vmatprep.subr.mxu0 0.0
    %1066 = vmatpush1.msra.mxu0 0.0
    %1067 = vmatprep.subr.mxu0 0.0
    %1068 = vmatpush1.msra.mxu0 0.0
    %1069 = vmatprep.subr.mxu0 0.0
    %1070 = vmatpush1.msra.mxu0 0.0
    %1071 = vmatprep.subr.mxu0 0.0
    %1072 = vmatpush1.msra.mxu0 0.0
    %1073 = vmatprep.subr.mxu0 0.0
    %1074 = vmatpush1.msra.mxu0 0.0
    %1075 = vmatprep.subr.mxu0 0.0
    %1076 = vmatpush1.msra.mxu0 0.0
    %1077 = vmatprep.subr.mxu0 0.0
    %1078 = vmatpush1.msra.mxu0 0.0
    %1079 = vmatprep.mubr.f32.mxu0 0.0
    %1080 = vmatmul.mubr.f32.gmra.mrb[0].mxu0 %v740
    %v1081 = vpop.f32.mrb[0].mxu0
    %v1082 = vadd.f32 %v633, %v1081
    %v1083 = vpop.f32.mrb[0].mxu0
    %v1084 = vadd.f32 %v635, %v1083
    %1085 = vmatprep.mubr.f32.mxu0 0.0
    %1086 = vmatmul.mubr.f32.gmra.mrb[0].mxu0 %v742
    %v1087 = vpop.f32.mrb[0].mxu0
    %v1088 = vadd.f32 %v639, %v1087
    %v1089 = vpop.f32.mrb[0].mxu0
    %v1090 = vadd.f32 %v641, %v1089
    %1091 = vmatprep.mubr.f32.mxu0 0.0
    %1092 = vmatmul.mubr.f32.gmra.mrb[0].mxu0 %v744
    %v1093 = vpop.f32.mrb[0].mxu0
    %v1094 = vadd.f32 %v645, %v1093
    %v1095 = vpop.f32.mrb[0].mxu0
    %v1096 = vadd.f32 %v647, %v1095
    %1097 = vmatprep.mubr.f32.mxu0 0.0
    %1098 = vmatmul.mubr.f32.gmra.mrb[0].mxu0 %v746
    %v1099 = vpop.f32.mrb[0].mxu0
    %v1100 = vadd.f32 %v651, %v1099
    %v1101 = vpop.f32.mrb[0].mxu0
    %v1102 = vadd.f32 %v653, %v1101
    %1103 = vdwg.mxu0
    %1104 = vmatprep.subr.mxu0 0.0
    %1105 = vmatpush1.msra.mxu0 %v209
    %1106 = vmatprep.subr.mxu0 0.0
    %1107 = vmatpush1.msra.mxu0 %v218
    %1108 = vmatprep.subr.mxu0 0.0
    %1109 = vmatpush1.msra.mxu0 %v227
    %1110 = vmatprep.subr.mxu0 0.0
    %1111 = vmatpush1.msra.mxu0 %v236
    %1112 = vmatprep.subr.mxu0 0.0
    %1113 = vmatpush1.msra.mxu0 0.0
    %1114 = vmatprep.subr.mxu0 0.0
    %1115 = vmatpush1.msra.mxu0 0.0
    %1116 = vmatprep.subr.mxu0 0.0
    %1117 = vmatpush1.msra.mxu0 0.0
    %1118 = vmatprep.subr.mxu0 0.0
    %1119 = vmatpush1.msra.mxu0 0.0
    %1120 = vmatprep.subr.mxu0 0.0
    %1121 = vmatpush1.msra.mxu0 0.0
    %1122 = vmatprep.subr.mxu0 0.0
    %1123 = vmatpush1.msra.mxu0 0.0
    %1124 = vmatprep.subr.mxu0 0.0
    %1125 = vmatpush1.msra.mxu0 0.0
    %1126 = vmatprep.subr.mxu0 0.0
    %1127 = vmatpush1.msra.mxu0 0.0
    %1128 = vmatprep.subr.mxu0 0.0
    %1129 = vmatpush1.msra.mxu0 0.0
    %1130 = vmatprep.subr.mxu0 0.0
    %1131 = vmatpush1.msra.mxu0 0.0
    %1132 = vmatprep.subr.mxu0 0.0
    %1133 = vmatpush1.msra.mxu0 0.0
    %1134 = vmatprep.subr.mxu0 0.0
    %1135 = vmatpush1.msra.mxu0 0.0
    %1136 = vmatprep.subr.mxu0 0.0
    %1137 = vmatpush1.msra.mxu0 0.0
    %1138 = vmatprep.subr.mxu0 0.0
    %1139 = vmatpush1.msra.mxu0 0.0
    %1140 = vmatprep.subr.mxu0 0.0
    %1141 = vmatpush1.msra.mxu0 0.0
    %1142 = vmatprep.subr.mxu0 0.0
    %1143 = vmatpush1.msra.mxu0 0.0
    %1144 = vmatprep.subr.mxu0 0.0
    %1145 = vmatpush1.msra.mxu0 0.0
    %1146 = vmatprep.subr.mxu0 0.0
    %1147 = vmatpush1.msra.mxu0 0.0
    %1148 = vmatprep.subr.mxu0 0.0
    %1149 = vmatpush1.msra.mxu0 0.0
    %1150 = vmatprep.subr.mxu0 0.0
    %1151 = vmatpush1.msra.mxu0 0.0
    %1152 = vmatprep.subr.mxu0 0.0
    %1153 = vmatpush1.msra.mxu0 0.0
    %1154 = vmatprep.subr.mxu0 0.0
    %1155 = vmatpush1.msra.mxu0 0.0
    %1156 = vmatprep.subr.mxu0 0.0
    %1157 = vmatpush1.msra.mxu0 0.0
    %1158 = vmatprep.subr.mxu0 0.0
    %1159 = vmatpush1.msra.mxu0 0.0
    %1160 = vmatprep.subr.mxu0 0.0
    %1161 = vmatpush1.msra.mxu0 0.0
    %1162 = vmatprep.subr.mxu0 0.0
    %1163 = vmatpush1.msra.mxu0 0.0
    %1164 = vmatprep.subr.mxu0 0.0
    %1165 = vmatpush1.msra.mxu0 0.0
    %1166 = vmatprep.subr.mxu0 0.0
    %1167 = vmatpush1.msra.mxu0 0.0
    %1168 = vmatprep.mubr.f32.mxu0 0.0
    %1169 = vmatmul.mubr.f32.gmra.mrb[0].mxu0 %v740
    %v1170 = vpop.f32.mrb[0].mxu0
    %v1171 = vadd.f32 %v722, %v1170
    %v1172 = vpop.f32.mrb[0].mxu0
    %1173 = vmatprep.mubr.f32.mxu0 0.0
    %1174 = vmatmul.mubr.f32.gmra.mrb[0].mxu0 %v742
    %v1175 = vpop.f32.mrb[0].mxu0
    %v1176 = vadd.f32 %v727, %v1175
    %v1177 = vpop.f32.mrb[0].mxu0
    %1178 = vmatprep.mubr.f32.mxu0 0.0
    %1179 = vmatmul.mubr.f32.gmra.mrb[0].mxu0 %v744
    %v1180 = vpop.f32.mrb[0].mxu0
    %v1181 = vadd.f32 %v732, %v1180
    %v1182 = vpop.f32.mrb[0].mxu0
    %1183 = vmatprep.mubr.f32.mxu0 0.0
    %1184 = vmatmul.mubr.f32.gmra.mrb[0].mxu0 %v746
    %v1185 = vpop.f32.mrb[0].mxu0
    %v1186 = vadd.f32 %v737, %v1185
    %v1187 = vpop.f32.mrb[0].mxu0
    %1188 = vdwg.mxu0
    %vm1189 = vcmask 1045504
    %v1190 = vrot.slane %v195, 2
    %v1191 = vrot.slane %v196, 2
    %v1192 = vsel %vm1189, %v1190, %v1191
    %v1193 = vrot.slane %v197, 2
    %v1194 = vsel %vm1189, %v1191, %v1193
    %v1195 = vrot.slane %v198, 2
    %v1196 = vrot.slane %v199, 2
    %v1197 = vsel %vm1189, %v1195, %v1196
    %v1198 = vrot.slane %v200, 2
    %v1199 = vsel %vm1189, %v1196, %v1198
    %s1200 = scalar_lea.vmem %s2, 576
    %v1201 = vld [vmem:[%s1200] sm:$0xff]
    %v1202 = vld [vmem:[%s1200 + $0x8] sm:$0xff]
    %v1203 = vld [vmem:[%s1200 + $0x10] sm:$0xff]
    %v1204 = vld [vmem:[%s1200 + $0x18] sm:$0xff]
    %v1205 = vld [vmem:[%s1200 + $0x20] sm:$0xff]
    %v1206 = vld [vmem:[%s1200 + $0x28] sm:$0xff]
    %v1207 = vld [vmem:[%s1200 + $0x30] sm:$0xff]
    %v1208 = vld [vmem:[%s1200 + $0x38] sm:$0xff]
    %v1209 = vld [vmem:[%s1200 + $0x40] sm:$0xff]
    %v1210 = vld [vmem:[%s1200 + $0x48] sm:$0xff]
    %v1211 = vld [vmem:[%s1200 + $0x50] sm:$0xff]
    %v1212 = vld [vmem:[%s1200 + $0x58] sm:$0xff]
    %v1213 = vld [vmem:[%s1200 + $0x60] sm:$0xff]
    %v1214 = vld [vmem:[%s1200 + $0x68] sm:$0xff]
    %v1215 = vld [vmem:[%s1200 + $0x70] sm:$0xff]
    %v1216 = vld [vmem:[%s1200 + $0x78] sm:$0xff]
    %v1217 = vld [vmem:[%s1200 + $0x80] sm:$0xff]
    %v1218 = vld [vmem:[%s1200 + $0x88] sm:$0xff]
    %v1219 = vld [vmem:[%s1200 + $0x90] sm:$0xff]
    %v1220 = vld [vmem:[%s1200 + $0x98] sm:$0xff]
    %v1221 = vld [vmem:[%s1200 + $0xa0] sm:$0xff]
    %v1222 = vld [vmem:[%s1200 + $0xa8] sm:$0xff]
    %v1223 = vld [vmem:[%s1200 + $0xb0] sm:$0xff]
    %v1224 = vld [vmem:[%s1200 + $0xb8] sm:$0xff]
    %v1225 = vld [vmem:[%s1200 + $0xc0] sm:$0xff]
    %v1226 = vld [vmem:[%s1200 + $0xc8] sm:$0xff]
    %v1227 = vld [vmem:[%s1200 + $0xd0] sm:$0xff]
    %v1228 = vld [vmem:[%s1200 + $0xd8] sm:$0xff]
    %v1229 = vld [vmem:[%s1200 + $0xe0] sm:$0xff]
    %v1230 = vld [vmem:[%s1200 + $0xe8] sm:$0xff]
    %v1231 = vld [vmem:[%s1200 + $0xf0] sm:$0xff]
    %v1232 = vld [vmem:[%s1200 + $0xf8] sm:$0xff]
    %v1233 = vld [vmem:[%s1200 + $0x100] sm:$0xff]
    %v1234 = vld [vmem:[%s1200 + $0x108] sm:$0xff]
    %v1235 = vld [vmem:[%s1200 + $0x110] sm:$0xff]
    %v1236 = vld [vmem:[%s1200 + $0x118] sm:$0xff]
    %v1237 = vsel %vm183, %v1192, 0
    %v1239 = vsel %vm183, %v1194, 0
    %v1241 = vsel %vm183, %v1197, 0
    %v1243 = vsel %vm183, %v1199, 0
    %1245 = vmatprep.subr.mxu0 %v1202
    %1246 = vmatpush1.msra.mxu0 %v1201
    %1247 = vmatprep.subr.mxu0 %v1211
    %1248 = vmatpush1.msra.mxu0 %v1210
    %1249 = vmatprep.subr.mxu0 %v1220
    %1250 = vmatpush1.msra.mxu0 %v1219
    %1251 = vmatprep.subr.mxu0 %v1229
    %1252 = vmatpush1.msra.mxu0 %v1228
    %1253 = vmatprep.subr.mxu0 0.0
    %1254 = vmatpush1.msra.mxu0 0.0
    %1255 = vmatprep.subr.mxu0 0.0
    %1256 = vmatpush1.msra.mxu0 0.0
    %1257 = vmatprep.subr.mxu0 0.0
    %1258 = vmatpush1.msra.mxu0 0.0
    %1259 = vmatprep.subr.mxu0 0.0
    %1260 = vmatpush1.msra.mxu0 0.0
    %1261 = vmatprep.subr.mxu0 0.0
    %1262 = vmatpush1.msra.mxu0 0.0
    %1263 = vmatprep.subr.mxu0 0.0
    %1264 = vmatpush1.msra.mxu0 0.0
    %1265 = vmatprep.subr.mxu0 0.0
    %1266 = vmatpush1.msra.mxu0 0.0
    %1267 = vmatprep.subr.mxu0 0.0
    %1268 = vmatpush1.msra.mxu0 0.0
    %1269 = vmatprep.subr.mxu0 0.0
    %1270 = vmatpush1.msra.mxu0 0.0
    %1271 = vmatprep.subr.mxu0 0.0
    %1272 = vmatpush1.msra.mxu0 0.0
    %1273 = vmatprep.subr.mxu0 0.0
    %1274 = vmatpush1.msra.mxu0 0.0
    %1275 = vmatprep.subr.mxu0 0.0
    %1276 = vmatpush1.msra.mxu0 0.0
    %1277 = vmatprep.subr.mxu0 0.0
    %1278 = vmatpush1.msra.mxu0 0.0
    %1279 = vmatprep.subr.mxu0 0.0
    %1280 = vmatpush1.msra.mxu0 0.0
    %1281 = vmatprep.subr.mxu0 0.0
    %1282 = vmatpush1.msra.mxu0 0.0
    %1283 = vmatprep.subr.mxu0 0.0
    %1284 = vmatpush1.msra.mxu0 0.0
    %1285 = vmatprep.subr.mxu0 0.0
    %1286 = vmatpush1.msra.mxu0 0.0
    %1287 = vmatprep.subr.mxu0 0.0
    %1288 = vmatpush1.msra.mxu0 0.0
    %1289 = vmatprep.subr.mxu0 0.0
    %1290 = vmatpush1.msra.mxu0 0.0
    %1291 = vmatprep.subr.mxu0 0.0
    %1292 = vmatpush1.msra.mxu0 0.0
    %1293 = vmatprep.subr.mxu0 0.0
    %1294 = vmatpush1.msra.mxu0 0.0
    %1295 = vmatprep.subr.mxu0 0.0
    %1296 = vmatpush1.msra.mxu0 0.0
    %1297 = vmatprep.subr.mxu0 0.0
    %1298 = vmatpush1.msra.mxu0 0.0
    %1299 = vmatprep.subr.mxu0 0.0
    %1300 = vmatpush1.msra.mxu0 0.0
    %1301 = vmatprep.subr.mxu0 0.0
    %1302 = vmatpush1.msra.mxu0 0.0
    %1303 = vmatprep.subr.mxu0 0.0
    %1304 = vmatpush1.msra.mxu0 0.0
    %1305 = vmatprep.subr.mxu0 0.0
    %1306 = vmatpush1.msra.mxu0 0.0
    %1307 = vmatprep.subr.mxu0 0.0
    %1308 = vmatpush1.msra.mxu0 0.0
    %1309 = vmatprep.mubr.f32.mxu0 0.0
    %1310 = vmatmul.mubr.f32.gmra.mrb[0].mxu0 %v1237
    %v1311 = vpop.f32.mrb[0].mxu0
    %v1312 = vadd.f32 0.0, %v1311
    %v1313 = vpop.f32.mrb[0].mxu0
    %v1314 = vadd.f32 0.0, %v1313
    %1315 = vmatprep.mubr.f32.mxu0 0.0
    %1316 = vmatmul.mubr.f32.gmra.mrb[0].mxu0 %v1239
    %v1317 = vpop.f32.mrb[0].mxu0
    %v1318 = vadd.f32 0.0, %v1317
    %v1319 = vpop.f32.mrb[0].mxu0
    %v1320 = vadd.f32 0.0, %v1319
    %1321 = vmatprep.mubr.f32.mxu0 0.0
    %1322 = vmatmul.mubr.f32.gmra.mrb[0].mxu0 %v1241
    %v1323 = vpop.f32.mrb[0].mxu0
    %v1324 = vadd.f32 0.0, %v1323
    %v1325 = vpop.f32.mrb[0].mxu0
    %v1326 = vadd.f32 0.0, %v1325
    %1327 = vmatprep.mubr.f32.mxu0 0.0
    %1328 = vmatmul.mubr.f32.gmra.mrb[0].mxu0 %v1243
    %v1329 = vpop.f32.mrb[0].mxu0
    %v1330 = vadd.f32 0.0, %v1329
    %v1331 = vpop.f32.mrb[0].mxu0
    %v1332 = vadd.f32 0.0, %v1331
    %1333 = vdwg.mxu0
    %1334 = vmatprep.subr.mxu0 %v1204
    %1335 = vmatpush1.msra.mxu0 %v1203
    %1336 = vmatprep.subr.mxu0 %v1213
    %1337 = vmatpush1.msra.mxu0 %v1212
    %1338 = vmatprep.subr.mxu0 %v1222
    %1339 = vmatpush1.msra.mxu0 %v1221
    %1340 = vmatprep.subr.mxu0 %v1231
    %1341 = vmatpush1.msra.mxu0 %v1230
    %1342 = vmatprep.subr.mxu0 0.0
    %1343 = vmatpush1.msra.mxu0 0.0
    %1344 = vmatprep.subr.mxu0 0.0
    %1345 = vmatpush1.msra.mxu0 0.0
    %1346 = vmatprep.subr.mxu0 0.0
    %1347 = vmatpush1.msra.mxu0 0.0
    %1348 = vmatprep.subr.mxu0 0.0
    %1349 = vmatpush1.msra.mxu0 0.0
    %1350 = vmatprep.subr.mxu0 0.0
    %1351 = vmatpush1.msra.mxu0 0.0
    %1352 = vmatprep.subr.mxu0 0.0
    %1353 = vmatpush1.msra.mxu0 0.0
    %1354 = vmatprep.subr.mxu0 0.0
    %1355 = vmatpush1.msra.mxu0 0.0
    %1356 = vmatprep.subr.mxu0 0.0
    %1357 = vmatpush1.msra.mxu0 0.0
    %1358 = vmatprep.subr.mxu0 0.0
    %1359 = vmatpush1.msra.mxu0 0.0
    %1360 = vmatprep.subr.mxu0 0.0
    %1361 = vmatpush1.msra.mxu0 0.0
    %1362 = vmatprep.subr.mxu0 0.0
    %1363 = vmatpush1.msra.mxu0 0.0
    %1364 = vmatprep.subr.mxu0 0.0
    %1365 = vmatpush1.msra.mxu0 0.0
    %1366 = vmatprep.subr.mxu0 0.0
    %1367 = vmatpush1.msra.mxu0 0.0
    %1368 = vmatprep.subr.mxu0 0.0
    %1369 = vmatpush1.msra.mxu0 0.0
    %1370 = vmatprep.subr.mxu0 0.0
    %1371 = vmatpush1.msra.mxu0 0.0
    %1372 = vmatprep.subr.mxu0 0.0
    %1373 = vmatpush1.msra.mxu0 0.0
    %1374 = vmatprep.subr.mxu0 0.0
    %1375 = vmatpush1.msra.mxu0 0.0
    %1376 = vmatprep.subr.mxu0 0.0
    %1377 = vmatpush1.msra.mxu0 0.0
    %1378 = vmatprep.subr.mxu0 0.0
    %1379 = vmatpush1.msra.mxu0 0.0
    %1380 = vmatprep.subr.mxu0 0.0
    %1381 = vmatpush1.msra.mxu0 0.0
    %1382 = vmatprep.subr.mxu0 0.0
    %1383 = vmatpush1.msra.mxu0 0.0
    %1384 = vmatprep.subr.mxu0 0.0
    %1385 = vmatpush1.msra.mxu0 0.0
    %1386 = vmatprep.subr.mxu0 0.0
    %1387 = vmatpush1.msra.mxu0 0.0
    %1388 = vmatprep.subr.mxu0 0.0
    %1389 = vmatpush1.msra.mxu0 0.0
    %1390 = vmatprep.subr.mxu0 0.0
    %1391 = vmatpush1.msra.mxu0 0.0
    %1392 = vmatprep.subr.mxu0 0.0
    %1393 = vmatpush1.msra.mxu0 0.0
    %1394 = vmatprep.subr.mxu0 0.0
    %1395 = vmatpush1.msra.mxu0 0.0
    %1396 = vmatprep.subr.mxu0 0.0
    %1397 = vmatpush1.msra.mxu0 0.0
    %1398 = vmatprep.mubr.f32.mxu0 0.0
    %1399 = vmatmul.mubr.f32.gmra.mrb[0].mxu0 %v1237
    %v1400 = vpop.f32.mrb[0].mxu0
    %v1401 = vadd.f32 0.0, %v1400
    %v1402 = vpop.f32.mrb[0].mxu0
    %v1403 = vadd.f32 0.0, %v1402
    %1404 = vmatprep.mubr.f32.mxu0 0.0
    %1405 = vmatmul.mubr.f32.gmra.mrb[0].mxu0 %v1239
    %v1406 = vpop.f32.mrb[0].mxu0
    %v1407 = vadd.f32 0.0, %v1406
    %v1408 = vpop.f32.mrb[0].mxu0
    %v1409 = vadd.f32 0.0, %v1408
    %1410 = vmatprep.mubr.f32.mxu0 0.0
    %1411 = vmatmul.mubr.f32.gmra.mrb[0].mxu0 %v1241
    %v1412 = vpop.f32.mrb[0].mxu0
    %v1413 = vadd.f32 0.0, %v1412
    %v1414 = vpop.f32.mrb[0].mxu0
    %v1415 = vadd.f32 0.0, %v1414
    %1416 = vmatprep.mubr.f32.mxu0 0.0
    %1417 = vmatmul.mubr.f32.gmra.mrb[0].mxu0 %v1243
    %v1418 = vpop.f32.mrb[0].mxu0
    %v1419 = vadd.f32 0.0, %v1418
    %v1420 = vpop.f32.mrb[0].mxu0
    %v1421 = vadd.f32 0.0, %v1420
    %1422 = vdwg.mxu0
    %1423 = vmatprep.subr.mxu0 %v1206
    %1424 = vmatpush1.msra.mxu0 %v1205
    %1425 = vmatprep.subr.mxu0 %v1215
    %1426 = vmatpush1.msra.mxu0 %v1214
    %1427 = vmatprep.subr.mxu0 %v1224
    %1428 = vmatpush1.msra.mxu0 %v1223
    %1429 = vmatprep.subr.mxu0 %v1233
    %1430 = vmatpush1.msra.mxu0 %v1232
    %1431 = vmatprep.subr.mxu0 0.0
    %1432 = vmatpush1.msra.mxu0 0.0
    %1433 = vmatprep.subr.mxu0 0.0
    %1434 = vmatpush1.msra.mxu0 0.0
    %1435 = vmatprep.subr.mxu0 0.0
    %1436 = vmatpush1.msra.mxu0 0.0
    %1437 = vmatprep.subr.mxu0 0.0
    %1438 = vmatpush1.msra.mxu0 0.0
    %1439 = vmatprep.subr.mxu0 0.0
    %1440 = vmatpush1.msra.mxu0 0.0
    %1441 = vmatprep.subr.mxu0 0.0
    %1442 = vmatpush1.msra.mxu0 0.0
    %1443 = vmatprep.subr.mxu0 0.0
    %1444 = vmatpush1.msra.mxu0 0.0
    %1445 = vmatprep.subr.mxu0 0.0
    %1446 = vmatpush1.msra.mxu0 0.0
    %1447 = vmatprep.subr.mxu0 0.0
    %1448 = vmatpush1.msra.mxu0 0.0
    %1449 = vmatprep.subr.mxu0 0.0
    %1450 = vmatpush1.msra.mxu0 0.0
    %1451 = vmatprep.subr.mxu0 0.0
    %1452 = vmatpush1.msra.mxu0 0.0
    %1453 = vmatprep.subr.mxu0 0.0
    %1454 = vmatpush1.msra.mxu0 0.0
    %1455 = vmatprep.subr.mxu0 0.0
    %1456 = vmatpush1.msra.mxu0 0.0
    %1457 = vmatprep.subr.mxu0 0.0
    %1458 = vmatpush1.msra.mxu0 0.0
    %1459 = vmatprep.subr.mxu0 0.0
    %1460 = vmatpush1.msra.mxu0 0.0
    %1461 = vmatprep.subr.mxu0 0.0
    %1462 = vmatpush1.msra.mxu0 0.0
    %1463 = vmatprep.subr.mxu0 0.0
    %1464 = vmatpush1.msra.mxu0 0.0
    %1465 = vmatprep.subr.mxu0 0.0
    %1466 = vmatpush1.msra.mxu0 0.0
    %1467 = vmatprep.subr.mxu0 0.0
    %1468 = vmatpush1.msra.mxu0 0.0
    %1469 = vmatprep.subr.mxu0 0.0
    %1470 = vmatpush1.msra.mxu0 0.0
    %1471 = vmatprep.subr.mxu0 0.0
    %1472 = vmatpush1.msra.mxu0 0.0
    %1473 = vmatprep.subr.mxu0 0.0
    %1474 = vmatpush1.msra.mxu0 0.0
    %1475 = vmatprep.subr.mxu0 0.0
    %1476 = vmatpush1.msra.mxu0 0.0
    %1477 = vmatprep.subr.mxu0 0.0
    %1478 = vmatpush1.msra.mxu0 0.0
    %1479 = vmatprep.subr.mxu0 0.0
    %1480 = vmatpush1.msra.mxu0 0.0
    %1481 = vmatprep.subr.mxu0 0.0
    %1482 = vmatpush1.msra.mxu0 0.0
    %1483 = vmatprep.subr.mxu0 0.0
    %1484 = vmatpush1.msra.mxu0 0.0
    %1485 = vmatprep.subr.mxu0 0.0
    %1486 = vmatpush1.msra.mxu0 0.0
    %1487 = vmatprep.mubr.f32.mxu0 0.0
    %1488 = vmatmul.mubr.f32.gmra.mrb[0].mxu0 %v1237
    %v1489 = vpop.f32.mrb[0].mxu0
    %v1490 = vadd.f32 0.0, %v1489
    %v1491 = vpop.f32.mrb[0].mxu0
    %v1492 = vadd.f32 0.0, %v1491
    %1493 = vmatprep.mubr.f32.mxu0 0.0
    %1494 = vmatmul.mubr.f32.gmra.mrb[0].mxu0 %v1239
    %v1495 = vpop.f32.mrb[0].mxu0
    %v1496 = vadd.f32 0.0, %v1495
    %v1497 = vpop.f32.mrb[0].mxu0
    %v1498 = vadd.f32 0.0, %v1497
    %1499 = vmatprep.mubr.f32.mxu0 0.0
    %1500 = vmatmul.mubr.f32.gmra.mrb[0].mxu0 %v1241
    %v1501 = vpop.f32.mrb[0].mxu0
    %v1502 = vadd.f32 0.0, %v1501
    %v1503 = vpop.f32.mrb[0].mxu0
    %v1504 = vadd.f32 0.0, %v1503
    %1505 = vmatprep.mubr.f32.mxu0 0.0
    %1506 = vmatmul.mubr.f32.gmra.mrb[0].mxu0 %v1243
    %v1507 = vpop.f32.mrb[0].mxu0
    %v1508 = vadd.f32 0.0, %v1507
    %v1509 = vpop.f32.mrb[0].mxu0
    %v1510 = vadd.f32 0.0, %v1509
    %1511 = vdwg.mxu0
    %1512 = vmatprep.subr.mxu0 %v1208
    %1513 = vmatpush1.msra.mxu0 %v1207
    %1514 = vmatprep.subr.mxu0 %v1217
    %1515 = vmatpush1.msra.mxu0 %v1216
    %1516 = vmatprep.subr.mxu0 %v1226
    %1517 = vmatpush1.msra.mxu0 %v1225
    %1518 = vmatprep.subr.mxu0 %v1235
    %1519 = vmatpush1.msra.mxu0 %v1234
    %1520 = vmatprep.subr.mxu0 0.0
    %1521 = vmatpush1.msra.mxu0 0.0
    %1522 = vmatprep.subr.mxu0 0.0
    %1523 = vmatpush1.msra.mxu0 0.0
    %1524 = vmatprep.subr.mxu0 0.0
    %1525 = vmatpush1.msra.mxu0 0.0
    %1526 = vmatprep.subr.mxu0 0.0
    %1527 = vmatpush1.msra.mxu0 0.0
    %1528 = vmatprep.subr.mxu0 0.0
    %1529 = vmatpush1.msra.mxu0 0.0
    %1530 = vmatprep.subr.mxu0 0.0
    %1531 = vmatpush1.msra.mxu0 0.0
    %1532 = vmatprep.subr.mxu0 0.0
    %1533 = vmatpush1.msra.mxu0 0.0
    %1534 = vmatprep.subr.mxu0 0.0
    %1535 = vmatpush1.msra.mxu0 0.0
    %1536 = vmatprep.subr.mxu0 0.0
    %1537 = vmatpush1.msra.mxu0 0.0
    %1538 = vmatprep.subr.mxu0 0.0
    %1539 = vmatpush1.msra.mxu0 0.0
    %1540 = vmatprep.subr.mxu0 0.0
    %1541 = vmatpush1.msra.mxu0 0.0
    %1542 = vmatprep.subr.mxu0 0.0
    %1543 = vmatpush1.msra.mxu0 0.0
    %1544 = vmatprep.subr.mxu0 0.0
    %1545 = vmatpush1.msra.mxu0 0.0
    %1546 = vmatprep.subr.mxu0 0.0
    %1547 = vmatpush1.msra.mxu0 0.0
    %1548 = vmatprep.subr.mxu0 0.0
    %1549 = vmatpush1.msra.mxu0 0.0
    %1550 = vmatprep.subr.mxu0 0.0
    %1551 = vmatpush1.msra.mxu0 0.0
    %1552 = vmatprep.subr.mxu0 0.0
    %1553 = vmatpush1.msra.mxu0 0.0
    %1554 = vmatprep.subr.mxu0 0.0
    %1555 = vmatpush1.msra.mxu0 0.0
    %1556 = vmatprep.subr.mxu0 0.0
    %1557 = vmatpush1.msra.mxu0 0.0
    %1558 = vmatprep.subr.mxu0 0.0
    %1559 = vmatpush1.msra.mxu0 0.0
    %1560 = vmatprep.subr.mxu0 0.0
    %1561 = vmatpush1.msra.mxu0 0.0
    %1562 = vmatprep.subr.mxu0 0.0
    %1563 = vmatpush1.msra.mxu0 0.0
    %1564 = vmatprep.subr.mxu0 0.0
    %1565 = vmatpush1.msra.mxu0 0.0
    %1566 = vmatprep.subr.mxu0 0.0
    %1567 = vmatpush1.msra.mxu0 0.0
    %1568 = vmatprep.subr.mxu0 0.0
    %1569 = vmatpush1.msra.mxu0 0.0
    %1570 = vmatprep.subr.mxu0 0.0
    %1571 = vmatpush1.msra.mxu0 0.0
    %1572 = vmatprep.subr.mxu0 0.0
    %1573 = vmatpush1.msra.mxu0 0.0
    %1574 = vmatprep.subr.mxu0 0.0
    %1575 = vmatpush1.msra.mxu0 0.0
    %1576 = vmatprep.mubr.f32.mxu0 0.0
    %1577 = vmatmul.mubr.f32.gmra.mrb[0].mxu0 %v1237
    %v1578 = vpop.f32.mrb[0].mxu0
    %v1579 = vadd.f32 0.0, %v1578
    %v1580 = vpop.f32.mrb[0].mxu0
    %v1581 = vadd.f32 0.0, %v1580
    %1582 = vmatprep.mubr.f32.mxu0 0.0
    %1583 = vmatmul.mubr.f32.gmra.mrb[0].mxu0 %v1239
    %v1584 = vpop.f32.mrb[0].mxu0
    %v1585 = vadd.f32 0.0, %v1584
    %v1586 = vpop.f32.mrb[0].mxu0
    %v1587 = vadd.f32 0.0, %v1586
    %1588 = vmatprep.mubr.f32.mxu0 0.0
    %1589 = vmatmul.mubr.f32.gmra.mrb[0].mxu0 %v1241
    %v1590 = vpop.f32.mrb[0].mxu0
    %v1591 = vadd.f32 0.0, %v1590
    %v1592 = vpop.f32.mrb[0].mxu0
    %v1593 = vadd.f32 0.0, %v1592
    %1594 = vmatprep.mubr.f32.mxu0 0.0
    %1595 = vmatmul.mubr.f32.gmra.mrb[0].mxu0 %v1243
    %v1596 = vpop.f32.mrb[0].mxu0
    %v1597 = vadd.f32 0.0, %v1596
    %v1598 = vpop.f32.mrb[0].mxu0
    %v1599 = vadd.f32 0.0, %v1598
    %1600 = vdwg.mxu0
    %1601 = vmatprep.subr.mxu0 0.0
    %1602 = vmatpush1.msra.mxu0 %v1209
    %1603 = vmatprep.subr.mxu0 0.0
    %1604 = vmatpush1.msra.mxu0 %v1218
    %1605 = vmatprep.subr.mxu0 0.0
    %1606 = vmatpush1.msra.mxu0 %v1227
    %1607 = vmatprep.subr.mxu0 0.0
    %1608 = vmatpush1.msra.mxu0 %v1236
    %1609 = vmatprep.subr.mxu0 0.0
    %1610 = vmatpush1.msra.mxu0 0.0
    %1611 = vmatprep.subr.mxu0 0.0
    %1612 = vmatpush1.msra.mxu0 0.0
    %1613 = vmatprep.subr.mxu0 0.0
    %1614 = vmatpush1.msra.mxu0 0.0
    %1615 = vmatprep.subr.mxu0 0.0
    %1616 = vmatpush1.msra.mxu0 0.0
    %1617 = vmatprep.subr.mxu0 0.0
    %1618 = vmatpush1.msra.mxu0 0.0
    %1619 = vmatprep.subr.mxu0 0.0
    %1620 = vmatpush1.msra.mxu0 0.0
    %1621 = vmatprep.subr.mxu0 0.0
    %1622 = vmatpush1.msra.mxu0 0.0
    %1623 = vmatprep.subr.mxu0 0.0
    %1624 = vmatpush1.msra.mxu0 0.0
    %1625 = vmatprep.subr.mxu0 0.0
    %1626 = vmatpush1.msra.mxu0 0.0
    %1627 = vmatprep.subr.mxu0 0.0
    %1628 = vmatpush1.msra.mxu0 0.0
    %1629 = vmatprep.subr.mxu0 0.0
    %1630 = vmatpush1.msra.mxu0 0.0
    %1631 = vmatprep.subr.mxu0 0.0
    %1632 = vmatpush1.msra.mxu0 0.0
    %1633 = vmatprep.subr.mxu0 0.0
    %1634 = vmatpush1.msra.mxu0 0.0
    %1635 = vmatprep.subr.mxu0 0.0
    %1636 = vmatpush1.msra.mxu0 0.0
    %1637 = vmatprep.subr.mxu0 0.0
    %1638 = vmatpush1.msra.mxu0 0.0
    %1639 = vmatprep.subr.mxu0 0.0
    %1640 = vmatpush1.msra.mxu0 0.0
    %1641 = vmatprep.subr.mxu0 0.0
    %1642 = vmatpush1.msra.mxu0 0.0
    %1643 = vmatprep.subr.mxu0 0.0
    %1644 = vmatpush1.msra.mxu0 0.0
    %1645 = vmatprep.subr.mxu0 0.0
    %1646 = vmatpush1.msra.mxu0 0.0
    %1647 = vmatprep.subr.mxu0 0.0
    %1648 = vmatpush1.msra.mxu0 0.0
    %1649 = vmatprep.subr.mxu0 0.0
    %1650 = vmatpush1.msra.mxu0 0.0
    %1651 = vmatprep.subr.mxu0 0.0
    %1652 = vmatpush1.msra.mxu0 0.0
    %1653 = vmatprep.subr.mxu0 0.0
    %1654 = vmatpush1.msra.mxu0 0.0
    %1655 = vmatprep.subr.mxu0 0.0
    %1656 = vmatpush1.msra.mxu0 0.0
    %1657 = vmatprep.subr.mxu0 0.0
    %1658 = vmatpush1.msra.mxu0 0.0
    %1659 = vmatprep.subr.mxu0 0.0
    %1660 = vmatpush1.msra.mxu0 0.0
    %1661 = vmatprep.subr.mxu0 0.0
    %1662 = vmatpush1.msra.mxu0 0.0
    %1663 = vmatprep.subr.mxu0 0.0
    %1664 = vmatpush1.msra.mxu0 0.0
    %1665 = vmatprep.mubr.f32.mxu0 0.0
    %1666 = vmatmul.mubr.f32.gmra.mrb[0].mxu0 %v1237
    %v1667 = vpop.f32.mrb[0].mxu0
    %v1668 = vadd.f32 0.0, %v1667
    %v1669 = vpop.f32.mrb[0].mxu0
    %1670 = vmatprep.mubr.f32.mxu0 0.0
    %1671 = vmatmul.mubr.f32.gmra.mrb[0].mxu0 %v1239
    %v1672 = vpop.f32.mrb[0].mxu0
    %v1673 = vadd.f32 0.0, %v1672
    %v1674 = vpop.f32.mrb[0].mxu0
    %1675 = vmatprep.mubr.f32.mxu0 0.0
    %1676 = vmatmul.mubr.f32.gmra.mrb[0].mxu0 %v1241
    %v1677 = vpop.f32.mrb[0].mxu0
    %v1678 = vadd.f32 0.0, %v1677
    %v1679 = vpop.f32.mrb[0].mxu0
    %1680 = vmatprep.mubr.f32.mxu0 0.0
    %1681 = vmatmul.mubr.f32.gmra.mrb[0].mxu0 %v1243
    %v1682 = vpop.f32.mrb[0].mxu0
    %v1683 = vadd.f32 0.0, %v1682
    %v1684 = vpop.f32.mrb[0].mxu0
    %1685 = vdwg.mxu0
    %v1686 = vadd.f32 %v815, %v1312
    %v1687 = vadd.f32 %v817, %v1314
    %v1688 = vadd.f32 %v904, %v1401
    %v1689 = vadd.f32 %v906, %v1403
    %v1690 = vadd.f32 %v993, %v1490
    %v1691 = vadd.f32 %v995, %v1492
    %v1692 = vadd.f32 %v1082, %v1579
    %v1693 = vadd.f32 %v1084, %v1581
    %v1694 = vadd.f32 %v1171, %v1668
    %v1695 = vadd.f32 %v821, %v1318
    %v1696 = vadd.f32 %v823, %v1320
    %v1697 = vadd.f32 %v910, %v1407
    %v1698 = vadd.f32 %v912, %v1409
    %v1699 = vadd.f32 %v999, %v1496
    %v1700 = vadd.f32 %v1001, %v1498
    %v1701 = vadd.f32 %v1088, %v1585
    %v1702 = vadd.f32 %v1090, %v1587
    %v1703 = vadd.f32 %v1176, %v1673
    %v1704 = vadd.f32 %v827, %v1324
    %v1705 = vadd.f32 %v829, %v1326
    %v1706 = vadd.f32 %v916, %v1413
    %v1707 = vadd.f32 %v918, %v1415
    %v1708 = vadd.f32 %v1005, %v1502
    %v1709 = vadd.f32 %v1007, %v1504
    %v1710 = vadd.f32 %v1094, %v1591
    %v1711 = vadd.f32 %v1096, %v1593
    %v1712 = vadd.f32 %v1181, %v1678
    %v1713 = vadd.f32 %v833, %v1330
    %v1714 = vadd.f32 %v835, %v1332
    %v1715 = vadd.f32 %v922, %v1419
    %v1716 = vadd.f32 %v924, %v1421
    %v1717 = vadd.f32 %v1011, %v1508
    %v1718 = vadd.f32 %v1013, %v1510
    %v1719 = vadd.f32 %v1100, %v1597
    %v1720 = vadd.f32 %v1102, %v1599
    %v1721 = vadd.f32 %v1186, %v1683
    %vm1722 = vcmask 1044480
    %v1723 = vrot.slane %v195, 3
    %v1724 = vrot.slane %v196, 3
    %v1725 = vsel %vm1722, %v1723, %v1724
    %v1726 = vrot.slane %v197, 3
    %v1727 = vsel %vm1722, %v1724, %v1726
    %v1728 = vrot.slane %v198, 3
    %v1729 = vrot.slane %v199, 3
    %v1730 = vsel %vm1722, %v1728, %v1729
    %v1731 = vrot.slane %v200, 3
    %v1732 = vsel %vm1722, %v1729, %v1731
    %s1733 = scalar_lea.vmem %s2, 864
    %v1734 = vld [vmem:[%s1733] sm:$0xff]
    %v1735 = vld [vmem:[%s1733 + $0x8] sm:$0xff]
    %v1736 = vld [vmem:[%s1733 + $0x10] sm:$0xff]
    %v1737 = vld [vmem:[%s1733 + $0x18] sm:$0xff]
    %v1738 = vld [vmem:[%s1733 + $0x20] sm:$0xff]
    %v1739 = vld [vmem:[%s1733 + $0x28] sm:$0xff]
    %v1740 = vld [vmem:[%s1733 + $0x30] sm:$0xff]
    %v1741 = vld [vmem:[%s1733 + $0x38] sm:$0xff]
    %v1742 = vld [vmem:[%s1733 + $0x40] sm:$0xff]
    %v1743 = vld [vmem:[%s1733 + $0x48] sm:$0xff]
    %v1744 = vld [vmem:[%s1733 + $0x50] sm:$0xff]
    %v1745 = vld [vmem:[%s1733 + $0x58] sm:$0xff]
    %v1746 = vld [vmem:[%s1733 + $0x60] sm:$0xff]
    %v1747 = vld [vmem:[%s1733 + $0x68] sm:$0xff]
    %v1748 = vld [vmem:[%s1733 + $0x70] sm:$0xff]
    %v1749 = vld [vmem:[%s1733 + $0x78] sm:$0xff]
    %v1750 = vld [vmem:[%s1733 + $0x80] sm:$0xff]
    %v1751 = vld [vmem:[%s1733 + $0x88] sm:$0xff]
    %v1752 = vld [vmem:[%s1733 + $0x90] sm:$0xff]
    %v1753 = vld [vmem:[%s1733 + $0x98] sm:$0xff]
    %v1754 = vld [vmem:[%s1733 + $0xa0] sm:$0xff]
    %v1755 = vld [vmem:[%s1733 + $0xa8] sm:$0xff]
    %v1756 = vld [vmem:[%s1733 + $0xb0] sm:$0xff]
    %v1757 = vld [vmem:[%s1733 + $0xb8] sm:$0xff]
    %v1758 = vld [vmem:[%s1733 + $0xc0] sm:$0xff]
    %v1759 = vld [vmem:[%s1733 + $0xc8] sm:$0xff]
    %v1760 = vld [vmem:[%s1733 + $0xd0] sm:$0xff]
    %v1761 = vld [vmem:[%s1733 + $0xd8] sm:$0xff]
    %v1762 = vld [vmem:[%s1733 + $0xe0] sm:$0xff]
    %v1763 = vld [vmem:[%s1733 + $0xe8] sm:$0xff]
    %v1764 = vld [vmem:[%s1733 + $0xf0] sm:$0xff]
    %v1765 = vld [vmem:[%s1733 + $0xf8] sm:$0xff]
    %v1766 = vld [vmem:[%s1733 + $0x100] sm:$0xff]
    %v1767 = vld [vmem:[%s1733 + $0x108] sm:$0xff]
    %v1768 = vld [vmem:[%s1733 + $0x110] sm:$0xff]
    %v1769 = vld [vmem:[%s1733 + $0x118] sm:$0xff]
    %v1770 = vsel %vm183, %v1725, 0
    %v1772 = vsel %vm183, %v1727, 0
    %v1774 = vsel %vm183, %v1730, 0
    %v1776 = vsel %vm183, %v1732, 0
    %1778 = vmatprep.subr.mxu0 %v1735
    %1779 = vmatpush1.msra.mxu0 %v1734
    %1780 = vmatprep.subr.mxu0 %v1744
    %1781 = vmatpush1.msra.mxu0 %v1743
    %1782 = vmatprep.subr.mxu0 %v1753
    %1783 = vmatpush1.msra.mxu0 %v1752
    %1784 = vmatprep.subr.mxu0 %v1762
    %1785 = vmatpush1.msra.mxu0 %v1761
    %1786 = vmatprep.subr.mxu0 0.0
    %1787 = vmatpush1.msra.mxu0 0.0
    %1788 = vmatprep.subr.mxu0 0.0
    %1789 = vmatpush1.msra.mxu0 0.0
    %1790 = vmatprep.subr.mxu0 0.0
    %1791 = vmatpush1.msra.mxu0 0.0
    %1792 = vmatprep.subr.mxu0 0.0
    %1793 = vmatpush1.msra.mxu0 0.0
    %1794 = vmatprep.subr.mxu0 0.0
    %1795 = vmatpush1.msra.mxu0 0.0
    %1796 = vmatprep.subr.mxu0 0.0
    %1797 = vmatpush1.msra.mxu0 0.0
    %1798 = vmatprep.subr.mxu0 0.0
    %1799 = vmatpush1.msra.mxu0 0.0
    %1800 = vmatprep.subr.mxu0 0.0
    %1801 = vmatpush1.msra.mxu0 0.0
    %1802 = vmatprep.subr.mxu0 0.0
    %1803 = vmatpush1.msra.mxu0 0.0
    %1804 = vmatprep.subr.mxu0 0.0
    %1805 = vmatpush1.msra.mxu0 0.0
    %1806 = vmatprep.subr.mxu0 0.0
    %1807 = vmatpush1.msra.mxu0 0.0
    %1808 = vmatprep.subr.mxu0 0.0
    %1809 = vmatpush1.msra.mxu0 0.0
    %1810 = vmatprep.subr.mxu0 0.0
    %1811 = vmatpush1.msra.mxu0 0.0
    %1812 = vmatprep.subr.mxu0 0.0
    %1813 = vmatpush1.msra.mxu0 0.0
    %1814 = vmatprep.subr.mxu0 0.0
    %1815 = vmatpush1.msra.mxu0 0.0
    %1816 = vmatprep.subr.mxu0 0.0
    %1817 = vmatpush1.msra.mxu0 0.0
    %1818 = vmatprep.subr.mxu0 0.0
    %1819 = vmatpush1.msra.mxu0 0.0
    %1820 = vmatprep.subr.mxu0 0.0
    %1821 = vmatpush1.msra.mxu0 0.0
    %1822 = vmatprep.subr.mxu0 0.0
    %1823 = vmatpush1.msra.mxu0 0.0
    %1824 = vmatprep.subr.mxu0 0.0
    %1825 = vmatpush1.msra.mxu0 0.0
    %1826 = vmatprep.subr.mxu0 0.0
    %1827 = vmatpush1.msra.mxu0 0.0
    %1828 = vmatprep.subr.mxu0 0.0
    %1829 = vmatpush1.msra.mxu0 0.0
    %1830 = vmatprep.subr.mxu0 0.0
    %1831 = vmatpush1.msra.mxu0 0.0
    %1832 = vmatprep.subr.mxu0 0.0
    %1833 = vmatpush1.msra.mxu0 0.0
    %1834 = vmatprep.subr.mxu0 0.0
    %1835 = vmatpush1.msra.mxu0 0.0
    %1836 = vmatprep.subr.mxu0 0.0
    %1837 = vmatpush1.msra.mxu0 0.0
    %1838 = vmatprep.subr.mxu0 0.0
    %1839 = vmatpush1.msra.mxu0 0.0
    %1840 = vmatprep.subr.mxu0 0.0
    %1841 = vmatpush1.msra.mxu0 0.0
    %1842 = vmatprep.mubr.f32.mxu0 0.0
    %1843 = vmatmul.mubr.f32.gmra.mrb[0].mxu0 %v1770
    %v1844 = vpop.f32.mrb[0].mxu0
    %v1845 = vadd.f32 0.0, %v1844
    %v1846 = vpop.f32.mrb[0].mxu0
    %v1847 = vadd.f32 0.0, %v1846
    %1848 = vmatprep.mubr.f32.mxu0 0.0
    %1849 = vmatmul.mubr.f32.gmra.mrb[0].mxu0 %v1772
    %v1850 = vpop.f32.mrb[0].mxu0
    %v1851 = vadd.f32 0.0, %v1850
    %v1852 = vpop.f32.mrb[0].mxu0
    %v1853 = vadd.f32 0.0, %v1852
    %1854 = vmatprep.mubr.f32.mxu0 0.0
    %1855 = vmatmul.mubr.f32.gmra.mrb[0].mxu0 %v1774
    %v1856 = vpop.f32.mrb[0].mxu0
    %v1857 = vadd.f32 0.0, %v1856
    %v1858 = vpop.f32.mrb[0].mxu0
    %v1859 = vadd.f32 0.0, %v1858
    %1860 = vmatprep.mubr.f32.mxu0 0.0
    %1861 = vmatmul.mubr.f32.gmra.mrb[0].mxu0 %v1776
    %v1862 = vpop.f32.mrb[0].mxu0
    %v1863 = vadd.f32 0.0, %v1862
    %v1864 = vpop.f32.mrb[0].mxu0
    %v1865 = vadd.f32 0.0, %v1864
    %1866 = vdwg.mxu0
    %1867 = vmatprep.subr.mxu0 %v1737
    %1868 = vmatpush1.msra.mxu0 %v1736
    %1869 = vmatprep.subr.mxu0 %v1746
    %1870 = vmatpush1.msra.mxu0 %v1745
    %1871 = vmatprep.subr.mxu0 %v1755
    %1872 = vmatpush1.msra.mxu0 %v1754
    %1873 = vmatprep.subr.mxu0 %v1764
    %1874 = vmatpush1.msra.mxu0 %v1763
    %1875 = vmatprep.subr.mxu0 0.0
    %1876 = vmatpush1.msra.mxu0 0.0
    %1877 = vmatprep.subr.mxu0 0.0
    %1878 = vmatpush1.msra.mxu0 0.0
    %1879 = vmatprep.subr.mxu0 0.0
    %1880 = vmatpush1.msra.mxu0 0.0
    %1881 = vmatprep.subr.mxu0 0.0
    %1882 = vmatpush1.msra.mxu0 0.0
    %1883 = vmatprep.subr.mxu0 0.0
    %1884 = vmatpush1.msra.mxu0 0.0
    %1885 = vmatprep.subr.mxu0 0.0
    %1886 = vmatpush1.msra.mxu0 0.0
    %1887 = vmatprep.subr.mxu0 0.0
    %1888 = vmatpush1.msra.mxu0 0.0
    %1889 = vmatprep.subr.mxu0 0.0
    %1890 = vmatpush1.msra.mxu0 0.0
    %1891 = vmatprep.subr.mxu0 0.0
    %1892 = vmatpush1.msra.mxu0 0.0
    %1893 = vmatprep.subr.mxu0 0.0
    %1894 = vmatpush1.msra.mxu0 0.0
    %1895 = vmatprep.subr.mxu0 0.0
    %1896 = vmatpush1.msra.mxu0 0.0
    %1897 = vmatprep.subr.mxu0 0.0
    %1898 = vmatpush1.msra.mxu0 0.0
    %1899 = vmatprep.subr.mxu0 0.0
    %1900 = vmatpush1.msra.mxu0 0.0
    %1901 = vmatprep.subr.mxu0 0.0
    %1902 = vmatpush1.msra.mxu0 0.0
    %1903 = vmatprep.subr.mxu0 0.0
    %1904 = vmatpush1.msra.mxu0 0.0
    %1905 = vmatprep.subr.mxu0 0.0
    %1906 = vmatpush1.msra.mxu0 0.0
    %1907 = vmatprep.subr.mxu0 0.0
    %1908 = vmatpush1.msra.mxu0 0.0
    %1909 = vmatprep.subr.mxu0 0.0
    %1910 = vmatpush1.msra.mxu0 0.0
    %1911 = vmatprep.subr.mxu0 0.0
    %1912 = vmatpush1.msra.mxu0 0.0
    %1913 = vmatprep.subr.mxu0 0.0
    %1914 = vmatpush1.msra.mxu0 0.0
    %1915 = vmatprep.subr.mxu0 0.0
    %1916 = vmatpush1.msra.mxu0 0.0
    %1917 = vmatprep.subr.mxu0 0.0
    %1918 = vmatpush1.msra.mxu0 0.0
    %1919 = vmatprep.subr.mxu0 0.0
    %1920 = vmatpush1.msra.mxu0 0.0
    %1921 = vmatprep.subr.mxu0 0.0
    %1922 = vmatpush1.msra.mxu0 0.0
    %1923 = vmatprep.subr.mxu0 0.0
    %1924 = vmatpush1.msra.mxu0 0.0
    %1925 = vmatprep.subr.mxu0 0.0
    %1926 = vmatpush1.msra.mxu0 0.0
    %1927 = vmatprep.subr.mxu0 0.0
    %1928 = vmatpush1.msra.mxu0 0.0
    %1929 = vmatprep.subr.mxu0 0.0
    %1930 = vmatpush1.msra.mxu0 0.0
    %1931 = vmatprep.mubr.f32.mxu0 0.0
    %1932 = vmatmul.mubr.f32.gmra.mrb[0].mxu0 %v1770
    %v1933 = vpop.f32.mrb[0].mxu0
    %v1934 = vadd.f32 0.0, %v1933
    %v1935 = vpop.f32.mrb[0].mxu0
    %v1936 = vadd.f32 0.0, %v1935
    %1937 = vmatprep.mubr.f32.mxu0 0.0
    %1938 = vmatmul.mubr.f32.gmra.mrb[0].mxu0 %v1772
    %v1939 = vpop.f32.mrb[0].mxu0
    %v1940 = vadd.f32 0.0, %v1939
    %v1941 = vpop.f32.mrb[0].mxu0
    %v1942 = vadd.f32 0.0, %v1941
    %1943 = vmatprep.mubr.f32.mxu0 0.0
    %1944 = vmatmul.mubr.f32.gmra.mrb[0].mxu0 %v1774
    %v1945 = vpop.f32.mrb[0].mxu0
    %v1946 = vadd.f32 0.0, %v1945
    %v1947 = vpop.f32.mrb[0].mxu0
    %v1948 = vadd.f32 0.0, %v1947
    %1949 = vmatprep.mubr.f32.mxu0 0.0
    %1950 = vmatmul.mubr.f32.gmra.mrb[0].mxu0 %v1776
    %v1951 = vpop.f32.mrb[0].mxu0
    %v1952 = vadd.f32 0.0, %v1951
    %v1953 = vpop.f32.mrb[0].mxu0
    %v1954 = vadd.f32 0.0, %v1953
    %1955 = vdwg.mxu0
    %1956 = vmatprep.subr.mxu0 %v1739
    %1957 = vmatpush1.msra.mxu0 %v1738
    %1958 = vmatprep.subr.mxu0 %v1748
    %1959 = vmatpush1.msra.mxu0 %v1747
    %1960 = vmatprep.subr.mxu0 %v1757
    %1961 = vmatpush1.msra.mxu0 %v1756
    %1962 = vmatprep.subr.mxu0 %v1766
    %1963 = vmatpush1.msra.mxu0 %v1765
    %1964 = vmatprep.subr.mxu0 0.0
    %1965 = vmatpush1.msra.mxu0 0.0
    %1966 = vmatprep.subr.mxu0 0.0
    %1967 = vmatpush1.msra.mxu0 0.0
    %1968 = vmatprep.subr.mxu0 0.0
    %1969 = vmatpush1.msra.mxu0 0.0
    %1970 = vmatprep.subr.mxu0 0.0
    %1971 = vmatpush1.msra.mxu0 0.0
    %1972 = vmatprep.subr.mxu0 0.0
    %1973 = vmatpush1.msra.mxu0 0.0
    %1974 = vmatprep.subr.mxu0 0.0
    %1975 = vmatpush1.msra.mxu0 0.0
    %1976 = vmatprep.subr.mxu0 0.0
    %1977 = vmatpush1.msra.mxu0 0.0
    %1978 = vmatprep.subr.mxu0 0.0
    %1979 = vmatpush1.msra.mxu0 0.0
    %1980 = vmatprep.subr.mxu0 0.0
    %1981 = vmatpush1.msra.mxu0 0.0
    %1982 = vmatprep.subr.mxu0 0.0
    %1983 = vmatpush1.msra.mxu0 0.0
    %1984 = vmatprep.subr.mxu0 0.0
    %1985 = vmatpush1.msra.mxu0 0.0
    %1986 = vmatprep.subr.mxu0 0.0
    %1987 = vmatpush1.msra.mxu0 0.0
    %1988 = vmatprep.subr.mxu0 0.0
    %1989 = vmatpush1.msra.mxu0 0.0
    %1990 = vmatprep.subr.mxu0 0.0
    %1991 = vmatpush1.msra.mxu0 0.0
    %1992 = vmatprep.subr.mxu0 0.0
    %1993 = vmatpush1.msra.mxu0 0.0
    %1994 = vmatprep.subr.mxu0 0.0
    %1995 = vmatpush1.msra.mxu0 0.0
    %1996 = vmatprep.subr.mxu0 0.0
    %1997 = vmatpush1.msra.mxu0 0.0
    %1998 = vmatprep.subr.mxu0 0.0
    %1999 = vmatpush1.msra.mxu0 0.0
    %2000 = vmatprep.subr.mxu0 0.0
    %2001 = vmatpush1.msra.mxu0 0.0
    %2002 = vmatprep.subr.mxu0 0.0
    %2003 = vmatpush1.msra.mxu0 0.0
    %2004 = vmatprep.subr.mxu0 0.0
    %2005 = vmatpush1.msra.mxu0 0.0
    %2006 = vmatprep.subr.mxu0 0.0
    %2007 = vmatpush1.msra.mxu0 0.0
    %2008 = vmatprep.subr.mxu0 0.0
    %2009 = vmatpush1.msra.mxu0 0.0
    %2010 = vmatprep.subr.mxu0 0.0
    %2011 = vmatpush1.msra.mxu0 0.0
    %2012 = vmatprep.subr.mxu0 0.0
    %2013 = vmatpush1.msra.mxu0 0.0
    %2014 = vmatprep.subr.mxu0 0.0
    %2015 = vmatpush1.msra.mxu0 0.0
    %2016 = vmatprep.subr.mxu0 0.0
    %2017 = vmatpush1.msra.mxu0 0.0
    %2018 = vmatprep.subr.mxu0 0.0
    %2019 = vmatpush1.msra.mxu0 0.0
    %2020 = vmatprep.mubr.f32.mxu0 0.0
    %2021 = vmatmul.mubr.f32.gmra.mrb[0].mxu0 %v1770
    %v2022 = vpop.f32.mrb[0].mxu0
    %v2023 = vadd.f32 0.0, %v2022
    %v2024 = vpop.f32.mrb[0].mxu0
    %v2025 = vadd.f32 0.0, %v2024
    %2026 = vmatprep.mubr.f32.mxu0 0.0
    %2027 = vmatmul.mubr.f32.gmra.mrb[0].mxu0 %v1772
    %v2028 = vpop.f32.mrb[0].mxu0
    %v2029 = vadd.f32 0.0, %v2028
    %v2030 = vpop.f32.mrb[0].mxu0
    %v2031 = vadd.f32 0.0, %v2030
    %2032 = vmatprep.mubr.f32.mxu0 0.0
    %2033 = vmatmul.mubr.f32.gmra.mrb[0].mxu0 %v1774
    %v2034 = vpop.f32.mrb[0].mxu0
    %v2035 = vadd.f32 0.0, %v2034
    %v2036 = vpop.f32.mrb[0].mxu0
    %v2037 = vadd.f32 0.0, %v2036
    %2038 = vmatprep.mubr.f32.mxu0 0.0
    %2039 = vmatmul.mubr.f32.gmra.mrb[0].mxu0 %v1776
    %v2040 = vpop.f32.mrb[0].mxu0
    %v2041 = vadd.f32 0.0, %v2040
    %v2042 = vpop.f32.mrb[0].mxu0
    %v2043 = vadd.f32 0.0, %v2042
    %2044 = vdwg.mxu0
    %2045 = vmatprep.subr.mxu0 %v1741
    %2046 = vmatpush1.msra.mxu0 %v1740
    %2047 = vmatprep.subr.mxu0 %v1750
    %2048 = vmatpush1.msra.mxu0 %v1749
    %2049 = vmatprep.subr.mxu0 %v1759
    %2050 = vmatpush1.msra.mxu0 %v1758
    %2051 = vmatprep.subr.mxu0 %v1768
    %2052 = vmatpush1.msra.mxu0 %v1767
    %2053 = vmatprep.subr.mxu0 0.0
    %2054 = vmatpush1.msra.mxu0 0.0
    %2055 = vmatprep.subr.mxu0 0.0
    %2056 = vmatpush1.msra.mxu0 0.0
    %2057 = vmatprep.subr.mxu0 0.0
    %2058 = vmatpush1.msra.mxu0 0.0
    %2059 = vmatprep.subr.mxu0 0.0
    %2060 = vmatpush1.msra.mxu0 0.0
    %2061 = vmatprep.subr.mxu0 0.0
    %2062 = vmatpush1.msra.mxu0 0.0
    %2063 = vmatprep.subr.mxu0 0.0
    %2064 = vmatpush1.msra.mxu0 0.0
    %2065 = vmatprep.subr.mxu0 0.0
    %2066 = vmatpush1.msra.mxu0 0.0
    %2067 = vmatprep.subr.mxu0 0.0
    %2068 = vmatpush1.msra.mxu0 0.0
    %2069 = vmatprep.subr.mxu0 0.0
    %2070 = vmatpush1.msra.mxu0 0.0
    %2071 = vmatprep.subr.mxu0 0.0
    %2072 = vmatpush1.msra.mxu0 0.0
    %2073 = vmatprep.subr.mxu0 0.0
    %2074 = vmatpush1.msra.mxu0 0.0
    %2075 = vmatprep.subr.mxu0 0.0
    %2076 = vmatpush1.msra.mxu0 0.0
    %2077 = vmatprep.subr.mxu0 0.0
    %2078 = vmatpush1.msra.mxu0 0.0
    %2079 = vmatprep.subr.mxu0 0.0
    %2080 = vmatpush1.msra.mxu0 0.0
    %2081 = vmatprep.subr.mxu0 0.0
    %2082 = vmatpush1.msra.mxu0 0.0
    %2083 = vmatprep.subr.mxu0 0.0
    %2084 = vmatpush1.msra.mxu0 0.0
    %2085 = vmatprep.subr.mxu0 0.0
    %2086 = vmatpush1.msra.mxu0 0.0
    %2087 = vmatprep.subr.mxu0 0.0
    %2088 = vmatpush1.msra.mxu0 0.0
    %2089 = vmatprep.subr.mxu0 0.0
    %2090 = vmatpush1.msra.mxu0 0.0
    %2091 = vmatprep.subr.mxu0 0.0
    %2092 = vmatpush1.msra.mxu0 0.0
    %2093 = vmatprep.subr.mxu0 0.0
    %2094 = vmatpush1.msra.mxu0 0.0
    %2095 = vmatprep.subr.mxu0 0.0
    %2096 = vmatpush1.msra.mxu0 0.0
    %2097 = vmatprep.subr.mxu0 0.0
    %2098 = vmatpush1.msra.mxu0 0.0
    %2099 = vmatprep.subr.mxu0 0.0
    %2100 = vmatpush1.msra.mxu0 0.0
    %2101 = vmatprep.subr.mxu0 0.0
    %2102 = vmatpush1.msra.mxu0 0.0
    %2103 = vmatprep.subr.mxu0 0.0
    %2104 = vmatpush1.msra.mxu0 0.0
    %2105 = vmatprep.subr.mxu0 0.0
    %2106 = vmatpush1.msra.mxu0 0.0
    %2107 = vmatprep.subr.mxu0 0.0
    %2108 = vmatpush1.msra.mxu0 0.0
    %2109 = vmatprep.mubr.f32.mxu0 0.0
    %2110 = vmatmul.mubr.f32.gmra.mrb[0].mxu0 %v1770
    %v2111 = vpop.f32.mrb[0].mxu0
    %v2112 = vadd.f32 0.0, %v2111
    %v2113 = vpop.f32.mrb[0].mxu0
    %v2114 = vadd.f32 0.0, %v2113
    %2115 = vmatprep.mubr.f32.mxu0 0.0
    %2116 = vmatmul.mubr.f32.gmra.mrb[0].mxu0 %v1772
    %v2117 = vpop.f32.mrb[0].mxu0
    %v2118 = vadd.f32 0.0, %v2117
    %v2119 = vpop.f32.mrb[0].mxu0
    %v2120 = vadd.f32 0.0, %v2119
    %2121 = vmatprep.mubr.f32.mxu0 0.0
    %2122 = vmatmul.mubr.f32.gmra.mrb[0].mxu0 %v1774
    %v2123 = vpop.f32.mrb[0].mxu0
    %v2124 = vadd.f32 0.0, %v2123
    %v2125 = vpop.f32.mrb[0].mxu0
    %v2126 = vadd.f32 0.0, %v2125
    %2127 = vmatprep.mubr.f32.mxu0 0.0
    %2128 = vmatmul.mubr.f32.gmra.mrb[0].mxu0 %v1776
    %v2129 = vpop.f32.mrb[0].mxu0
    %v2130 = vadd.f32 0.0, %v2129
    %v2131 = vpop.f32.mrb[0].mxu0
    %v2132 = vadd.f32 0.0, %v2131
    %2133 = vdwg.mxu0
    %2134 = vmatprep.subr.mxu0 0.0
    %2135 = vmatpush1.msra.mxu0 %v1742
    %2136 = vmatprep.subr.mxu0 0.0
    %2137 = vmatpush1.msra.mxu0 %v1751
    %2138 = vmatprep.subr.mxu0 0.0
    %2139 = vmatpush1.msra.mxu0 %v1760
    %2140 = vmatprep.subr.mxu0 0.0
    %2141 = vmatpush1.msra.mxu0 %v1769
    %2142 = vmatprep.subr.mxu0 0.0
    %2143 = vmatpush1.msra.mxu0 0.0
    %2144 = vmatprep.subr.mxu0 0.0
    %2145 = vmatpush1.msra.mxu0 0.0
    %2146 = vmatprep.subr.mxu0 0.0
    %2147 = vmatpush1.msra.mxu0 0.0
    %2148 = vmatprep.subr.mxu0 0.0
    %2149 = vmatpush1.msra.mxu0 0.0
    %2150 = vmatprep.subr.mxu0 0.0
    %2151 = vmatpush1.msra.mxu0 0.0
    %2152 = vmatprep.subr.mxu0 0.0
    %2153 = vmatpush1.msra.mxu0 0.0
    %2154 = vmatprep.subr.mxu0 0.0
    %2155 = vmatpush1.msra.mxu0 0.0
    %2156 = vmatprep.subr.mxu0 0.0
    %2157 = vmatpush1.msra.mxu0 0.0
    %2158 = vmatprep.subr.mxu0 0.0
    %2159 = vmatpush1.msra.mxu0 0.0
    %2160 = vmatprep.subr.mxu0 0.0
    %2161 = vmatpush1.msra.mxu0 0.0
    %2162 = vmatprep.subr.mxu0 0.0
    %2163 = vmatpush1.msra.mxu0 0.0
    %2164 = vmatprep.subr.mxu0 0.0
    %2165 = vmatpush1.msra.mxu0 0.0
    %2166 = vmatprep.subr.mxu0 0.0
    %2167 = vmatpush1.msra.mxu0 0.0
    %2168 = vmatprep.subr.mxu0 0.0
    %2169 = vmatpush1.msra.mxu0 0.0
    %2170 = vmatprep.subr.mxu0 0.0
    %2171 = vmatpush1.msra.mxu0 0.0
    %2172 = vmatprep.subr.mxu0 0.0
    %2173 = vmatpush1.msra.mxu0 0.0
    %2174 = vmatprep.subr.mxu0 0.0
    %2175 = vmatpush1.msra.mxu0 0.0
    %2176 = vmatprep.subr.mxu0 0.0
    %2177 = vmatpush1.msra.mxu0 0.0
    %2178 = vmatprep.subr.mxu0 0.0
    %2179 = vmatpush1.msra.mxu0 0.0
    %2180 = vmatprep.subr.mxu0 0.0
    %2181 = vmatpush1.msra.mxu0 0.0
    %2182 = vmatprep.subr.mxu0 0.0
    %2183 = vmatpush1.msra.mxu0 0.0
    %2184 = vmatprep.subr.mxu0 0.0
    %2185 = vmatpush1.msra.mxu0 0.0
    %2186 = vmatprep.subr.mxu0 0.0
    %2187 = vmatpush1.msra.mxu0 0.0
    %2188 = vmatprep.subr.mxu0 0.0
    %2189 = vmatpush1.msra.mxu0 0.0
    %2190 = vmatprep.subr.mxu0 0.0
    %2191 = vmatpush1.msra.mxu0 0.0
    %2192 = vmatprep.subr.mxu0 0.0
    %2193 = vmatpush1.msra.mxu0 0.0
    %2194 = vmatprep.subr.mxu0 0.0
    %2195 = vmatpush1.msra.mxu0 0.0
    %2196 = vmatprep.subr.mxu0 0.0
    %2197 = vmatpush1.msra.mxu0 0.0
    %2198 = vmatprep.mubr.f32.mxu0 0.0
    %2199 = vmatmul.mubr.f32.gmra.mrb[0].mxu0 %v1770
    %v2200 = vpop.f32.mrb[0].mxu0
    %v2201 = vadd.f32 0.0, %v2200
    %v2202 = vpop.f32.mrb[0].mxu0
    %2203 = vmatprep.mubr.f32.mxu0 0.0
    %2204 = vmatmul.mubr.f32.gmra.mrb[0].mxu0 %v1772
    %v2205 = vpop.f32.mrb[0].mxu0
    %v2206 = vadd.f32 0.0, %v2205
    %v2207 = vpop.f32.mrb[0].mxu0
    %2208 = vmatprep.mubr.f32.mxu0 0.0
    %2209 = vmatmul.mubr.f32.gmra.mrb[0].mxu0 %v1774
    %v2210 = vpop.f32.mrb[0].mxu0
    %v2211 = vadd.f32 0.0, %v2210
    %v2212 = vpop.f32.mrb[0].mxu0
    %2213 = vmatprep.mubr.f32.mxu0 0.0
    %2214 = vmatmul.mubr.f32.gmra.mrb[0].mxu0 %v1776
    %v2215 = vpop.f32.mrb[0].mxu0
    %v2216 = vadd.f32 0.0, %v2215
    %v2217 = vpop.f32.mrb[0].mxu0
    %2218 = vdwg.mxu0
    %v2219 = vadd.f32 %v1686, %v1845
    %v2220 = vadd.f32 %v1687, %v1847
    %v2221 = vadd.f32 %v1688, %v1934
    %v2222 = vadd.f32 %v1689, %v1936
    %v2223 = vadd.f32 %v1690, %v2023
    %v2224 = vadd.f32 %v1691, %v2025
    %v2225 = vadd.f32 %v1692, %v2112
    %v2226 = vadd.f32 %v1693, %v2114
    %v2227 = vadd.f32 %v1694, %v2201
    %v2228 = vadd.f32 %v1695, %v1851
    %v2229 = vadd.f32 %v1696, %v1853
    %v2230 = vadd.f32 %v1697, %v1940
    %v2231 = vadd.f32 %v1698, %v1942
    %v2232 = vadd.f32 %v1699, %v2029
    %v2233 = vadd.f32 %v1700, %v2031
    %v2234 = vadd.f32 %v1701, %v2118
    %v2235 = vadd.f32 %v1702, %v2120
    %v2236 = vadd.f32 %v1703, %v2206
    %v2237 = vadd.f32 %v1704, %v1857
    %v2238 = vadd.f32 %v1705, %v1859
    %v2239 = vadd.f32 %v1706, %v1946
    %v2240 = vadd.f32 %v1707, %v1948
    %v2241 = vadd.f32 %v1708, %v2035
    %v2242 = vadd.f32 %v1709, %v2037
    %v2243 = vadd.f32 %v1710, %v2124
    %v2244 = vadd.f32 %v1711, %v2126
    %v2245 = vadd.f32 %v1712, %v2211
    %v2246 = vadd.f32 %v1713, %v1863
    %v2247 = vadd.f32 %v1714, %v1865
    %v2248 = vadd.f32 %v1715, %v1952
    %v2249 = vadd.f32 %v1716, %v1954
    %v2250 = vadd.f32 %v1717, %v2041
    %v2251 = vadd.f32 %v1718, %v2043
    %v2252 = vadd.f32 %v1719, %v2130
    %v2253 = vadd.f32 %v1720, %v2132
    %v2254 = vadd.f32 %v1721, %v2216
    %v2255 = vrot.slane %v195, 4
    %v2256 = vrot.slane %v196, 4
    %v2257 = vsel %vm94, %v2255, %v2256
    %v2258 = vrot.slane %v197, 4
    %v2259 = vsel %vm94, %v2256, %v2258
    %v2260 = vrot.slane %v198, 4
    %v2261 = vrot.slane %v199, 4
    %v2262 = vsel %vm94, %v2260, %v2261
    %v2263 = vrot.slane %v200, 4
    %v2264 = vsel %vm94, %v2261, %v2263
    %s2265 = scalar_lea.vmem %s2, 1152
    %v2266 = vld [vmem:[%s2265] sm:$0xff]
    %v2267 = vld [vmem:[%s2265 + $0x8] sm:$0xff]
    %v2268 = vld [vmem:[%s2265 + $0x10] sm:$0xff]
    %v2269 = vld [vmem:[%s2265 + $0x18] sm:$0xff]
    %v2270 = vld [vmem:[%s2265 + $0x20] sm:$0xff]
    %v2271 = vld [vmem:[%s2265 + $0x28] sm:$0xff]
    %v2272 = vld [vmem:[%s2265 + $0x30] sm:$0xff]
    %v2273 = vld [vmem:[%s2265 + $0x38] sm:$0xff]
    %v2274 = vld [vmem:[%s2265 + $0x40] sm:$0xff]
    %v2275 = vld [vmem:[%s2265 + $0x48] sm:$0xff]
    %v2276 = vld [vmem:[%s2265 + $0x50] sm:$0xff]
    %v2277 = vld [vmem:[%s2265 + $0x58] sm:$0xff]
    %v2278 = vld [vmem:[%s2265 + $0x60] sm:$0xff]
    %v2279 = vld [vmem:[%s2265 + $0x68] sm:$0xff]
    %v2280 = vld [vmem:[%s2265 + $0x70] sm:$0xff]
    %v2281 = vld [vmem:[%s2265 + $0x78] sm:$0xff]
    %v2282 = vld [vmem:[%s2265 + $0x80] sm:$0xff]
    %v2283 = vld [vmem:[%s2265 + $0x88] sm:$0xff]
    %v2284 = vld [vmem:[%s2265 + $0x90] sm:$0xff]
    %v2285 = vld [vmem:[%s2265 + $0x98] sm:$0xff]
    %v2286 = vld [vmem:[%s2265 + $0xa0] sm:$0xff]
    %v2287 = vld [vmem:[%s2265 + $0xa8] sm:$0xff]
    %v2288 = vld [vmem:[%s2265 + $0xb0] sm:$0xff]
    %v2289 = vld [vmem:[%s2265 + $0xb8] sm:$0xff]
    %v2290 = vld [vmem:[%s2265 + $0xc0] sm:$0xff]
    %v2291 = vld [vmem:[%s2265 + $0xc8] sm:$0xff]
    %v2292 = vld [vmem:[%s2265 + $0xd0] sm:$0xff]
    %v2293 = vld [vmem:[%s2265 + $0xd8] sm:$0xff]
    %v2294 = vld [vmem:[%s2265 + $0xe0] sm:$0xff]
    %v2295 = vld [vmem:[%s2265 + $0xe8] sm:$0xff]
    %v2296 = vld [vmem:[%s2265 + $0xf0] sm:$0xff]
    %v2297 = vld [vmem:[%s2265 + $0xf8] sm:$0xff]
    %v2298 = vld [vmem:[%s2265 + $0x100] sm:$0xff]
    %v2299 = vld [vmem:[%s2265 + $0x108] sm:$0xff]
    %v2300 = vld [vmem:[%s2265 + $0x110] sm:$0xff]
    %v2301 = vld [vmem:[%s2265 + $0x118] sm:$0xff]
    %v2302 = vsel %vm183, %v2257, 0
    %v2304 = vsel %vm183, %v2259, 0
    %v2306 = vsel %vm183, %v2262, 0
    %v2308 = vsel %vm183, %v2264, 0
    %2310 = vmatprep.subr.mxu0 %v2267
    %2311 = vmatpush1.msra.mxu0 %v2266
    %2312 = vmatprep.subr.mxu0 %v2276
    %2313 = vmatpush1.msra.mxu0 %v2275
    %2314 = vmatprep.subr.mxu0 %v2285
    %2315 = vmatpush1.msra.mxu0 %v2284
    %2316 = vmatprep.subr.mxu0 %v2294
    %2317 = vmatpush1.msra.mxu0 %v2293
    %2318 = vmatprep.subr.mxu0 0.0
    %2319 = vmatpush1.msra.mxu0 0.0
    %2320 = vmatprep.subr.mxu0 0.0
    %2321 = vmatpush1.msra.mxu0 0.0
    %2322 = vmatprep.subr.mxu0 0.0
    %2323 = vmatpush1.msra.mxu0 0.0
    %2324 = vmatprep.subr.mxu0 0.0
    %2325 = vmatpush1.msra.mxu0 0.0
    %2326 = vmatprep.subr.mxu0 0.0
    %2327 = vmatpush1.msra.mxu0 0.0
    %2328 = vmatprep.subr.mxu0 0.0
    %2329 = vmatpush1.msra.mxu0 0.0
    %2330 = vmatprep.subr.mxu0 0.0
    %2331 = vmatpush1.msra.mxu0 0.0
    %2332 = vmatprep.subr.mxu0 0.0
    %2333 = vmatpush1.msra.mxu0 0.0
    %2334 = vmatprep.subr.mxu0 0.0
    %2335 = vmatpush1.msra.mxu0 0.0
    %2336 = vmatprep.subr.mxu0 0.0
    %2337 = vmatpush1.msra.mxu0 0.0
    %2338 = vmatprep.subr.mxu0 0.0
    %2339 = vmatpush1.msra.mxu0 0.0
    %2340 = vmatprep.subr.mxu0 0.0
    %2341 = vmatpush1.msra.mxu0 0.0
    %2342 = vmatprep.subr.mxu0 0.0
    %2343 = vmatpush1.msra.mxu0 0.0
    %2344 = vmatprep.subr.mxu0 0.0
    %2345 = vmatpush1.msra.mxu0 0.0
    %2346 = vmatprep.subr.mxu0 0.0
    %2347 = vmatpush1.msra.mxu0 0.0
    %2348 = vmatprep.subr.mxu0 0.0
    %2349 = vmatpush1.msra.mxu0 0.0
    %2350 = vmatprep.subr.mxu0 0.0
    %2351 = vmatpush1.msra.mxu0 0.0
    %2352 = vmatprep.subr.mxu0 0.0
    %2353 = vmatpush1.msra.mxu0 0.0
    %2354 = vmatprep.subr.mxu0 0.0
    %2355 = vmatpush1.msra.mxu0 0.0
    %2356 = vmatprep.subr.mxu0 0.0
    %2357 = vmatpush1.msra.mxu0 0.0
    %2358 = vmatprep.subr.mxu0 0.0
    %2359 = vmatpush1.msra.mxu0 0.0
    %2360 = vmatprep.subr.mxu0 0.0
    %2361 = vmatpush1.msra.mxu0 0.0
    %2362 = vmatprep.subr.mxu0 0.0
    %2363 = vmatpush1.msra.mxu0 0.0
    %2364 = vmatprep.subr.mxu0 0.0
    %2365 = vmatpush1.msra.mxu0 0.0
    %2366 = vmatprep.subr.mxu0 0.0
    %2367 = vmatpush1.msra.mxu0 0.0
    %2368 = vmatprep.subr.mxu0 0.0
    %2369 = vmatpush1.msra.mxu0 0.0
    %2370 = vmatprep.subr.mxu0 0.0
    %2371 = vmatpush1.msra.mxu0 0.0
    %2372 = vmatprep.subr.mxu0 0.0
    %2373 = vmatpush1.msra.mxu0 0.0
    %2374 = vmatprep.mubr.f32.mxu0 0.0
    %2375 = vmatmul.mubr.f32.gmra.mrb[0].mxu0 %v2302
    %v2376 = vpop.f32.mrb[0].mxu0
    %v2377 = vadd.f32 0.0, %v2376
    %v2378 = vpop.f32.mrb[0].mxu0
    %v2379 = vadd.f32 0.0, %v2378
    %2380 = vmatprep.mubr.f32.mxu0 0.0
    %2381 = vmatmul.mubr.f32.gmra.mrb[0].mxu0 %v2304
    %v2382 = vpop.f32.mrb[0].mxu0
    %v2383 = vadd.f32 0.0, %v2382
    %v2384 = vpop.f32.mrb[0].mxu0
    %v2385 = vadd.f32 0.0, %v2384
    %2386 = vmatprep.mubr.f32.mxu0 0.0
    %2387 = vmatmul.mubr.f32.gmra.mrb[0].mxu0 %v2306
    %v2388 = vpop.f32.mrb[0].mxu0
    %v2389 = vadd.f32 0.0, %v2388
    %v2390 = vpop.f32.mrb[0].mxu0
    %v2391 = vadd.f32 0.0, %v2390
    %2392 = vmatprep.mubr.f32.mxu0 0.0
    %2393 = vmatmul.mubr.f32.gmra.mrb[0].mxu0 %v2308
    %v2394 = vpop.f32.mrb[0].mxu0
    %v2395 = vadd.f32 0.0, %v2394
    %v2396 = vpop.f32.mrb[0].mxu0
    %v2397 = vadd.f32 0.0, %v2396
    %2398 = vdwg.mxu0
    %2399 = vmatprep.subr.mxu0 %v2269
    %2400 = vmatpush1.msra.mxu0 %v2268
    %2401 = vmatprep.subr.mxu0 %v2278
    %2402 = vmatpush1.msra.mxu0 %v2277
    %2403 = vmatprep.subr.mxu0 %v2287
    %2404 = vmatpush1.msra.mxu0 %v2286
    %2405 = vmatprep.subr.mxu0 %v2296
    %2406 = vmatpush1.msra.mxu0 %v2295
    %2407 = vmatprep.subr.mxu0 0.0
    %2408 = vmatpush1.msra.mxu0 0.0
    %2409 = vmatprep.subr.mxu0 0.0
    %2410 = vmatpush1.msra.mxu0 0.0
    %2411 = vmatprep.subr.mxu0 0.0
    %2412 = vmatpush1.msra.mxu0 0.0
    %2413 = vmatprep.subr.mxu0 0.0
    %2414 = vmatpush1.msra.mxu0 0.0
    %2415 = vmatprep.subr.mxu0 0.0
    %2416 = vmatpush1.msra.mxu0 0.0
    %2417 = vmatprep.subr.mxu0 0.0
    %2418 = vmatpush1.msra.mxu0 0.0
    %2419 = vmatprep.subr.mxu0 0.0
    %2420 = vmatpush1.msra.mxu0 0.0
    %2421 = vmatprep.subr.mxu0 0.0
    %2422 = vmatpush1.msra.mxu0 0.0
    %2423 = vmatprep.subr.mxu0 0.0
    %2424 = vmatpush1.msra.mxu0 0.0
    %2425 = vmatprep.subr.mxu0 0.0
    %2426 = vmatpush1.msra.mxu0 0.0
    %2427 = vmatprep.subr.mxu0 0.0
    %2428 = vmatpush1.msra.mxu0 0.0
    %2429 = vmatprep.subr.mxu0 0.0
    %2430 = vmatpush1.msra.mxu0 0.0
    %2431 = vmatprep.subr.mxu0 0.0
    %2432 = vmatpush1.msra.mxu0 0.0
    %2433 = vmatprep.subr.mxu0 0.0
    %2434 = vmatpush1.msra.mxu0 0.0
    %2435 = vmatprep.subr.mxu0 0.0
    %2436 = vmatpush1.msra.mxu0 0.0
    %2437 = vmatprep.subr.mxu0 0.0
    %2438 = vmatpush1.msra.mxu0 0.0
    %2439 = vmatprep.subr.mxu0 0.0
    %2440 = vmatpush1.msra.mxu0 0.0
    %2441 = vmatprep.subr.mxu0 0.0
    %2442 = vmatpush1.msra.mxu0 0.0
    %2443 = vmatprep.subr.mxu0 0.0
    %2444 = vmatpush1.msra.mxu0 0.0
    %2445 = vmatprep.subr.mxu0 0.0
    %2446 = vmatpush1.msra.mxu0 0.0
    %2447 = vmatprep.subr.mxu0 0.0
    %2448 = vmatpush1.msra.mxu0 0.0
    %2449 = vmatprep.subr.mxu0 0.0
    %2450 = vmatpush1.msra.mxu0 0.0
    %2451 = vmatprep.subr.mxu0 0.0
    %2452 = vmatpush1.msra.mxu0 0.0
    %2453 = vmatprep.subr.mxu0 0.0
    %2454 = vmatpush1.msra.mxu0 0.0
    %2455 = vmatprep.subr.mxu0 0.0
    %2456 = vmatpush1.msra.mxu0 0.0
    %2457 = vmatprep.subr.mxu0 0.0
    %2458 = vmatpush1.msra.mxu0 0.0
    %2459 = vmatprep.subr.mxu0 0.0
    %2460 = vmatpush1.msra.mxu0 0.0
    %2461 = vmatprep.subr.mxu0 0.0
    %2462 = vmatpush1.msra.mxu0 0.0
    %2463 = vmatprep.mubr.f32.mxu0 0.0
    %2464 = vmatmul.mubr.f32.gmra.mrb[0].mxu0 %v2302
    %v2465 = vpop.f32.mrb[0].mxu0
    %v2466 = vadd.f32 0.0, %v2465
    %v2467 = vpop.f32.mrb[0].mxu0
    %v2468 = vadd.f32 0.0, %v2467
    %2469 = vmatprep.mubr.f32.mxu0 0.0
    %2470 = vmatmul.mubr.f32.gmra.mrb[0].mxu0 %v2304
    %v2471 = vpop.f32.mrb[0].mxu0
    %v2472 = vadd.f32 0.0, %v2471
    %v2473 = vpop.f32.mrb[0].mxu0
    %v2474 = vadd.f32 0.0, %v2473
    %2475 = vmatprep.mubr.f32.mxu0 0.0
    %2476 = vmatmul.mubr.f32.gmra.mrb[0].mxu0 %v2306
    %v2477 = vpop.f32.mrb[0].mxu0
    %v2478 = vadd.f32 0.0, %v2477
    %v2479 = vpop.f32.mrb[0].mxu0
    %v2480 = vadd.f32 0.0, %v2479
    %2481 = vmatprep.mubr.f32.mxu0 0.0
    %2482 = vmatmul.mubr.f32.gmra.mrb[0].mxu0 %v2308
    %v2483 = vpop.f32.mrb[0].mxu0
    %v2484 = vadd.f32 0.0, %v2483
    %v2485 = vpop.f32.mrb[0].mxu0
    %v2486 = vadd.f32 0.0, %v2485
    %2487 = vdwg.mxu0
    %2488 = vmatprep.subr.mxu0 %v2271
    %2489 = vmatpush1.msra.mxu0 %v2270
    %2490 = vmatprep.subr.mxu0 %v2280
    %2491 = vmatpush1.msra.mxu0 %v2279
    %2492 = vmatprep.subr.mxu0 %v2289
    %2493 = vmatpush1.msra.mxu0 %v2288
    %2494 = vmatprep.subr.mxu0 %v2298
    %2495 = vmatpush1.msra.mxu0 %v2297
    %2496 = vmatprep.subr.mxu0 0.0
    %2497 = vmatpush1.msra.mxu0 0.0
    %2498 = vmatprep.subr.mxu0 0.0
    %2499 = vmatpush1.msra.mxu0 0.0
    %2500 = vmatprep.subr.mxu0 0.0
    %2501 = vmatpush1.msra.mxu0 0.0
    %2502 = vmatprep.subr.mxu0 0.0
    %2503 = vmatpush1.msra.mxu0 0.0
    %2504 = vmatprep.subr.mxu0 0.0
    %2505 = vmatpush1.msra.mxu0 0.0
    %2506 = vmatprep.subr.mxu0 0.0
    %2507 = vmatpush1.msra.mxu0 0.0
    %2508 = vmatprep.subr.mxu0 0.0
    %2509 = vmatpush1.msra.mxu0 0.0
    %2510 = vmatprep.subr.mxu0 0.0
    %2511 = vmatpush1.msra.mxu0 0.0
    %2512 = vmatprep.subr.mxu0 0.0
    %2513 = vmatpush1.msra.mxu0 0.0
    %2514 = vmatprep.subr.mxu0 0.0
    %2515 = vmatpush1.msra.mxu0 0.0
    %2516 = vmatprep.subr.mxu0 0.0
    %2517 = vmatpush1.msra.mxu0 0.0
    %2518 = vmatprep.subr.mxu0 0.0
    %2519 = vmatpush1.msra.mxu0 0.0
    %2520 = vmatprep.subr.mxu0 0.0
    %2521 = vmatpush1.msra.mxu0 0.0
    %2522 = vmatprep.subr.mxu0 0.0
    %2523 = vmatpush1.msra.mxu0 0.0
    %2524 = vmatprep.subr.mxu0 0.0
    %2525 = vmatpush1.msra.mxu0 0.0
    %2526 = vmatprep.subr.mxu0 0.0
    %2527 = vmatpush1.msra.mxu0 0.0
    %2528 = vmatprep.subr.mxu0 0.0
    %2529 = vmatpush1.msra.mxu0 0.0
    %2530 = vmatprep.subr.mxu0 0.0
    %2531 = vmatpush1.msra.mxu0 0.0
    %2532 = vmatprep.subr.mxu0 0.0
    %2533 = vmatpush1.msra.mxu0 0.0
    %2534 = vmatprep.subr.mxu0 0.0
    %2535 = vmatpush1.msra.mxu0 0.0
    %2536 = vmatprep.subr.mxu0 0.0
    %2537 = vmatpush1.msra.mxu0 0.0
    %2538 = vmatprep.subr.mxu0 0.0
    %2539 = vmatpush1.msra.mxu0 0.0
    %2540 = vmatprep.subr.mxu0 0.0
    %2541 = vmatpush1.msra.mxu0 0.0
    %2542 = vmatprep.subr.mxu0 0.0
    %2543 = vmatpush1.msra.mxu0 0.0
    %2544 = vmatprep.subr.mxu0 0.0
    %2545 = vmatpush1.msra.mxu0 0.0
    %2546 = vmatprep.subr.mxu0 0.0
    %2547 = vmatpush1.msra.mxu0 0.0
    %2548 = vmatprep.subr.mxu0 0.0
    %2549 = vmatpush1.msra.mxu0 0.0
    %2550 = vmatprep.subr.mxu0 0.0
    %2551 = vmatpush1.msra.mxu0 0.0
    %2552 = vmatprep.mubr.f32.mxu0 0.0
    %2553 = vmatmul.mubr.f32.gmra.mrb[0].mxu0 %v2302
    %v2554 = vpop.f32.mrb[0].mxu0
    %v2555 = vadd.f32 0.0, %v2554
    %v2556 = vpop.f32.mrb[0].mxu0
    %v2557 = vadd.f32 0.0, %v2556
    %2558 = vmatprep.mubr.f32.mxu0 0.0
    %2559 = vmatmul.mubr.f32.gmra.mrb[0].mxu0 %v2304
    %v2560 = vpop.f32.mrb[0].mxu0
    %v2561 = vadd.f32 0.0, %v2560
    %v2562 = vpop.f32.mrb[0].mxu0
    %v2563 = vadd.f32 0.0, %v2562
    %2564 = vmatprep.mubr.f32.mxu0 0.0
    %2565 = vmatmul.mubr.f32.gmra.mrb[0].mxu0 %v2306
    %v2566 = vpop.f32.mrb[0].mxu0
    %v2567 = vadd.f32 0.0, %v2566
    %v2568 = vpop.f32.mrb[0].mxu0
    %v2569 = vadd.f32 0.0, %v2568
    %2570 = vmatprep.mubr.f32.mxu0 0.0
    %2571 = vmatmul.mubr.f32.gmra.mrb[0].mxu0 %v2308
    %v2572 = vpop.f32.mrb[0].mxu0
    %v2573 = vadd.f32 0.0, %v2572
    %v2574 = vpop.f32.mrb[0].mxu0
    %v2575 = vadd.f32 0.0, %v2574
    %2576 = vdwg.mxu0
    %2577 = vmatprep.subr.mxu0 %v2273
    %2578 = vmatpush1.msra.mxu0 %v2272
    %2579 = vmatprep.subr.mxu0 %v2282
    %2580 = vmatpush1.msra.mxu0 %v2281
    %2581 = vmatprep.subr.mxu0 %v2291
    %2582 = vmatpush1.msra.mxu0 %v2290
    %2583 = vmatprep.subr.mxu0 %v2300
    %2584 = vmatpush1.msra.mxu0 %v2299
    %2585 = vmatprep.subr.mxu0 0.0
    %2586 = vmatpush1.msra.mxu0 0.0
    %2587 = vmatprep.subr.mxu0 0.0
    %2588 = vmatpush1.msra.mxu0 0.0
    %2589 = vmatprep.subr.mxu0 0.0
    %2590 = vmatpush1.msra.mxu0 0.0
    %2591 = vmatprep.subr.mxu0 0.0
    %2592 = vmatpush1.msra.mxu0 0.0
    %2593 = vmatprep.subr.mxu0 0.0
    %2594 = vmatpush1.msra.mxu0 0.0
    %2595 = vmatprep.subr.mxu0 0.0
    %2596 = vmatpush1.msra.mxu0 0.0
    %2597 = vmatprep.subr.mxu0 0.0
    %2598 = vmatpush1.msra.mxu0 0.0
    %2599 = vmatprep.subr.mxu0 0.0
    %2600 = vmatpush1.msra.mxu0 0.0
    %2601 = vmatprep.subr.mxu0 0.0
    %2602 = vmatpush1.msra.mxu0 0.0
    %2603 = vmatprep.subr.mxu0 0.0
    %2604 = vmatpush1.msra.mxu0 0.0
    %2605 = vmatprep.subr.mxu0 0.0
    %2606 = vmatpush1.msra.mxu0 0.0
    %2607 = vmatprep.subr.mxu0 0.0
    %2608 = vmatpush1.msra.mxu0 0.0
    %2609 = vmatprep.subr.mxu0 0.0
    %2610 = vmatpush1.msra.mxu0 0.0
    %2611 = vmatprep.subr.mxu0 0.0
    %2612 = vmatpush1.msra.mxu0 0.0
    %2613 = vmatprep.subr.mxu0 0.0
    %2614 = vmatpush1.msra.mxu0 0.0
    %2615 = vmatprep.subr.mxu0 0.0
    %2616 = vmatpush1.msra.mxu0 0.0
    %2617 = vmatprep.subr.mxu0 0.0
    %2618 = vmatpush1.msra.mxu0 0.0
    %2619 = vmatprep.subr.mxu0 0.0
    %2620 = vmatpush1.msra.mxu0 0.0
    %2621 = vmatprep.subr.mxu0 0.0
    %2622 = vmatpush1.msra.mxu0 0.0
    %2623 = vmatprep.subr.mxu0 0.0
    %2624 = vmatpush1.msra.mxu0 0.0
    %2625 = vmatprep.subr.mxu0 0.0
    %2626 = vmatpush1.msra.mxu0 0.0
    %2627 = vmatprep.subr.mxu0 0.0
    %2628 = vmatpush1.msra.mxu0 0.0
    %2629 = vmatprep.subr.mxu0 0.0
    %2630 = vmatpush1.msra.mxu0 0.0
    %2631 = vmatprep.subr.mxu0 0.0
    %2632 = vmatpush1.msra.mxu0 0.0
    %2633 = vmatprep.subr.mxu0 0.0
    %2634 = vmatpush1.msra.mxu0 0.0
    %2635 = vmatprep.subr.mxu0 0.0
    %2636 = vmatpush1.msra.mxu0 0.0
    %2637 = vmatprep.subr.mxu0 0.0
    %2638 = vmatpush1.msra.mxu0 0.0
    %2639 = vmatprep.subr.mxu0 0.0
    %2640 = vmatpush1.msra.mxu0 0.0
    %2641 = vmatprep.mubr.f32.mxu0 0.0
    %2642 = vmatmul.mubr.f32.gmra.mrb[0].mxu0 %v2302
    %v2643 = vpop.f32.mrb[0].mxu0
    %v2644 = vadd.f32 0.0, %v2643
    %v2645 = vpop.f32.mrb[0].mxu0
    %v2646 = vadd.f32 0.0, %v2645
    %2647 = vmatprep.mubr.f32.mxu0 0.0
    %2648 = vmatmul.mubr.f32.gmra.mrb[0].mxu0 %v2304
    %v2649 = vpop.f32.mrb[0].mxu0
    %v2650 = vadd.f32 0.0, %v2649
    %v2651 = vpop.f32.mrb[0].mxu0
    %v2652 = vadd.f32 0.0, %v2651
    %2653 = vmatprep.mubr.f32.mxu0 0.0
    %2654 = vmatmul.mubr.f32.gmra.mrb[0].mxu0 %v2306
    %v2655 = vpop.f32.mrb[0].mxu0
    %v2656 = vadd.f32 0.0, %v2655
    %v2657 = vpop.f32.mrb[0].mxu0
    %v2658 = vadd.f32 0.0, %v2657
    %2659 = vmatprep.mubr.f32.mxu0 0.0
    %2660 = vmatmul.mubr.f32.gmra.mrb[0].mxu0 %v2308
    %v2661 = vpop.f32.mrb[0].mxu0
    %v2662 = vadd.f32 0.0, %v2661
    %v2663 = vpop.f32.mrb[0].mxu0
    %v2664 = vadd.f32 0.0, %v2663
    %2665 = vdwg.mxu0
    %2666 = vmatprep.subr.mxu0 0.0
    %2667 = vmatpush1.msra.mxu0 %v2274
    %2668 = vmatprep.subr.mxu0 0.0
    %2669 = vmatpush1.msra.mxu0 %v2283
    %2670 = vmatprep.subr.mxu0 0.0
    %2671 = vmatpush1.msra.mxu0 %v2292
    %2672 = vmatprep.subr.mxu0 0.0
    %2673 = vmatpush1.msra.mxu0 %v2301
    %2674 = vmatprep.subr.mxu0 0.0
    %2675 = vmatpush1.msra.mxu0 0.0
    %2676 = vmatprep.subr.mxu0 0.0
    %2677 = vmatpush1.msra.mxu0 0.0
    %2678 = vmatprep.subr.mxu0 0.0
    %2679 = vmatpush1.msra.mxu0 0.0
    %2680 = vmatprep.subr.mxu0 0.0
    %2681 = vmatpush1.msra.mxu0 0.0
    %2682 = vmatprep.subr.mxu0 0.0
    %2683 = vmatpush1.msra.mxu0 0.0
    %2684 = vmatprep.subr.mxu0 0.0
    %2685 = vmatpush1.msra.mxu0 0.0
    %2686 = vmatprep.subr.mxu0 0.0
    %2687 = vmatpush1.msra.mxu0 0.0
    %2688 = vmatprep.subr.mxu0 0.0
    %2689 = vmatpush1.msra.mxu0 0.0
    %2690 = vmatprep.subr.mxu0 0.0
    %2691 = vmatpush1.msra.mxu0 0.0
    %2692 = vmatprep.subr.mxu0 0.0
    %2693 = vmatpush1.msra.mxu0 0.0
    %2694 = vmatprep.subr.mxu0 0.0
    %2695 = vmatpush1.msra.mxu0 0.0
    %2696 = vmatprep.subr.mxu0 0.0
    %2697 = vmatpush1.msra.mxu0 0.0
    %2698 = vmatprep.subr.mxu0 0.0
    %2699 = vmatpush1.msra.mxu0 0.0
    %2700 = vmatprep.subr.mxu0 0.0
    %2701 = vmatpush1.msra.mxu0 0.0
    %2702 = vmatprep.subr.mxu0 0.0
    %2703 = vmatpush1.msra.mxu0 0.0
    %2704 = vmatprep.subr.mxu0 0.0
    %2705 = vmatpush1.msra.mxu0 0.0
    %2706 = vmatprep.subr.mxu0 0.0
    %2707 = vmatpush1.msra.mxu0 0.0
    %2708 = vmatprep.subr.mxu0 0.0
    %2709 = vmatpush1.msra.mxu0 0.0
    %2710 = vmatprep.subr.mxu0 0.0
    %2711 = vmatpush1.msra.mxu0 0.0
    %2712 = vmatprep.subr.mxu0 0.0
    %2713 = vmatpush1.msra.mxu0 0.0
    %2714 = vmatprep.subr.mxu0 0.0
    %2715 = vmatpush1.msra.mxu0 0.0
    %2716 = vmatprep.subr.mxu0 0.0
    %2717 = vmatpush1.msra.mxu0 0.0
    %2718 = vmatprep.subr.mxu0 0.0
    %2719 = vmatpush1.msra.mxu0 0.0
    %2720 = vmatprep.subr.mxu0 0.0
    %2721 = vmatpush1.msra.mxu0 0.0
    %2722 = vmatprep.subr.mxu0 0.0
    %2723 = vmatpush1.msra.mxu0 0.0
    %2724 = vmatprep.subr.mxu0 0.0
    %2725 = vmatpush1.msra.mxu0 0.0
    %2726 = vmatprep.subr.mxu0 0.0
    %2727 = vmatpush1.msra.mxu0 0.0
    %2728 = vmatprep.subr.mxu0 0.0
    %2729 = vmatpush1.msra.mxu0 0.0
    %2730 = vmatprep.mubr.f32.mxu0 0.0
    %2731 = vmatmul.mubr.f32.gmra.mrb[0].mxu0 %v2302
    %v2732 = vpop.f32.mrb[0].mxu0
    %v2733 = vadd.f32 0.0, %v2732
    %v2734 = vpop.f32.mrb[0].mxu0
    %2735 = vmatprep.mubr.f32.mxu0 0.0
    %2736 = vmatmul.mubr.f32.gmra.mrb[0].mxu0 %v2304
    %v2737 = vpop.f32.mrb[0].mxu0
    %v2738 = vadd.f32 0.0, %v2737
    %v2739 = vpop.f32.mrb[0].mxu0
    %2740 = vmatprep.mubr.f32.mxu0 0.0
    %2741 = vmatmul.mubr.f32.gmra.mrb[0].mxu0 %v2306
    %v2742 = vpop.f32.mrb[0].mxu0
    %v2743 = vadd.f32 0.0, %v2742
    %v2744 = vpop.f32.mrb[0].mxu0
    %2745 = vmatprep.mubr.f32.mxu0 0.0
    %2746 = vmatmul.mubr.f32.gmra.mrb[0].mxu0 %v2308
    %v2747 = vpop.f32.mrb[0].mxu0
    %v2748 = vadd.f32 0.0, %v2747
    %v2749 = vpop.f32.mrb[0].mxu0
    %2750 = vdwg.mxu0
    %v2751 = vadd.f32 %v2219, %v2377
    %v2752 = vadd.f32 %v2220, %v2379
    %v2753 = vadd.f32 %v2221, %v2466
    %v2754 = vadd.f32 %v2222, %v2468
    %v2755 = vadd.f32 %v2223, %v2555
    %v2756 = vadd.f32 %v2224, %v2557
    %v2757 = vadd.f32 %v2225, %v2644
    %v2758 = vadd.f32 %v2226, %v2646
    %v2759 = vadd.f32 %v2227, %v2733
    %v2760 = vadd.f32 %v2228, %v2383
    %v2761 = vadd.f32 %v2229, %v2385
    %v2762 = vadd.f32 %v2230, %v2472
    %v2763 = vadd.f32 %v2231, %v2474
    %v2764 = vadd.f32 %v2232, %v2561
    %v2765 = vadd.f32 %v2233, %v2563
    %v2766 = vadd.f32 %v2234, %v2650
    %v2767 = vadd.f32 %v2235, %v2652
    %v2768 = vadd.f32 %v2236, %v2738
    %v2769 = vadd.f32 %v2237, %v2389
    %v2770 = vadd.f32 %v2238, %v2391
    %v2771 = vadd.f32 %v2239, %v2478
    %v2772 = vadd.f32 %v2240, %v2480
    %v2773 = vadd.f32 %v2241, %v2567
    %v2774 = vadd.f32 %v2242, %v2569
    %v2775 = vadd.f32 %v2243, %v2656
    %v2776 = vadd.f32 %v2244, %v2658
    %v2777 = vadd.f32 %v2245, %v2743
    %v2778 = vadd.f32 %v2246, %v2395
    %v2779 = vadd.f32 %v2247, %v2397
    %v2780 = vadd.f32 %v2248, %v2484
    %v2781 = vadd.f32 %v2249, %v2486
    %v2782 = vadd.f32 %v2250, %v2573
    %v2783 = vadd.f32 %v2251, %v2575
    %v2784 = vadd.f32 %v2252, %v2662
    %v2785 = vadd.f32 %v2253, %v2664
    %v2786 = vadd.f32 %v2254, %v2748
    %v2787 = vld [vmem:[%s3] sm:$0xff]
    %v2788 = vld [vmem:[%s3 + $0x8] sm:$0x1]
    %v2791 = vlaneseq
    %v2792 = vshrl.u32 %v2791, 7
    %v2793 = vsub.s32 0, %v2792
    %v2794 = vrot.slane %v2787, %v2793
    %v2795 = vlaneseq
    %v2796 = vshrl.u32 %v2795, 7
    %v2797 = vsub.s32 1, %v2796
    %v2798 = vrot.slane %v2787, %v2797
    %v2799 = vlaneseq
    %v2800 = vshrl.u32 %v2799, 7
    %v2801 = vsub.s32 2, %v2800
    %v2802 = vrot.slane %v2787, %v2801
    %v2803 = vlaneseq
    %v2804 = vshrl.u32 %v2803, 7
    %v2805 = vsub.s32 3, %v2804
    %v2806 = vrot.slane %v2787, %v2805
    %v2807 = vlaneseq
    %v2808 = vshrl.u32 %v2807, 7
    %v2809 = vsub.s32 4, %v2808
    %v2810 = vrot.slane %v2787, %v2809
    %v2811 = vlaneseq
    %v2812 = vshrl.u32 %v2811, 7
    %v2813 = vsub.s32 5, %v2812
    %v2814 = vrot.slane %v2787, %v2813
    %v2815 = vlaneseq
    %v2816 = vshrl.u32 %v2815, 7
    %v2817 = vsub.s32 6, %v2816
    %v2818 = vrot.slane %v2787, %v2817
    %v2819 = vlaneseq
    %v2820 = vshrl.u32 %v2819, 7
    %v2821 = vsub.s32 7, %v2820
    %v2822 = vrot.slane %v2787, %v2821
    %v2823 = vlaneseq
    %v2824 = vshrl.u32 %v2823, 7
    %v2825 = vsub.s32 0, %v2824
    %v2826 = vrot.slane %v2788, %v2825
    %v2836 = vadd.f32 %v2751, %v2794
    %v2837 = vadd.f32 %v2752, %v2798
    %v2838 = vadd.f32 %v2753, %v2802
    %v2839 = vadd.f32 %v2754, %v2806
    %v2840 = vadd.f32 %v2755, %v2810
    %v2841 = vadd.f32 %v2756, %v2814
    %v2842 = vadd.f32 %v2757, %v2818
    %v2843 = vadd.f32 %v2758, %v2822
    %v2844 = vadd.f32 %v2759, %v2826
    %v2845 = vadd.f32 %v2760, %v2794
    %v2846 = vadd.f32 %v2761, %v2798
    %v2847 = vadd.f32 %v2762, %v2802
    %v2848 = vadd.f32 %v2763, %v2806
    %v2849 = vadd.f32 %v2764, %v2810
    %v2850 = vadd.f32 %v2765, %v2814
    %v2851 = vadd.f32 %v2766, %v2818
    %v2852 = vadd.f32 %v2767, %v2822
    %v2853 = vadd.f32 %v2768, %v2826
    %v2854 = vadd.f32 %v2769, %v2794
    %v2855 = vadd.f32 %v2770, %v2798
    %v2856 = vadd.f32 %v2771, %v2802
    %v2857 = vadd.f32 %v2772, %v2806
    %v2858 = vadd.f32 %v2773, %v2810
    %v2859 = vadd.f32 %v2774, %v2814
    %v2860 = vadd.f32 %v2775, %v2818
    %v2861 = vadd.f32 %v2776, %v2822
    %v2862 = vadd.f32 %v2777, %v2826
    %v2863 = vadd.f32 %v2778, %v2794
    %v2864 = vadd.f32 %v2779, %v2798
    %v2865 = vadd.f32 %v2780, %v2802
    %v2866 = vadd.f32 %v2781, %v2806
    %v2867 = vadd.f32 %v2782, %v2810
    %v2868 = vadd.f32 %v2783, %v2814
    %v2869 = vadd.f32 %v2784, %v2818
    %v2870 = vadd.f32 %v2785, %v2822
    %v2871 = vadd.f32 %v2786, %v2826
    %v2872 = vmax.f32 %v2836, 0.0
    %v2873 = vmax.f32 %v2837, 0.0
    %v2874 = vmax.f32 %v2838, 0.0
    %v2875 = vmax.f32 %v2839, 0.0
    %v2876 = vmax.f32 %v2840, 0.0
    %v2877 = vmax.f32 %v2841, 0.0
    %v2878 = vmax.f32 %v2842, 0.0
    %v2879 = vmax.f32 %v2843, 0.0
    %v2880 = vmax.f32 %v2844, 0.0
    %v2881 = vmax.f32 %v2845, 0.0
    %v2882 = vmax.f32 %v2846, 0.0
    %v2883 = vmax.f32 %v2847, 0.0
    %v2884 = vmax.f32 %v2848, 0.0
    %v2885 = vmax.f32 %v2849, 0.0
    %v2886 = vmax.f32 %v2850, 0.0
    %v2887 = vmax.f32 %v2851, 0.0
    %v2888 = vmax.f32 %v2852, 0.0
    %v2889 = vmax.f32 %v2853, 0.0
    %v2890 = vmax.f32 %v2854, 0.0
    %v2891 = vmax.f32 %v2855, 0.0
    %v2892 = vmax.f32 %v2856, 0.0
    %v2893 = vmax.f32 %v2857, 0.0
    %v2894 = vmax.f32 %v2858, 0.0
    %v2895 = vmax.f32 %v2859, 0.0
    %v2896 = vmax.f32 %v2860, 0.0
    %v2897 = vmax.f32 %v2861, 0.0
    %v2898 = vmax.f32 %v2862, 0.0
    %v2899 = vmax.f32 %v2863, 0.0
    %v2900 = vmax.f32 %v2864, 0.0
    %v2901 = vmax.f32 %v2865, 0.0
    %v2902 = vmax.f32 %v2866, 0.0
    %v2903 = vmax.f32 %v2867, 0.0
    %v2904 = vmax.f32 %v2868, 0.0
    %v2905 = vmax.f32 %v2869, 0.0
    %v2906 = vmax.f32 %v2870, 0.0
    %v2907 = vmax.f32 %v2871, 0.0
    %v2908 = vlaneseq
    %v2909 = vshrl.u32 %v2908, 7
    %v2910 = vadd.s32 %v2909, 8
    %v2911 = vld [vmem:[%s4] sm:$0xff]
    %v2912 = vld [vmem:[%s4 + $0x8] sm:$0x1]
    %v2913 = vlaneseq
    %v2914 = vshrl.u32 %v2913, 7
    %v2915 = vsub.s32 0, %v2914
    %v2916 = vrot.slane %v2911, %v2915
    %v2917 = vlaneseq
    %v2918 = vshrl.u32 %v2917, 7
    %v2919 = vsub.s32 1, %v2918
    %v2920 = vrot.slane %v2911, %v2919
    %v2921 = vlaneseq
    %v2922 = vshrl.u32 %v2921, 7
    %v2923 = vsub.s32 2, %v2922
    %v2924 = vrot.slane %v2911, %v2923
    %v2925 = vlaneseq
    %v2926 = vshrl.u32 %v2925, 7
    %v2927 = vsub.s32 3, %v2926
    %v2928 = vrot.slane %v2911, %v2927
    %v2929 = vlaneseq
    %v2930 = vshrl.u32 %v2929, 7
    %v2931 = vsub.s32 4, %v2930
    %v2932 = vrot.slane %v2911, %v2931
    %v2933 = vlaneseq
    %v2934 = vshrl.u32 %v2933, 7
    %v2935 = vsub.s32 5, %v2934
    %v2936 = vrot.slane %v2911, %v2935
    %v2937 = vlaneseq
    %v2938 = vshrl.u32 %v2937, 7
    %v2939 = vsub.s32 6, %v2938
    %v2940 = vrot.slane %v2911, %v2939
    %v2941 = vlaneseq
    %v2942 = vshrl.u32 %v2941, 7
    %v2943 = vsub.s32 7, %v2942
    %v2944 = vrot.slane %v2911, %v2943
    %v2945 = vlaneseq
    %v2946 = vshrl.u32 %v2945, 7
    %v2947 = vsub.s32 0, %v2946
    %v2948 = vrot.slane %v2912, %v2947
    %vm2949 = vcmp.lt.s32.totalorder %v2909, %v2916
    %vm2950 = vcmp.lt.s32.totalorder %v2909, %v2920
    %vm2951 = vcmp.lt.s32.totalorder %v2909, %v2924
    %vm2952 = vcmp.lt.s32.totalorder %v2909, %v2928
    %vm2953 = vcmp.lt.s32.totalorder %v2909, %v2932
    %vm2954 = vcmp.lt.s32.totalorder %v2909, %v2936
    %vm2955 = vcmp.lt.s32.totalorder %v2909, %v2940
    %vm2956 = vcmp.lt.s32.totalorder %v2909, %v2944
    %vm2957 = vcmp.lt.s32.totalorder %v2909, %v2948
    %vm2958 = vcmp.lt.s32.totalorder %v2910, %v2916
    %vm2959 = vcmp.lt.s32.totalorder %v2910, %v2920
    %vm2960 = vcmp.lt.s32.totalorder %v2910, %v2924
    %vm2961 = vcmp.lt.s32.totalorder %v2910, %v2928
    %vm2962 = vcmp.lt.s32.totalorder %v2910, %v2932
    %vm2963 = vcmp.lt.s32.totalorder %v2910, %v2936
    %vm2964 = vcmp.lt.s32.totalorder %v2910, %v2940
    %vm2965 = vcmp.lt.s32.totalorder %v2910, %v2944
    %vm2966 = vcmp.lt.s32.totalorder %v2910, %v2948
    %v2967 = vsel %vm2949, 1, 0
    %v2968 = vsel %vm2950, 1, 0
    %v2969 = vsel %vm2951, 1, 0
    %v2970 = vsel %vm2952, 1, 0
    %v2971 = vsel %vm2953, 1, 0
    %v2972 = vsel %vm2954, 1, 0
    %v2973 = vsel %vm2955, 1, 0
    %v2974 = vsel %vm2956, 1, 0
    %v2975 = vsel %vm2957, 1, 0
    %v2976 = vsel %vm2958, 1, 0
    %v2977 = vsel %vm2959, 1, 0
    %v2978 = vsel %vm2960, 1, 0
    %v2979 = vsel %vm2961, 1, 0
    %v2980 = vsel %vm2962, 1, 0
    %v2981 = vsel %vm2963, 1, 0
    %v2982 = vsel %vm2964, 1, 0
    %v2983 = vsel %vm2965, 1, 0
    %v2984 = vsel %vm2966, 1, 0
    %vm2985 = vcmp.eq.s32.totalorder %v2967, 1
    %vm2986 = vcmp.eq.s32.totalorder %v2968, 1
    %vm2987 = vcmp.eq.s32.totalorder %v2969, 1
    %vm2988 = vcmp.eq.s32.totalorder %v2970, 1
    %vm2989 = vcmp.eq.s32.totalorder %v2971, 1
    %vm2990 = vcmp.eq.s32.totalorder %v2972, 1
    %vm2991 = vcmp.eq.s32.totalorder %v2973, 1
    %vm2992 = vcmp.eq.s32.totalorder %v2974, 1
    %vm2993 = vcmp.eq.s32.totalorder %v2975, 1
    %vm2994 = vcmp.eq.s32.totalorder %v2976, 1
    %vm2995 = vcmp.eq.s32.totalorder %v2977, 1
    %vm2996 = vcmp.eq.s32.totalorder %v2978, 1
    %vm2997 = vcmp.eq.s32.totalorder %v2979, 1
    %vm2998 = vcmp.eq.s32.totalorder %v2980, 1
    %vm2999 = vcmp.eq.s32.totalorder %v2981, 1
    %vm3000 = vcmp.eq.s32.totalorder %v2982, 1
    %vm3001 = vcmp.eq.s32.totalorder %v2983, 1
    %vm3002 = vcmp.eq.s32.totalorder %v2984, 1
    %v3003 = vsel %vm2985, %v2872, 0.0
    %v3004 = vsel %vm2986, %v2873, 0.0
    %v3005 = vsel %vm2987, %v2874, 0.0
    %v3006 = vsel %vm2988, %v2875, 0.0
    %v3007 = vsel %vm2989, %v2876, 0.0
    %v3008 = vsel %vm2990, %v2877, 0.0
    %v3009 = vsel %vm2991, %v2878, 0.0
    %v3010 = vsel %vm2992, %v2879, 0.0
    %v3011 = vsel %vm2993, %v2880, 0.0
    %v3012 = vsel %vm2994, %v2881, 0.0
    %v3013 = vsel %vm2995, %v2882, 0.0
    %v3014 = vsel %vm2996, %v2883, 0.0
    %v3015 = vsel %vm2997, %v2884, 0.0
    %v3016 = vsel %vm2998, %v2885, 0.0
    %v3017 = vsel %vm2999, %v2886, 0.0
    %v3018 = vsel %vm3000, %v2887, 0.0
    %v3019 = vsel %vm3001, %v2888, 0.0
    %v3020 = vsel %vm3002, %v2889, 0.0
    %v3021 = vsel %vm2985, %v2890, 0.0
    %v3022 = vsel %vm2986, %v2891, 0.0
    %v3023 = vsel %vm2987, %v2892, 0.0
    %v3024 = vsel %vm2988, %v2893, 0.0
    %v3025 = vsel %vm2989, %v2894, 0.0
    %v3026 = vsel %vm2990, %v2895, 0.0
    %v3027 = vsel %vm2991, %v2896, 0.0
    %v3028 = vsel %vm2992, %v2897, 0.0
    %v3029 = vsel %vm2993, %v2898, 0.0
    %v3030 = vsel %vm2994, %v2899, 0.0
    %v3031 = vsel %vm2995, %v2900, 0.0
    %v3032 = vsel %vm2996, %v2901, 0.0
    %v3033 = vsel %vm2997, %v2902, 0.0
    %v3034 = vsel %vm2998, %v2903, 0.0
    %v3035 = vsel %vm2999, %v2904, 0.0
    %v3036 = vsel %vm3000, %v2905, 0.0
    %v3037 = vsel %vm3001, %v2906, 0.0
    %v3038 = vsel %vm3002, %v2907, 0.0
    %v3039 = vmax.f32 %v3003, %v3012
    %v3040 = vrot.slane %v3039, 4
    %v3041 = vmax.f32 %v3039, %v3040
    %v3042 = vrot.slane %v3041, 2
    %v3043 = vmax.f32 %v3041, %v3042
    %v3044 = vrot.slane %v3043, 1
    %v3045 = vmax.f32 %v3043, %v3044
    %v3046 = vmax.f32 %v3004, %v3013
    %v3047 = vrot.slane %v3046, 4
    %v3048 = vmax.f32 %v3046, %v3047
    %v3049 = vrot.slane %v3048, 2
    %v3050 = vmax.f32 %v3048, %v3049
    %v3051 = vrot.slane %v3050, 1
    %v3052 = vmax.f32 %v3050, %v3051
    %v3053 = vmax.f32 %v3005, %v3014
    %v3054 = vrot.slane %v3053, 4
    %v3055 = vmax.f32 %v3053, %v3054
    %v3056 = vrot.slane %v3055, 2
    %v3057 = vmax.f32 %v3055, %v3056
    %v3058 = vrot.slane %v3057, 1
    %v3059 = vmax.f32 %v3057, %v3058
    %v3060 = vmax.f32 %v3006, %v3015
    %v3061 = vrot.slane %v3060, 4
    %v3062 = vmax.f32 %v3060, %v3061
    %v3063 = vrot.slane %v3062, 2
    %v3064 = vmax.f32 %v3062, %v3063
    %v3065 = vrot.slane %v3064, 1
    %v3066 = vmax.f32 %v3064, %v3065
    %v3067 = vmax.f32 %v3007, %v3016
    %v3068 = vrot.slane %v3067, 4
    %v3069 = vmax.f32 %v3067, %v3068
    %v3070 = vrot.slane %v3069, 2
    %v3071 = vmax.f32 %v3069, %v3070
    %v3072 = vrot.slane %v3071, 1
    %v3073 = vmax.f32 %v3071, %v3072
    %v3074 = vmax.f32 %v3008, %v3017
    %v3075 = vrot.slane %v3074, 4
    %v3076 = vmax.f32 %v3074, %v3075
    %v3077 = vrot.slane %v3076, 2
    %v3078 = vmax.f32 %v3076, %v3077
    %v3079 = vrot.slane %v3078, 1
    %v3080 = vmax.f32 %v3078, %v3079
    %v3081 = vmax.f32 %v3009, %v3018
    %v3082 = vrot.slane %v3081, 4
    %v3083 = vmax.f32 %v3081, %v3082
    %v3084 = vrot.slane %v3083, 2
    %v3085 = vmax.f32 %v3083, %v3084
    %v3086 = vrot.slane %v3085, 1
    %v3087 = vmax.f32 %v3085, %v3086
    %v3088 = vmax.f32 %v3010, %v3019
    %v3089 = vrot.slane %v3088, 4
    %v3090 = vmax.f32 %v3088, %v3089
    %v3091 = vrot.slane %v3090, 2
    %v3092 = vmax.f32 %v3090, %v3091
    %v3093 = vrot.slane %v3092, 1
    %v3094 = vmax.f32 %v3092, %v3093
    %v3095 = vmax.f32 %v3011, %v3020
    %v3096 = vrot.slane %v3095, 4
    %v3097 = vmax.f32 %v3095, %v3096
    %v3098 = vrot.slane %v3097, 2
    %v3099 = vmax.f32 %v3097, %v3098
    %v3100 = vrot.slane %v3099, 1
    %v3101 = vmax.f32 %v3099, %v3100
    %v3102 = vmax.f32 %v3021, %v3030
    %v3103 = vrot.slane %v3102, 4
    %v3104 = vmax.f32 %v3102, %v3103
    %v3105 = vrot.slane %v3104, 2
    %v3106 = vmax.f32 %v3104, %v3105
    %v3107 = vrot.slane %v3106, 1
    %v3108 = vmax.f32 %v3106, %v3107
    %v3109 = vmax.f32 %v3022, %v3031
    %v3110 = vrot.slane %v3109, 4
    %v3111 = vmax.f32 %v3109, %v3110
    %v3112 = vrot.slane %v3111, 2
    %v3113 = vmax.f32 %v3111, %v3112
    %v3114 = vrot.slane %v3113, 1
    %v3115 = vmax.f32 %v3113, %v3114
    %v3116 = vmax.f32 %v3023, %v3032
    %v3117 = vrot.slane %v3116, 4
    %v3118 = vmax.f32 %v3116, %v3117
    %v3119 = vrot.slane %v3118, 2
    %v3120 = vmax.f32 %v3118, %v3119
    %v3121 = vrot.slane %v3120, 1
    %v3122 = vmax.f32 %v3120, %v3121
    %v3123 = vmax.f32 %v3024, %v3033
    %v3124 = vrot.slane %v3123, 4
    %v3125 = vmax.f32 %v3123, %v3124
    %v3126 = vrot.slane %v3125, 2
    %v3127 = vmax.f32 %v3125, %v3126
    %v3128 = vrot.slane %v3127, 1
    %v3129 = vmax.f32 %v3127, %v3128
    %v3130 = vmax.f32 %v3025, %v3034
    %v3131 = vrot.slane %v3130, 4
    %v3132 = vmax.f32 %v3130, %v3131
    %v3133 = vrot.slane %v3132, 2
    %v3134 = vmax.f32 %v3132, %v3133
    %v3135 = vrot.slane %v3134, 1
    %v3136 = vmax.f32 %v3134, %v3135
    %v3137 = vmax.f32 %v3026, %v3035
    %v3138 = vrot.slane %v3137, 4
    %v3139 = vmax.f32 %v3137, %v3138
    %v3140 = vrot.slane %v3139, 2
    %v3141 = vmax.f32 %v3139, %v3140
    %v3142 = vrot.slane %v3141, 1
    %v3143 = vmax.f32 %v3141, %v3142
    %v3144 = vmax.f32 %v3027, %v3036
    %v3145 = vrot.slane %v3144, 4
    %v3146 = vmax.f32 %v3144, %v3145
    %v3147 = vrot.slane %v3146, 2
    %v3148 = vmax.f32 %v3146, %v3147
    %v3149 = vrot.slane %v3148, 1
    %v3150 = vmax.f32 %v3148, %v3149
    %v3151 = vmax.f32 %v3028, %v3037
    %v3152 = vrot.slane %v3151, 4
    %v3153 = vmax.f32 %v3151, %v3152
    %v3154 = vrot.slane %v3153, 2
    %v3155 = vmax.f32 %v3153, %v3154
    %v3156 = vrot.slane %v3155, 1
    %v3157 = vmax.f32 %v3155, %v3156
    %v3158 = vmax.f32 %v3029, %v3038
    %v3159 = vrot.slane %v3158, 4
    %v3160 = vmax.f32 %v3158, %v3159
    %v3161 = vrot.slane %v3160, 2
    %v3162 = vmax.f32 %v3160, %v3161
    %v3163 = vrot.slane %v3162, 1
    %v3164 = vmax.f32 %v3162, %v3163
    %v3165 = vmax.f32 %v3045, %v3066
    %v3166 = vmax.f32 %v3052, %v3073
    %v3167 = vmax.f32 %v3059, %v3080
    %v3168 = vmax.f32 %v3108, %v3129
    %v3169 = vmax.f32 %v3115, %v3136
    %v3170 = vmax.f32 %v3122, %v3143
    %v3171 = vmax.f32 %v3165, %v3087
    %v3172 = vmax.f32 %v3166, %v3094
    %v3173 = vmax.f32 %v3167, %v3101
    %v3174 = vmax.f32 %v3168, %v3150
    %v3175 = vmax.f32 %v3169, %v3157
    %v3176 = vmax.f32 %v3170, %v3164
    %v3177 = vld [vmem:[%s5] sm:$0xff]
    %v3178 = vld [vmem:[%s5 + $0x8] sm:$0xff]
    %v3179 = vld [vmem:[%s5 + $0x10] sm:$0xff]
    %v3180 = vld [vmem:[%s5 + $0x18] sm:$0xff]
    %v3181 = vld [vmem:[%s5 + $0x20] sm:$0xff]
    %v3182 = vld [vmem:[%s5 + $0x28] sm:$0xff]
    %v3183 = vld [vmem:[%s5 + $0x30] sm:$0xff]
    %v3184 = vld [vmem:[%s5 + $0x38] sm:$0xff]
    %v3185 = vld [vmem:[%s5 + $0x40] sm:$0xff]
    %v3186 = vld [vmem:[%s5 + $0x48] sm:$0xff]
    %v3187 = vld [vmem:[%s5 + $0x50] sm:$0xff]
    %v3188 = vld [vmem:[%s5 + $0x58] sm:$0xff]
    %v3189 = vld [vmem:[%s5 + $0x60] sm:$0xff]
    %v3190 = vld [vmem:[%s5 + $0x68] sm:$0xff]
    %v3191 = vld [vmem:[%s5 + $0x70] sm:$0xff]
    %v3192 = vld [vmem:[%s5 + $0x78] sm:$0xff]
    %v3193 = vld [vmem:[%s5 + $0x80] sm:$0xff]
    %v3194 = vld [vmem:[%s5 + $0x88] sm:$0xff]
    %v3195 = vld [vmem:[%s5 + $0x90] sm:$0xff]
    %v3196 = vld [vmem:[%s5 + $0x98] sm:$0xff]
    %v3197 = vld [vmem:[%s5 + $0xa0] sm:$0xff]
    %v3198 = vld [vmem:[%s5 + $0xa8] sm:$0xff]
    %v3199 = vld [vmem:[%s5 + $0xb0] sm:$0xff]
    %v3200 = vld [vmem:[%s5 + $0xb8] sm:$0xff]
    %v3201 = vld [vmem:[%s5 + $0xc0] sm:$0xff]
    %v3202 = vld [vmem:[%s5 + $0xc8] sm:$0xff]
    %v3203 = vld [vmem:[%s5 + $0xd0] sm:$0xff]
    %v3204 = vld [vmem:[%s5 + $0xd8] sm:$0xff]
    %v3205 = vld [vmem:[%s5 + $0xe0] sm:$0xff]
    %v3206 = vld [vmem:[%s5 + $0xe8] sm:$0xff]
    %v3207 = vld [vmem:[%s5 + $0xf0] sm:$0xff]
    %v3208 = vld [vmem:[%s5 + $0xf8] sm:$0xff]
    %v3209 = vld [vmem:[%s5 + $0x100] sm:$0xff]
    %v3210 = vld [vmem:[%s5 + $0x108] sm:$0xff]
    %v3211 = vld [vmem:[%s5 + $0x110] sm:$0xff]
    %v3212 = vld [vmem:[%s5 + $0x118] sm:$0xff]
    %v3213 = vld [vmem:[%s5 + $0x120] sm:$0xff]
    %v3214 = vld [vmem:[%s5 + $0x128] sm:$0xff]
    %v3215 = vld [vmem:[%s5 + $0x130] sm:$0xff]
    %v3216 = vld [vmem:[%s5 + $0x138] sm:$0xff]
    %v3217 = vld [vmem:[%s5 + $0x140] sm:$0xff]
    %v3218 = vld [vmem:[%s5 + $0x148] sm:$0xff]
    %v3219 = vld [vmem:[%s5 + $0x150] sm:$0xff]
    %v3220 = vld [vmem:[%s5 + $0x158] sm:$0xff]
    %v3221 = vld [vmem:[%s5 + $0x160] sm:$0xff]
    %v3222 = vld [vmem:[%s5 + $0x168] sm:$0xff]
    %v3223 = vld [vmem:[%s5 + $0x170] sm:$0xff]
    %v3224 = vld [vmem:[%s5 + $0x178] sm:$0xff]
    %v3225 = vld [vmem:[%s6] sm:$0x1]
    %v3227 = vlaneseq
    %v3228 = vshrl.u32 %v3227, 7
    %v3229 = vsub.s32 0, %v3228
    %v3230 = vrot.slane %v3225, %v3229
    %vm3238 = vcmask 1041409
    %v3239 = vsel %vm3238, %v3174, %v3171
    %v3240 = vsel %vm3238, %v3175, %v3172
    %v3241 = vsel %vm3238, %v3176, %v3173
    %3245 = vmatprep.subr.mxu0 0.0
    %3246 = vmatpush1.msra.mxu0 %v3177
    %3247 = vmatprep.subr.mxu0 0.0
    %3248 = vmatpush1.msra.mxu0 %v3178
    %3249 = vmatprep.subr.mxu0 0.0
    %3250 = vmatpush1.msra.mxu0 %v3179
    %3251 = vmatprep.subr.mxu0 0.0
    %3252 = vmatpush1.msra.mxu0 %v3180
    %3253 = vmatprep.subr.mxu0 0.0
    %3254 = vmatpush1.msra.mxu0 %v3181
    %3255 = vmatprep.subr.mxu0 0.0
    %3256 = vmatpush1.msra.mxu0 %v3182
    %3257 = vmatprep.subr.mxu0 0.0
    %3258 = vmatpush1.msra.mxu0 %v3183
    %3259 = vmatprep.subr.mxu0 0.0
    %3260 = vmatpush1.msra.mxu0 %v3184
    %3261 = vmatprep.subr.mxu0 0.0
    %3262 = vmatpush1.msra.mxu0 %v3185
    %3263 = vmatprep.subr.mxu0 0.0
    %3264 = vmatpush1.msra.mxu0 %v3186
    %3265 = vmatprep.subr.mxu0 0.0
    %3266 = vmatpush1.msra.mxu0 %v3187
    %3267 = vmatprep.subr.mxu0 0.0
    %3268 = vmatpush1.msra.mxu0 %v3188
    %3269 = vmatprep.subr.mxu0 0.0
    %3270 = vmatpush1.msra.mxu0 %v3189
    %3271 = vmatprep.subr.mxu0 0.0
    %3272 = vmatpush1.msra.mxu0 %v3190
    %3273 = vmatprep.subr.mxu0 0.0
    %3274 = vmatpush1.msra.mxu0 %v3191
    %3275 = vmatprep.subr.mxu0 0.0
    %3276 = vmatpush1.msra.mxu0 %v3192
    %3277 = vmatprep.subr.mxu0 0.0
    %3278 = vmatpush1.msra.mxu0 %v3193
    %3279 = vmatprep.subr.mxu0 0.0
    %3280 = vmatpush1.msra.mxu0 %v3194
    %3281 = vmatprep.subr.mxu0 0.0
    %3282 = vmatpush1.msra.mxu0 %v3195
    %3283 = vmatprep.subr.mxu0 0.0
    %3284 = vmatpush1.msra.mxu0 %v3196
    %3285 = vmatprep.subr.mxu0 0.0
    %3286 = vmatpush1.msra.mxu0 %v3197
    %3287 = vmatprep.subr.mxu0 0.0
    %3288 = vmatpush1.msra.mxu0 %v3198
    %3289 = vmatprep.subr.mxu0 0.0
    %3290 = vmatpush1.msra.mxu0 %v3199
    %3291 = vmatprep.subr.mxu0 0.0
    %3292 = vmatpush1.msra.mxu0 %v3200
    %3293 = vmatprep.subr.mxu0 0.0
    %3294 = vmatpush1.msra.mxu0 %v3201
    %3295 = vmatprep.subr.mxu0 0.0
    %3296 = vmatpush1.msra.mxu0 %v3202
    %3297 = vmatprep.subr.mxu0 0.0
    %3298 = vmatpush1.msra.mxu0 %v3203
    %3299 = vmatprep.subr.mxu0 0.0
    %3300 = vmatpush1.msra.mxu0 %v3204
    %3301 = vmatprep.subr.mxu0 0.0
    %3302 = vmatpush1.msra.mxu0 %v3205
    %3303 = vmatprep.subr.mxu0 0.0
    %3304 = vmatpush1.msra.mxu0 %v3206
    %3305 = vmatprep.subr.mxu0 0.0
    %3306 = vmatpush1.msra.mxu0 %v3207
    %3307 = vmatprep.subr.mxu0 0.0
    %3308 = vmatpush1.msra.mxu0 %v3208
    %3309 = vmatprep.mubr.f32.mxu0 %v3240
    %3310 = vmatmul.mubr.f32.gmra.mrb[0].mxu0 %v3239
    %v3311 = vpop.f32.mrb[0].mxu0
    %v3312 = vadd.f32 %v3230, %v3311
    %v3313 = vpop.f32.mrb[0].mxu0
    %3314 = vdwg.mxu0
    %3315 = vmatprep.subr.mxu0 0.0
    %3316 = vmatpush1.msra.mxu0 %v3209
    %3317 = vmatprep.subr.mxu0 0.0
    %3318 = vmatpush1.msra.mxu0 %v3210
    %3319 = vmatprep.subr.mxu0 0.0
    %3320 = vmatpush1.msra.mxu0 %v3211
    %3321 = vmatprep.subr.mxu0 0.0
    %3322 = vmatpush1.msra.mxu0 %v3212
    %3323 = vmatprep.subr.mxu0 0.0
    %3324 = vmatpush1.msra.mxu0 %v3213
    %3325 = vmatprep.subr.mxu0 0.0
    %3326 = vmatpush1.msra.mxu0 %v3214
    %3327 = vmatprep.subr.mxu0 0.0
    %3328 = vmatpush1.msra.mxu0 %v3215
    %3329 = vmatprep.subr.mxu0 0.0
    %3330 = vmatpush1.msra.mxu0 %v3216
    %3331 = vmatprep.subr.mxu0 0.0
    %3332 = vmatpush1.msra.mxu0 %v3217
    %3333 = vmatprep.subr.mxu0 0.0
    %3334 = vmatpush1.msra.mxu0 %v3218
    %3335 = vmatprep.subr.mxu0 0.0
    %3336 = vmatpush1.msra.mxu0 %v3219
    %3337 = vmatprep.subr.mxu0 0.0
    %3338 = vmatpush1.msra.mxu0 %v3220
    %3339 = vmatprep.subr.mxu0 0.0
    %3340 = vmatpush1.msra.mxu0 %v3221
    %3341 = vmatprep.subr.mxu0 0.0
    %3342 = vmatpush1.msra.mxu0 %v3222
    %3343 = vmatprep.subr.mxu0 0.0
    %3344 = vmatpush1.msra.mxu0 %v3223
    %3345 = vmatprep.subr.mxu0 0.0
    %3346 = vmatpush1.msra.mxu0 %v3224
    %3347 = vmatprep.subr.mxu0 0.0
    %3348 = vmatpush1.msra.mxu0 0.0
    %3349 = vmatprep.subr.mxu0 0.0
    %3350 = vmatpush1.msra.mxu0 0.0
    %3351 = vmatprep.subr.mxu0 0.0
    %3352 = vmatpush1.msra.mxu0 0.0
    %3353 = vmatprep.subr.mxu0 0.0
    %3354 = vmatpush1.msra.mxu0 0.0
    %3355 = vmatprep.subr.mxu0 0.0
    %3356 = vmatpush1.msra.mxu0 0.0
    %3357 = vmatprep.subr.mxu0 0.0
    %3358 = vmatpush1.msra.mxu0 0.0
    %3359 = vmatprep.subr.mxu0 0.0
    %3360 = vmatpush1.msra.mxu0 0.0
    %3361 = vmatprep.subr.mxu0 0.0
    %3362 = vmatpush1.msra.mxu0 0.0
    %3363 = vmatprep.subr.mxu0 0.0
    %3364 = vmatpush1.msra.mxu0 0.0
    %3365 = vmatprep.subr.mxu0 0.0
    %3366 = vmatpush1.msra.mxu0 0.0
    %3367 = vmatprep.subr.mxu0 0.0
    %3368 = vmatpush1.msra.mxu0 0.0
    %3369 = vmatprep.subr.mxu0 0.0
    %3370 = vmatpush1.msra.mxu0 0.0
    %3371 = vmatprep.subr.mxu0 0.0
    %3372 = vmatpush1.msra.mxu0 0.0
    %3373 = vmatprep.subr.mxu0 0.0
    %3374 = vmatpush1.msra.mxu0 0.0
    %3375 = vmatprep.subr.mxu0 0.0
    %3376 = vmatpush1.msra.mxu0 0.0
    %3377 = vmatprep.subr.mxu0 0.0
    %3378 = vmatpush1.msra.mxu0 0.0
    %3379 = vmatprep.mubr.f32.mxu0 0.0
    %3380 = vmatmul.mubr.f32.gmra.mrb[0].mxu0 %v3241
    %v3381 = vpop.f32.mrb[0].mxu0
    %v3382 = vadd.f32 %v3312, %v3381
    %v3383 = vpop.f32.mrb[0].mxu0
    %3384 = vdwg.mxu0
    %3385 = vst [vmem:[#allocation3] sm:$0x3] %v3382
    // Predicated region
    $region30: #{textcnn_forward.1} parent=1 // pred_check
      _
    $region31: #{textcnn_forward.1} parent=1 // pred_check_branch
      %3387 = sbr.rel (0) target = $region33
    $region32: #{textcnn_forward.1} parent=1 // pred_region
      %s3389 = ssub.s32 32, 32
      %3390 = vsyncadd [#allocation4], %s3389
      %s3392 = sshll.u32 [#allocation3], 4
      %s3393 = int_to_ptr.vmem [resolvable:$true] %s3392
      %3395 = dma.vmem_to_hbm [thread:$0]  %s3393, 32, %s7, [#allocation4]
    $region33: #{textcnn_forward.1} parent=1 // pred_fallthru
      _
    // Predicated region
    $region34: #{textcnn_forward.1} parent=1 // pred_check
      _
    $region35: #{textcnn_forward.1} parent=1 // pred_check_branch
      %3397 = sbr.rel (0) target = $region37
    $region36: #{textcnn_forward.1} parent=1 // pred_region
      %3398 = dma.done [#allocation4], 32
    $region37: #{textcnn_forward.1} parent=1 // pred_fallthru
      _
    %3399 = vsyncpa [#allocation4], 1

</llo_original>
